<compile_context>
chip_gen: v7x
topology: tpu7x:2x2x1
jax: 0.10.0
libtpu: 0.0.40
codegen_flags: <defaults>
</compile_context>

<pallas_src>
import functools

import jax
import jax.numpy as jnp
import numpy as np
from jax.experimental import pallas as pl
from jax.experimental.pallas import tpu as pltpu


def _round_up(x, m):
    return ((x + m - 1) // m) * m


# ---------------------------------------------------------------------------
# Kernel 1: backbone = Conv3x3(pad=1) -> ReLU -> global average pool
# Each grid step processes `group` images at once:
#   (group*HW, CK=36) @ (CK, Dp=128) + b, relu, per-image spatial mean -> (group, Dp)
# ---------------------------------------------------------------------------
def conv_pool_kernel(p_ref, w_ref, b_ref, o_ref, *, group, hw, inv_hw):
    # p_ref: (group*hw, CK) bf16, w_ref: (CK, Dp) bf16, b_ref: (1, Dp) f32
    h = jnp.dot(p_ref[...], w_ref[...], preferred_element_type=jnp.float32)
    # f32 epilogue: portable across v5e (no bf16 VPU); pooling accumulation in
    # f32 per the correctness note.  On v7x this ~0.2us VALU block is only
    # co-critical once the DMA shrinks further.
    h = jnp.maximum(h + b_ref[...], 0.0)                     # (group*hw, Dp) f32
    h = h.reshape(group, hw, h.shape[-1])                    # regroup leading axis
    o_ref[...] = jnp.sum(h, axis=1) * inv_hw                 # (group, Dp)


def backbone_pallas(x_nchw, w_conv, b_conv, *, target_steps=2, use_bf16=True):
    """x_nchw: (N, C, H, W) f32 -> features (N, Dp) f32 (cols [D:Dp] are zero)."""
    N, C, H, W = x_nchw.shape
    D = w_conv.shape[0]
    CK = C * 9
    HW = H * W
    Dp = _round_up(D, 128)                   # lane-dense output / feature dim

    # group must be a multiple of 8 (output BlockSpec sublane constraint).
    group = _round_up(-(-N // max(target_steps, 1)), 8)
    n_pad = _round_up(N, group)
    steps = n_pad // group

    mm_dtype = jnp.bfloat16 if use_bf16 else jnp.float32

    # --- lightweight im2col (all intermediates bf16, K stays at CK=36) ------
    # NCHW -> NHWC once (64 KiB), pad spatially, 9 shifted slices concatenated
    # along the channel axis -> column order (kh, kw, c).  No K padding in HBM.
    x_cast = jnp.transpose(x_nchw.astype(mm_dtype), (0, 2, 3, 1))   # (N,H,W,C)
    xp = jnp.pad(x_cast, ((0, 0), (1, 1), (1, 1), (0, 0)))
    patches = jnp.concatenate(
        [xp[:, i:i + H, j:j + W, :] for i in range(3) for j in range(3)],
        axis=-1)                                             # (N, H, W, CK)
    if n_pad != N:
        patches = jnp.pad(patches, ((0, n_pad - N), (0, 0), (0, 0), (0, 0)))
    patches = patches.reshape(n_pad * HW, CK)

    # weight rows follow the same (kh, kw, c) order as the patch columns
    w_mat = jnp.transpose(w_conv, (2, 3, 1, 0)).reshape(CK, D)
    w_mat = jnp.pad(w_mat, ((0, 0), (0, Dp - D))).astype(mm_dtype)
    b_mat = jnp.pad(b_conv, (0, Dp - D)).reshape(1, Dp).astype(jnp.float32)

    kernel = functools.partial(conv_pool_kernel, group=group, hw=HW,
                               inv_hw=1.0 / float(HW))

    # VMEM/step at group=16: ~1 MiB patch block x2 (dbl-buffer) + ~2 MiB f32
    # intermediate -> well under the 32 MiB scoped default (and v7x's 64 MiB
    # physical VMEM).  If H/W or group grow, stream the HW reduction instead.
    out = pl.pallas_call(
        kernel,
        out_shape=jax.ShapeDtypeStruct((n_pad, Dp), jnp.float32),
        grid_spec=pltpu.PrefetchScalarGridSpec(
            num_scalar_prefetch=0,
            grid=(steps,),
            in_specs=[
                pl.BlockSpec((group * HW, CK), lambda i: (i, 0)),
                pl.BlockSpec((CK, Dp), lambda i: (0, 0)),
                pl.BlockSpec((1, Dp), lambda i: (0, 0)),
            ],
            out_specs=pl.BlockSpec((group, Dp), lambda i: (i, 0)),
        ),
        compiler_params=pltpu.CompilerParams(
            dimension_semantics=("parallel",),   # independent images; shards on v7x
        ),
    )(patches, w_mat, b_mat)
    return out[:N]                                           # (N, Dp)


# ---------------------------------------------------------------------------
# Kernel 2: ProtoNet head -- gridded over B (one episode per grid step).
#   prototypes = onehot @ supp_f / onehot.sum(-1, keepdims=True)
#   logits     = scale * (normalize(feat) @ normalize(prototypes)^T + bias)
# Padded feature columns are zero, so norms / dot products are unaffected.
# ---------------------------------------------------------------------------
def head_kernel(onehot_ref, suppf_ref, feat_ref, scale_ref, bias_ref, out_ref):
    onehot = onehot_ref[0]                                   # (nC, nSupp) f32
    suppf = suppf_ref[0]                                     # (nSupp, Dp) f32
    feat = feat_ref[0]                                       # (nQry, Dp) f32

    proto = jnp.dot(onehot, suppf, preferred_element_type=jnp.float32)  # (nC, Dp)
    counts = jnp.sum(onehot, axis=1, keepdims=True)          # (nC, 1)
    # NOTE: divides by zero (NaN) for classes absent from the support set,
    # exactly like the PyTorch reference.
    proto = proto / counts

    # F.normalize(p=2, eps=1e-12): x / clamp_min(||x||, eps) == x * min(rsqrt(ss), 1e12)
    w_ss = jnp.sum(proto * proto, axis=-1, keepdims=True)
    f_ss = jnp.sum(feat * feat, axis=-1, keepdims=True)
    w_norm = proto * jnp.minimum(jax.lax.rsqrt(w_ss), 1e12)  # rsqrt -> EUP slot
    f_norm = feat * jnp.minimum(jax.lax.rsqrt(f_ss), 1e12)

    # contract over d (last dims of both operands) -> no in-kernel transpose
    scores = jax.lax.dot_general(f_norm, w_norm, (((1,), (1,)), ((), ())),
                                 preferred_element_type=jnp.float32)  # (nQry, nC)
    out_ref[0] = scale_ref[0, 0] * (scores + bias_ref[0, 0])


def protonet_head_pallas(onehot, supp_f, feat, scale_cls, bias):
    B, nC, nSupp = onehot.shape
    nQry, Dp = feat.shape[1], feat.shape[2]
    scale2 = scale_cls.reshape(1, 1).astype(jnp.float32)
    bias2 = bias.reshape(1, 1).astype(jnp.float32)
    # NOTE: output last dim nC=4 -> masked stores; negligible at these sizes.
    # Pad nC to a multiple of 128 only if the head ever carries real volume.
    return pl.pallas_call(
        head_kernel,
        out_shape=jax.ShapeDtypeStruct((B, nQry, nC), jnp.float32),
        grid_spec=pltpu.PrefetchScalarGridSpec(
            num_scalar_prefetch=0,
            grid=(B,),
            in_specs=[
                pl.BlockSpec((1, nC, nSupp), lambda b: (b, 0, 0)),
                pl.BlockSpec((1, nSupp, Dp), lambda b: (b, 0, 0)),
                pl.BlockSpec((1, nQry, Dp), lambda b: (b, 0, 0)),
                pl.BlockSpec((1, 1), lambda b: (0, 0)),
                pl.BlockSpec((1, 1), lambda b: (0, 0)),
            ],
            out_specs=pl.BlockSpec((1, nQry, nC), lambda b: (b, 0, 0)),
        ),
        compiler_params=pltpu.CompilerParams(
            dimension_semantics=("parallel",),   # episodes independent; shards on v7x
        ),
    )(onehot, supp_f, feat, scale2, bias2)


# ---------------------------------------------------------------------------
# ProtoNet_Finetune.forward (lr == 0 path == ProtoNet.forward)
# ---------------------------------------------------------------------------
def protonet_forward(params, supp_x, supp_y, x, *, num_classes):
    """
    supp_x: (B, nSupp, C, H, W)   supp_y: (B, nSupp) int32   x: (B, nQry, C, H, W)
    returns logits: (B, nQry, num_classes)
    """
    B, nSupp, C, H, W = supp_x.shape
    nQry = x.shape[1]

    # One fused backbone call for support + query images (one pipeline, one
    # weight DMA).
    imgs = jnp.concatenate(
        [supp_x.reshape(-1, C, H, W), x.reshape(-1, C, H, W)], axis=0)
    feats = backbone_pallas(imgs, params["w_conv"], params["b_conv"])
    Dp = feats.shape[-1]
    supp_f = feats[: B * nSupp].reshape(B, nSupp, Dp)
    feat = feats[B * nSupp:].reshape(B, nQry, Dp)

    supp_y_1hot = jax.nn.one_hot(supp_y, num_classes, dtype=jnp.float32)
    supp_y_1hot = supp_y_1hot.transpose(0, 2, 1)             # (B, nC, nSupp)

    return protonet_head_pallas(supp_y_1hot, supp_f, feat,
                                params["scale_cls"], params["bias"])


# Pure-JAX f32 reference for sanity checking.
def protonet_forward_ref(params, supp_x, supp_y, x, num_classes):
    B, nSupp, C, H, W = supp_x.shape
    nQry = x.shape[1]

    def backbone_ref(z):
        out = jax.lax.conv_general_dilated(
            z, params["w_conv"], (1, 1), "SAME",
            dimension_numbers=("NCHW", "OIHW", "NCHW"))
        out = out + params["b_conv"].reshape(1, -1, 1, 1)
        out = jnp.maximum(out, 0.0)
        return jnp.mean(out, axis=(2, 3))

    supp_f = backbone_ref(supp_x.reshape(-1, C, H, W)).reshape(B, nSupp, -1)
    onehot = jax.nn.one_hot(supp_y, num_classes, dtype=jnp.float32).transpose(0, 2, 1)
    proto = jnp.einsum("bcs,bsd->bcd", onehot, supp_f)
    proto = proto / jnp.sum(onehot, axis=2, keepdims=True)
    feat = backbone_ref(x.reshape(-1, C, H, W)).reshape(B, nQry, -1)
    wn = proto / jnp.maximum(jnp.linalg.norm(proto, axis=-1, keepdims=True), 1e-12)
    fn = feat / jnp.maximum(jnp.linalg.norm(feat, axis=-1, keepdims=True), 1e-12)
    scores = jnp.einsum("bqd,bcd->bqc", fn, wn)
    return params["scale_cls"][0] * (scores + params["bias"][0])


if __name__ == "__main__":
    B, nSupp, nQry = 2, 8, 8
    C, H, W = 4, 16, 16
    D = 32                      # backbone feature dim
    n_classes = 4               # 4-way, 2-shot support

    key = jax.random.PRNGKey(0)
    k1, k2, k3 = jax.random.split(key, 3)

    params = {
        "w_conv": (jax.random.normal(k1, (D, C, 3, 3), jnp.float32) * 0.1),
        "b_conv": jnp.zeros((D,), jnp.float32),
        "scale_cls": jnp.full((1,), 10.0, jnp.float32),   # ProtoNet.scale_cls
        "bias": jnp.zeros((1,), jnp.float32),             # ProtoNet.bias
    }

    supp_x = jax.random.normal(k2, (B, nSupp, C, H, W), jnp.float32)
    x = jax.random.normal(k3, (B, nQry, C, H, W), jnp.float32)
    supp_y = jnp.tile(jnp.arange(n_classes, dtype=jnp.int32).repeat(nSupp // n_classes),
                      (B, 1))                             # (B, nSupp)

    # num_classes is a static Python int -> whole forward is jittable.
    fwd = jax.jit(functools.partial(protonet_forward, num_classes=n_classes))
    logits = jax.block_until_ready(fwd(params, supp_x, supp_y, x))

    ref = jax.block_until_ready(
        protonet_forward_ref(params, supp_x, supp_y, x, n_classes))
    assert logits.shape == (B, nQry, n_classes)
    # Tolerance reflects bf16 MXU operands (f32 accumulation) on the conv
    # matmul; pass use_bf16=False to backbone_pallas for an f32 debug path.
    np.testing.assert_allclose(np.asarray(logits), np.asarray(ref),
                               rtol=2e-2, atol=2e-2)

    print("KERNEL_OK")
</pallas_src>

<mosaic_0001>
module attributes {stable_mosaic.version = 11 : i64} {
  func.func @conv_pool_kernel(%arg0: i32, %arg1: memref<4096x36xbf16, #tpu.memory_space<vmem>>, %arg2: memref<36x128xbf16, #tpu.memory_space<vmem>>, %arg3: memref<1x128xf32, #tpu.memory_space<vmem>>, %arg4: memref<16x128xf32, #tpu.memory_space<vmem>>) attributes {dimension_semantics = [#tpu.dimension_semantics<parallel>], iteration_bounds = array<i64: 2>, scalar_prefetch = 0 : i64, scratch_operands = 0 : i64, tpu.core_type = #tpu.core_type<tc>, window_params = [{transform_indices = @transform_0, window_bounds = array<i64: 4096, 36>}, {pipeline_mode = #tpu.pipeline_mode<synchronous>, transform_indices = @transform_1, window_bounds = array<i64: 36, 128>}, {pipeline_mode = #tpu.pipeline_mode<synchronous>, transform_indices = @transform_2, window_bounds = array<i64: 1, 128>}, {transform_indices = @transform_3, window_bounds = array<i64: 16, 128>}]} {
    %c0 = arith.constant 0 : index
    %c0_0 = arith.constant 0 : index
    %0 = vector.load %arg1[%c0, %c0_0] : memref<4096x36xbf16, #tpu.memory_space<vmem>>, vector<4096x36xbf16>
    %c0_1 = arith.constant 0 : index
    %c0_2 = arith.constant 0 : index
    %1 = vector.load %arg2[%c0_1, %c0_2] : memref<36x128xbf16, #tpu.memory_space<vmem>>, vector<36x128xbf16>
    %cst = arith.constant dense<0.000000e+00> : vector<4096x128xf32>
    %2 = tpu.matmul %0, %1, %cst {dimension_numbers = #tpu.dot_dimension_numbers<[1], [0], [0], [1], [0, 0, 1, 1], [], []>} : vector<4096x36xbf16>, vector<36x128xbf16>, vector<4096x128xf32> -> vector<4096x128xf32>
    %c0_3 = arith.constant 0 : index
    %c0_4 = arith.constant 0 : index
    %3 = vector.load %arg3[%c0_3, %c0_4] : memref<1x128xf32, #tpu.memory_space<vmem>>, vector<1x128xf32>
    %4 = vector.broadcast %3 : vector<1x128xf32> to vector<4096x128xf32>
    %5 = arith.addf %2, %4 : vector<4096x128xf32>
    %cst_5 = arith.constant 0.000000e+00 : f32
    %6 = vector.broadcast %cst_5 : f32 to vector<4096x128xf32>
    %7 = arith.maximumf %5, %6 : vector<4096x128xf32>
    %8 = vector.shape_cast %7 : vector<4096x128xf32> to vector<16x256x128xf32>
    %cst_6 = arith.constant dense<0.000000e+00> : vector<16x128xf32>
    %9 = vector.multi_reduction <add>, %8, %cst_6 [1] : vector<16x256x128xf32> to vector<16x128xf32>
    %cst_7 = arith.constant 3.906250e-03 : f32
    %10 = vector.broadcast %cst_7 : f32 to vector<16x128xf32>
    %11 = arith.mulf %9, %10 : vector<16x128xf32>
    %c0_8 = arith.constant 0 : index
    %c0_9 = arith.constant 0 : index
    %12 = vector.load %arg4[%c0_8, %c0_9] : memref<16x128xf32, #tpu.memory_space<vmem>>, vector<16x128xf32>
    tpu.vector_store %arg4[%c0_8, %c0_9], %11 {strides = array<i32>} : memref<16x128xf32, #tpu.memory_space<vmem>>, vector<16x128xf32>,
    return
  }
  func.func @transform_0(%arg0: i32) -> (i32, i32) {
    %c0_i32 = arith.constant 0 : i32
    %c0_i32_0 = arith.constant 0 : i32
    return %arg0, %c0_i32 : i32, i32
  }
  func.func @transform_1(%arg0: i32) -> (i32, i32) {
    %c0_i32 = arith.constant 0 : i32
    %c0_i32_0 = arith.constant 0 : i32
    %c0_i32_1 = arith.constant 0 : i32
    return %c0_i32, %c0_i32_0 : i32, i32
  }
  func.func @transform_2(%arg0: i32) -> (i32, i32) {
    %c0_i32 = arith.constant 0 : i32
    %c0_i32_0 = arith.constant 0 : i32
    %c0_i32_1 = arith.constant 0 : i32
    return %c0_i32, %c0_i32_0 : i32, i32
  }
  func.func @transform_3(%arg0: i32) -> (i32, i32) {
    %c0_i32 = arith.constant 0 : i32
    %c0_i32_0 = arith.constant 0 : i32
    return %arg0, %c0_i32 : i32, i32
  }
}

module attributes {stable_mosaic.version = 11 : i64} {
  func.func @head_kernel(%arg0: i32, %arg1: memref<1x4x8xf32, #tpu.memory_space<vmem>>, %arg2: memref<1x8x128xf32, #tpu.memory_space<vmem>>, %arg3: memref<1x8x128xf32, #tpu.memory_space<vmem>>, %arg4: memref<1x1xf32, #tpu.memory_space<vmem>>, %arg5: memref<1x1xf32, #tpu.memory_space<vmem>>, %arg6: memref<1x8x4xf32, #tpu.memory_space<vmem>>) attributes {dimension_semantics = [#tpu.dimension_semantics<parallel>], iteration_bounds = array<i64: 2>, scalar_prefetch = 0 : i64, scratch_operands = 0 : i64, tpu.core_type = #tpu.core_type<tc>, window_params = [{transform_indices = @transform_0, window_bounds = array<i64: 1, 4, 8>}, {transform_indices = @transform_1, window_bounds = array<i64: 1, 8, 128>}, {transform_indices = @transform_2, window_bounds = array<i64: 1, 8, 128>}, {pipeline_mode = #tpu.pipeline_mode<synchronous>, transform_indices = @transform_3, window_bounds = array<i64: 1, 1>}, {pipeline_mode = #tpu.pipeline_mode<synchronous>, transform_indices = @transform_4, window_bounds = array<i64: 1, 1>}, {transform_indices = @transform_5, window_bounds = array<i64: 1, 8, 4>}]} {
    %c0 = arith.constant 0 : index
    %c0_0 = arith.constant 0 : index
    %c0_1 = arith.constant 0 : index
    %0 = vector.load %arg1[%c0, %c0_0, %c0_1] : memref<1x4x8xf32, #tpu.memory_space<vmem>>, vector<1x4x8xf32>
    %1 = vector.shape_cast %0 : vector<1x4x8xf32> to vector<4x8xf32>
    %c0_2 = arith.constant 0 : index
    %c0_3 = arith.constant 0 : index
    %c0_4 = arith.constant 0 : index
    %2 = vector.load %arg2[%c0_2, %c0_3, %c0_4] : memref<1x8x128xf32, #tpu.memory_space<vmem>>, vector<1x8x128xf32>
    %3 = vector.shape_cast %2 : vector<1x8x128xf32> to vector<8x128xf32>
    %c0_5 = arith.constant 0 : index
    %c0_6 = arith.constant 0 : index
    %c0_7 = arith.constant 0 : index
    %4 = vector.load %arg3[%c0_5, %c0_6, %c0_7] : memref<1x8x128xf32, #tpu.memory_space<vmem>>, vector<1x8x128xf32>
    %5 = vector.shape_cast %4 : vector<1x8x128xf32> to vector<8x128xf32>
    %cst = arith.constant dense<0.000000e+00> : vector<4x128xf32>
    %6 = tpu.matmul %1, %3, %cst {dimension_numbers = #tpu.dot_dimension_numbers<[1], [0], [0], [1], [0, 0, 1, 1], [], []>} : vector<4x8xf32>, vector<8x128xf32>, vector<4x128xf32> -> vector<4x128xf32>
    %cst_8 = arith.constant dense<0.000000e+00> : vector<4xf32>
    %7 = vector.multi_reduction <add>, %1, %cst_8 [1] : vector<4x8xf32> to vector<4xf32>
    %8 = vector.shape_cast %7 : vector<4xf32> to vector<4x1xf32>
    %9 = vector.broadcast %8 : vector<4x1xf32> to vector<4x128xf32>
    %10 = arith.divf %6, %9 : vector<4x128xf32>
    %11 = arith.mulf %10, %10 : vector<4x128xf32>
    %cst_9 = arith.constant dense<0.000000e+00> : vector<4xf32>
    %12 = vector.multi_reduction <add>, %11, %cst_9 [1] : vector<4x128xf32> to vector<4xf32>
    %13 = vector.shape_cast %12 : vector<4xf32> to vector<4x1xf32>
    %14 = arith.mulf %5, %5 : vector<8x128xf32>
    %cst_10 = arith.constant dense<0.000000e+00> : vector<8xf32>
    %15 = vector.multi_reduction <add>, %14, %cst_10 [1] : vector<8x128xf32> to vector<8xf32>
    %16 = vector.shape_cast %15 : vector<8xf32> to vector<8x1xf32>
    %17 = math.rsqrt %13 : vector<4x1xf32>
    %cst_11 = arith.constant 9.99999995E+11 : f32
    %18 = vector.broadcast %cst_11 : f32 to vector<4x1xf32>
    %19 = arith.minimumf %17, %18 : vector<4x1xf32>
    %20 = vector.broadcast %19 : vector<4x1xf32> to vector<4x128xf32>
    %21 = arith.mulf %10, %20 : vector<4x128xf32>
    %22 = math.rsqrt %16 : vector<8x1xf32>
    %cst_12 = arith.constant 9.99999995E+11 : f32
    %23 = vector.broadcast %cst_12 : f32 to vector<8x1xf32>
    %24 = arith.minimumf %22, %23 : vector<8x1xf32>
    %25 = vector.broadcast %24 : vector<8x1xf32> to vector<8x128xf32>
    %26 = arith.mulf %5, %25 : vector<8x128xf32>
    %cst_13 = arith.constant dense<0.000000e+00> : vector<8x4xf32>
    %27 = tpu.matmul %26, %21, %cst_13 {dimension_numbers = #tpu.dot_dimension_numbers<[1], [1], [0], [0], [0, 0, 1, 0], [], []>} : vector<8x128xf32>, vector<4x128xf32>, vector<8x4xf32> -> vector<8x4xf32>
    %c0_14 = arith.constant 0 : index
    %c0_15 = arith.constant 0 : index
    %28 = vector.load %arg4[%c0_14, %c0_15] : memref<1x1xf32, #tpu.memory_space<vmem>>, vector<1x1xf32>
    %29 = vector.extract %28[0, 0] : f32 from vector<1x1xf32>
    %c0_16 = arith.constant 0 : index
    %c0_17 = arith.constant 0 : index
    %30 = vector.load %arg5[%c0_16, %c0_17] : memref<1x1xf32, #tpu.memory_space<vmem>>, vector<1x1xf32>
    %31 = vector.extract %30[0, 0] : f32 from vector<1x1xf32>
    %32 = vector.broadcast %31 : f32 to vector<8x4xf32>
    %33 = arith.addf %27, %32 : vector<8x4xf32>
    %34 = vector.broadcast %29 : f32 to vector<8x4xf32>
    %35 = arith.mulf %34, %33 : vector<8x4xf32>
    %c0_18 = arith.constant 0 : index
    %c0_19 = arith.constant 0 : index
    %c0_20 = arith.constant 0 : index
    %36 = vector.load %arg6[%c0_18, %c0_19, %c0_20] : memref<1x8x4xf32, #tpu.memory_space<vmem>>, vector<1x8x4xf32>
    %37 = vector.shape_cast %36 : vector<1x8x4xf32> to vector<8x4xf32>
    %38 = vector.shape_cast %35 : vector<8x4xf32> to vector<1x8x4xf32>
    tpu.vector_store %arg6[%c0_18, %c0_19, %c0_20], %38 {strides = array<i32>} : memref<1x8x4xf32, #tpu.memory_space<vmem>>, vector<1x8x4xf32>,
    return
  }
  func.func @transform_0(%arg0: i32) -> (i32, i32, i32) {
    %c0_i32 = arith.constant 0 : i32
    %c0_i32_0 = arith.constant 0 : i32
    %c0_i32_1 = arith.constant 0 : i32
    return %arg0, %c0_i32, %c0_i32_0 : i32, i32, i32
  }
  func.func @transform_1(%arg0: i32) -> (i32, i32, i32) {
    %c0_i32 = arith.constant 0 : i32
    %c0_i32_0 = arith.constant 0 : i32
    %c0_i32_1 = arith.constant 0 : i32
    return %arg0, %c0_i32, %c0_i32_0 : i32, i32, i32
  }
  func.func @transform_2(%arg0: i32) -> (i32, i32, i32) {
    %c0_i32 = arith.constant 0 : i32
    %c0_i32_0 = arith.constant 0 : i32
    %c0_i32_1 = arith.constant 0 : i32
    return %arg0, %c0_i32, %c0_i32_0 : i32, i32, i32
  }
  func.func @transform_3(%arg0: i32) -> (i32, i32) {
    %c0_i32 = arith.constant 0 : i32
    %c0_i32_0 = arith.constant 0 : i32
    %c0_i32_1 = arith.constant 0 : i32
    return %c0_i32, %c0_i32_0 : i32, i32
  }
  func.func @transform_4(%arg0: i32) -> (i32, i32) {
    %c0_i32 = arith.constant 0 : i32
    %c0_i32_0 = arith.constant 0 : i32
    %c0_i32_1 = arith.constant 0 : i32
    return %c0_i32, %c0_i32_0 : i32, i32
  }
  func.func @transform_5(%arg0: i32) -> (i32, i32, i32) {
    %c0_i32 = arith.constant 0 : i32
    %c0_i32_0 = arith.constant 0 : i32
    %c0_i32_1 = arith.constant 0 : i32
    return %arg0, %c0_i32, %c0_i32_0 : i32, i32, i32
  }
}

</mosaic_0001>

<llo_original>
// kernel: protonet_forward.3
$region0: #{protonet_forward.3}
  #allocation0 [shape = 'u32[]', space=smem, size = 0x4, offset = 0x4, fixed_abs, tag = 'smem constant byte address 0x4 - core index']
  #allocation1 [shape = 'u32[144,128]{1,0:T(1,128)}', space=vmem, size = 0x12000, scoped, tag = 'internal scratch']
  #allocation2 [shape = 'f32[1,1]{1,0:T(1,128)S(1)}', space=vmem, size = 0x200, scoped, tag = 'scoped memory for protonet_forward.3']
  #allocation3 [shape = 'f32[1,1]{1,0:T(1,128)S(1)}', space=vmem, size = 0x200, scoped, tag = 'scoped memory for protonet_forward.3']
  %s0 = inlined_call_operand.vmem [shape: f32[2,4,8], index: 0, kind: input, shape index: {}]
  %s1 = inlined_call_operand.vmem [shape: f32[2,8,128], index: 1, kind: input, shape index: {}]
  %s2 = inlined_call_operand.vmem [shape: f32[2,8,128], index: 2, kind: input, shape index: {}]
  %s3 = inlined_call_operand.<no memory space> [shape: f32[1,1], index: 3, kind: input, shape index: {}]
  %s4 = inlined_call_operand.<no memory space> [shape: f32[1,1], index: 4, kind: input, shape index: {}]
  %s5 = inlined_call_operand.vmem [shape: f32[2,8,4], index: 5, kind: output, shape index: {}]
  %s6 = sld [smem:[#allocation0]]
  $region53: #{protonet_forward.3} parent=0
    _
  %s8 = ssub.s32 1, %s6
  %s9 = scalar_select 0, %s8, %s6
  %v10 = vstv %s3
  %11 = vst [vmem:[#allocation2] sm:$0x1] %v10
  %v12 = vstv %s4
  %13 = vst [vmem:[#allocation3] sm:$0x1] %v12
  loop: start=0, step=1, limit=4
  $region2: #{protonet_forward.3} parent=0 // loop_pre_header
    _
  $region3: #{protonet_forward.3} parent=0 // loop_header
    %s15 = sphi 0, %s19
    %p16 = scmp.ge.s32.totalorder %s15, 4
    %s25 = sphi 0, %s27
    %s28 = sphi 0, %s25
    %s29 = sphi 0, %s28
    %s45 = sphi 0, %s29
    %s51 = sphi 0, %s53
    %s54 = sphi 0, %s51
    %s55 = sphi 0, %s54
    %s71 = sphi 0, %s55
    %s77 = sphi 0, %s79
    %s80 = sphi 0, %s77
    %s81 = sphi 0, %s80
    %s97 = sphi 0, %s81
    %s101 = sphi 0, %s101
    %s103 = sphi 0, %s101
    %s104 = sphi 0, %s103
    %s118 = sphi 0, %s104
    %s122 = sphi 0, %s122
    %s124 = sphi 0, %s122
    %s125 = sphi 0, %s124
    %s139 = sphi 0, %s125
    %s145 = sphi 0, %s147
    %s148 = sphi 0, %s145
    %s149 = sphi 0, %s148
    %s165 = sphi 0, %s149
  $region4: #{protonet_forward.3} parent=0 // loop_header_branch
    %18 = sbr.rel (%p16) target = $region8
  $region5: #{protonet_forward.3} parent=0 // loop_body
    %s20 = ssub.s32 %s15, 1
    %s21 = ssub.s32 %s15, 2
    %s22 = sadd.s32 %s15, 1
    %s23 = ssub.s32 %s15, %s22
    %p24 = scmp.eq.s32.totalorder %s23, 0
    %s26 = sadd.s32 %s25, 1
    %s27 = scalar_select %p24, %s25, %s26
    %p30 = pneg %p24
    %p31 = scmp.eq.s32.totalorder %s15, 1
    %p32 = por %p30, %p31
    %p33 = scmp.ne.s32.totalorder %s25, %s28
    %p34 = scmp.eq.s32.totalorder %s15, 0
    %p35 = por %p33, %p34
    %p36 = scmp.ne.s32.totalorder %s25, %s28
    %p37 = scmp.eq.s32.totalorder %s20, 1
    %p38 = por %p36, %p37
    %p39 = scmp.ne.s32.totalorder %s28, %s29
    %p40 = scmp.eq.s32.totalorder %s20, 0
    %p41 = por %p39, %p40
    %p42 = scmp.ne.s32.totalorder %s28, %s29
    %p43 = scmp.eq.s32.totalorder %s21, 1
    %p44 = por %p42, %p43
    %p46 = scmp.ne.s32.totalorder %s29, %s45
    %p47 = scmp.eq.s32.totalorder %s21, 0
    %p48 = por %p46, %p47
    %s49 = ssub.s32 %s15, %s22
    %p50 = scmp.eq.s32.totalorder %s49, 0
    %s52 = sadd.s32 %s51, 1
    %s53 = scalar_select %p50, %s51, %s52
    %p56 = pneg %p50
    %p57 = scmp.eq.s32.totalorder %s15, 1
    %p58 = por %p56, %p57
    %p59 = scmp.ne.s32.totalorder %s51, %s54
    %p60 = scmp.eq.s32.totalorder %s15, 0
    %p61 = por %p59, %p60
    %p62 = scmp.ne.s32.totalorder %s51, %s54
    %p63 = scmp.eq.s32.totalorder %s20, 1
    %p64 = por %p62, %p63
    %p65 = scmp.ne.s32.totalorder %s54, %s55
    %p66 = scmp.eq.s32.totalorder %s20, 0
    %p67 = por %p65, %p66
    %p68 = scmp.ne.s32.totalorder %s54, %s55
    %p69 = scmp.eq.s32.totalorder %s21, 1
    %p70 = por %p68, %p69
    %p72 = scmp.ne.s32.totalorder %s55, %s71
    %p73 = scmp.eq.s32.totalorder %s21, 0
    %p74 = por %p72, %p73
    %s75 = ssub.s32 %s15, %s22
    %p76 = scmp.eq.s32.totalorder %s75, 0
    %s78 = sadd.s32 %s77, 1
    %s79 = scalar_select %p76, %s77, %s78
    %p82 = pneg %p76
    %p83 = scmp.eq.s32.totalorder %s15, 1
    %p84 = por %p82, %p83
    %p85 = scmp.ne.s32.totalorder %s77, %s80
    %p86 = scmp.eq.s32.totalorder %s15, 0
    %p87 = por %p85, %p86
    %p88 = scmp.ne.s32.totalorder %s77, %s80
    %p89 = scmp.eq.s32.totalorder %s20, 1
    %p90 = por %p88, %p89
    %p91 = scmp.ne.s32.totalorder %s80, %s81
    %p92 = scmp.eq.s32.totalorder %s20, 0
    %p93 = por %p91, %p92
    %p94 = scmp.ne.s32.totalorder %s80, %s81
    %p95 = scmp.eq.s32.totalorder %s21, 1
    %p96 = por %p94, %p95
    %p98 = scmp.ne.s32.totalorder %s81, %s97
    %p99 = scmp.eq.s32.totalorder %s21, 0
    %p100 = por %p98, %p99
    %s102 = sadd.s32 %s101, 1
    %p105 = scmp.eq.s32.totalorder %s15, 1
    %p106 = scmp.ne.s32.totalorder %s101, %s103
    %p107 = scmp.eq.s32.totalorder %s15, 0
    %p108 = por %p106, %p107
    %p109 = scmp.ne.s32.totalorder %s101, %s103
    %p110 = scmp.eq.s32.totalorder %s20, 1
    %p111 = por %p109, %p110
    %p112 = scmp.ne.s32.totalorder %s103, %s104
    %p113 = scmp.eq.s32.totalorder %s20, 0
    %p114 = por %p112, %p113
    %p115 = scmp.ne.s32.totalorder %s103, %s104
    %p116 = scmp.eq.s32.totalorder %s21, 1
    %p117 = por %p115, %p116
    %p119 = scmp.ne.s32.totalorder %s104, %s118
    %p120 = scmp.eq.s32.totalorder %s21, 0
    %p121 = por %p119, %p120
    %s123 = sadd.s32 %s122, 1
    %p126 = scmp.eq.s32.totalorder %s15, 1
    %p127 = scmp.ne.s32.totalorder %s122, %s124
    %p128 = scmp.eq.s32.totalorder %s15, 0
    %p129 = por %p127, %p128
    %p130 = scmp.ne.s32.totalorder %s122, %s124
    %p131 = scmp.eq.s32.totalorder %s20, 1
    %p132 = por %p130, %p131
    %p133 = scmp.ne.s32.totalorder %s124, %s125
    %p134 = scmp.eq.s32.totalorder %s20, 0
    %p135 = por %p133, %p134
    %p136 = scmp.ne.s32.totalorder %s124, %s125
    %p137 = scmp.eq.s32.totalorder %s21, 1
    %p138 = por %p136, %p137
    %p140 = scmp.ne.s32.totalorder %s125, %s139
    %p141 = scmp.eq.s32.totalorder %s21, 0
    %p142 = por %p140, %p141
    %s143 = ssub.s32 %s15, %s22
    %p144 = scmp.eq.s32.totalorder %s143, 0
    %s146 = sadd.s32 %s145, 1
    %s147 = scalar_select %p144, %s145, %s146
    %p150 = pneg %p144
    %p151 = scmp.eq.s32.totalorder %s15, 1
    %p152 = por %p150, %p151
    %p153 = scmp.ne.s32.totalorder %s145, %s148
    %p154 = scmp.eq.s32.totalorder %s15, 0
    %p155 = por %p153, %p154
    %p156 = scmp.ne.s32.totalorder %s145, %s148
    %p157 = scmp.eq.s32.totalorder %s20, 1
    %p158 = por %p156, %p157
    %p159 = scmp.ne.s32.totalorder %s148, %s149
    %p160 = scmp.eq.s32.totalorder %s20, 0
    %p161 = por %p159, %p160
    %p162 = scmp.ne.s32.totalorder %s148, %s149
    %p163 = scmp.eq.s32.totalorder %s21, 1
    %p164 = por %p162, %p163
    %p166 = scmp.ne.s32.totalorder %s149, %s165
    %p167 = scmp.eq.s32.totalorder %s21, 0
    %p168 = por %p166, %p167
    %p169 = scmp.le.s32.totalorder 1, %s15
    %p170 = scmp.lt.s32.totalorder %s15, 3
    %p171 = pnand %p169, %p170
    %p172 = pneg %p171
    // Predicated region
    $region9: #{protonet_forward.3} parent=5 // pred_check
      _
    $region10: #{protonet_forward.3} parent=5 // pred_check_branch
      %174 = sbr.rel (%p171) target = $region12
    $region11: #{protonet_forward.3} parent=5 // pred_region
      %s175 = ssub.s32 %s15, 1
      // Predicated region
      $region13: #{protonet_forward.3} parent=11 // pred_check
        %p176 = pneg %p114
      $region14: #{protonet_forward.3} parent=11 // pred_check_branch
        %178 = sbr.rel (%p176) target = $region16
      $region15: #{protonet_forward.3} parent=11 // pred_region
        _
      $region16: #{protonet_forward.3} parent=11 // pred_fallthru
        _
      // Predicated region
      $region17: #{protonet_forward.3} parent=11 // pred_check
        %p179 = pneg %p135
      $region18: #{protonet_forward.3} parent=11 // pred_check_branch
        %181 = sbr.rel (%p179) target = $region20
      $region19: #{protonet_forward.3} parent=11 // pred_region
        _
      $region20: #{protonet_forward.3} parent=11 // pred_fallthru
        _
    $region12: #{protonet_forward.3} parent=5 // pred_fallthru
      _
    %p182 = scmp.lt.s32.totalorder %s15, 2
    // Predicated region
    $region21: #{protonet_forward.3} parent=5 // pred_check
      %p183 = pneg %p182
    $region22: #{protonet_forward.3} parent=5 // pred_check_branch
      %185 = sbr.rel (%p183) target = $region24
    $region23: #{protonet_forward.3} parent=5 // pred_region
      // Predicated region
      $region25: #{protonet_forward.3} parent=23 // pred_check
        %p186 = pneg %p35
      $region26: #{protonet_forward.3} parent=23 // pred_check_branch
        %188 = sbr.rel (%p186) target = $region28
      $region27: #{protonet_forward.3} parent=23 // pred_region
        %p189 = scmp.lt.s32.totalorder %s15, 1
        %s190 = scalar_select %p189, %s15, 1
        %s191 = smul.addr %s190, 4
        %s192 = scalar_lea.vmem %s0, %s191
      $region28: #{protonet_forward.3} parent=23 // pred_fallthru
        _
      // Predicated region
      $region29: #{protonet_forward.3} parent=23 // pred_check
        %p193 = pneg %p61
      $region30: #{protonet_forward.3} parent=23 // pred_check_branch
        %195 = sbr.rel (%p193) target = $region32
      $region31: #{protonet_forward.3} parent=23 // pred_region
        %p196 = scmp.lt.s32.totalorder %s15, 1
        %s197 = scalar_select %p196, %s15, 1
        %s198 = smul.addr %s197, 8
        %s199 = scalar_lea.vmem %s1, %s198
      $region32: #{protonet_forward.3} parent=23 // pred_fallthru
        _
      // Predicated region
      $region33: #{protonet_forward.3} parent=23 // pred_check
        %p200 = pneg %p87
      $region34: #{protonet_forward.3} parent=23 // pred_check_branch
        %202 = sbr.rel (%p200) target = $region36
      $region35: #{protonet_forward.3} parent=23 // pred_region
        %p203 = scmp.lt.s32.totalorder %s15, 1
        %s204 = scalar_select %p203, %s15, 1
        %s205 = smul.addr %s204, 8
        %s206 = scalar_lea.vmem %s2, %s205
      $region36: #{protonet_forward.3} parent=23 // pred_fallthru
        _
    $region24: #{protonet_forward.3} parent=5 // pred_fallthru
      _
    %p207 = scmp.le.s32.totalorder 1, %s15
    %p208 = scmp.lt.s32.totalorder %s15, 3
    %p209 = pnand %p207, %p208
    %p210 = pneg %p209
    // Predicated region
    $region37: #{protonet_forward.3} parent=5 // pred_check
      _
    $region38: #{protonet_forward.3} parent=5 // pred_check_branch
      %212 = sbr.rel (%p209) target = $region40
    $region39: #{protonet_forward.3} parent=5 // pred_region
      %s213 = ssub.s32 %s15, 1
      %p214 = scmp.lt.s32.totalorder %s20, 1
      %s215 = scalar_select %p214, %s20, 1
      %s216 = smul.addr %s215, 4
      %s217 = scalar_lea.vmem %s0, %s216
      %p218 = pneg %p41
      %p219 = pneg %p38
      %p220 = scmp.lt.s32.totalorder %s20, 1
      %s221 = scalar_select %p220, %s20, 1
      %s222 = smul.addr %s221, 8
      %s223 = scalar_lea.vmem %s1, %s222
      %p224 = pneg %p67
      %p225 = pneg %p64
      %p226 = scmp.lt.s32.totalorder %s20, 1
      %s227 = scalar_select %p226, %s20, 1
      %s228 = smul.addr %s227, 8
      %s229 = scalar_lea.vmem %s2, %s228
      %p230 = pneg %p93
      %p231 = pneg %p90
      %p232 = pneg %p114
      %p233 = pneg %p111
      %p234 = pneg %p135
      %p235 = pneg %p132
      %p236 = pneg %p161
      %p237 = pneg %p158
      %p238 = scmp.lt.s32.totalorder %s20, 1
      %s239 = scalar_select %p238, %s20, 1
      %s240 = smul.addr %s239, 8
      %s241 = scalar_lea.vmem %s5, %s240
      %p242 = scmp.lt.s32.totalorder %s20, 1
      %s243 = scalar_select %p242, %s20, 1
      %s244 = smul.addr %s243, 4
      %s245 = scalar_lea.vmem %s0, %s244
      %p246 = scmp.lt.s32.totalorder %s20, 1
      %s247 = scalar_select %p246, %s20, 1
      %s248 = smul.addr %s247, 8
      %s249 = scalar_lea.vmem %s1, %s248
      %p250 = scmp.lt.s32.totalorder %s20, 1
      %s251 = scalar_select %p250, %s20, 1
      %s252 = smul.addr %s251, 8
      %s253 = scalar_lea.vmem %s2, %s252
      %p254 = scmp.lt.s32.totalorder %s20, 1
      %s255 = scalar_select %p254, %s20, 1
      %s256 = smul.addr %s255, 8
      %s257 = scalar_lea.vmem %s5, %s256
      %v258 = vld [vmem:[%s245] sm:$0xf]
      %v259 = vld [vmem:[%s249] sm:$0xff]
      %v260 = vld [vmem:[%s253] sm:$0xff]
      %vm261 = vcmask 64512
      %v263 = vsel %vm261, %v258, 0
      %265 = vmatprep.subr.mxu0 0.0
      %266 = vmatpush1.msra.mxu0 %v259
      %267 = vmatprep.subr.mxu0 0.0
      %268 = vmatpush1.msra.mxu0 0.0
      %269 = vmatprep.subr.mxu0 0.0
      %270 = vmatpush1.msra.mxu0 0.0
      %271 = vmatprep.subr.mxu0 0.0
      %272 = vmatpush1.msra.mxu0 0.0
      %273 = vmatprep.subr.mxu0 0.0
      %274 = vmatpush1.msra.mxu0 0.0
      %275 = vmatprep.subr.mxu0 0.0
      %276 = vmatpush1.msra.mxu0 0.0
      %277 = vmatprep.subr.mxu0 0.0
      %278 = vmatpush1.msra.mxu0 0.0
      %279 = vmatprep.subr.mxu0 0.0
      %280 = vmatpush1.msra.mxu0 0.0
      %281 = vmatprep.subr.mxu0 0.0
      %282 = vmatpush1.msra.mxu0 0.0
      %283 = vmatprep.subr.mxu0 0.0
      %284 = vmatpush1.msra.mxu0 0.0
      %285 = vmatprep.subr.mxu0 0.0
      %286 = vmatpush1.msra.mxu0 0.0
      %287 = vmatprep.subr.mxu0 0.0
      %288 = vmatpush1.msra.mxu0 0.0
      %289 = vmatprep.subr.mxu0 0.0
      %290 = vmatpush1.msra.mxu0 0.0
      %291 = vmatprep.subr.mxu0 0.0
      %292 = vmatpush1.msra.mxu0 0.0
      %293 = vmatprep.subr.mxu0 0.0
      %294 = vmatpush1.msra.mxu0 0.0
      %295 = vmatprep.subr.mxu0 0.0
      %296 = vmatpush1.msra.mxu0 0.0
      %297 = vmatprep.subr.mxu0 0.0
      %298 = vmatpush1.msra.mxu0 0.0
      %299 = vmatprep.subr.mxu0 0.0
      %300 = vmatpush1.msra.mxu0 0.0
      %301 = vmatprep.subr.mxu0 0.0
      %302 = vmatpush1.msra.mxu0 0.0
      %303 = vmatprep.subr.mxu0 0.0
      %304 = vmatpush1.msra.mxu0 0.0
      %305 = vmatprep.subr.mxu0 0.0
      %306 = vmatpush1.msra.mxu0 0.0
      %307 = vmatprep.subr.mxu0 0.0
      %308 = vmatpush1.msra.mxu0 0.0
      %309 = vmatprep.subr.mxu0 0.0
      %310 = vmatpush1.msra.mxu0 0.0
      %311 = vmatprep.subr.mxu0 0.0
      %312 = vmatpush1.msra.mxu0 0.0
      %313 = vmatprep.subr.mxu0 0.0
      %314 = vmatpush1.msra.mxu0 0.0
      %315 = vmatprep.subr.mxu0 0.0
      %316 = vmatpush1.msra.mxu0 0.0
      %317 = vmatprep.subr.mxu0 0.0
      %318 = vmatpush1.msra.mxu0 0.0
      %319 = vmatprep.subr.mxu0 0.0
      %320 = vmatpush1.msra.mxu0 0.0
      %321 = vmatprep.subr.mxu0 0.0
      %322 = vmatpush1.msra.mxu0 0.0
      %323 = vmatprep.subr.mxu0 0.0
      %324 = vmatpush1.msra.mxu0 0.0
      %325 = vmatprep.subr.mxu0 0.0
      %326 = vmatpush1.msra.mxu0 0.0
      %327 = vmatprep.subr.mxu0 0.0
      %328 = vmatpush1.msra.mxu0 0.0
      %329 = vmatprep.mubr.f32.mxu0 0.0
      %330 = vmatmul.mubr.f32.gmra.mrb[0].mxu0 %v263
      %v331 = vpop.f32.mrb[0].mxu0
      %v332 = vadd.f32 0.0, %v331
      %v333 = vpop.f32.mrb[0].mxu0
      %334 = vdwg.mxu0
      %vm335 = vcmask 60416
      %v336 = vsel %vm335, %v258, 0.0
      %337 = vadd.xlane.f32.xlu0 %v336
      %v338 = vpop.xlane.xlu0 %337
      %v339 = vrcp.pop %v338
      %v340 = vmul.f32 %v332, %v339
      %v341 = vmul.f32 %v340, %v340
      %vm342 = vcmask 1043456
      %v343 = vsel %vm342, %v341, 0.0
      %344 = vadd.xlane.f32.xlu0 %v343
      %v345 = vpop.xlane.xlu0 %344
      %v346 = vmul.f32 %v260, %v260
      %347 = vadd.xlane.f32.xlu0 %v346
      %v348 = vpop.xlane.xlu0 %347
      %v349 = vrsqrt.pop %v345
      %v350 = vmin.f32 %v349, 1e+12
      %v351 = vmul.f32 %v340, %v350
      %v352 = vrsqrt.pop %v348
      %v353 = vmin.f32 %v352, 1e+12
      %v354 = vmul.f32 %v260, %v353
      %v355 = vld [vmem:[#allocation2] sm:$0x1]
      %s356 = vtos %v355
      %v357 = vld [vmem:[#allocation3] sm:$0x1]
      %s358 = vtos %v357
      %v359 = vstv %s358
      %360 = vmatprep.subr.mxu0 0.0
      %361 = vmatpush1.xpose.msra.mxu0 %v351
      %362 = vmatprep.subr.mxu0 0.0
      %363 = vmatpush1.xpose.msra.mxu0 0.0
      %364 = vmatprep.subr.mxu0 0.0
      %365 = vmatpush1.xpose.msra.mxu0 0.0
      %366 = vmatprep.subr.mxu0 0.0
      %367 = vmatpush1.xpose.msra.mxu0 0.0
      %368 = vmatprep.subr.mxu0 0.0
      %369 = vmatpush1.xpose.msra.mxu0 0.0
      %370 = vmatprep.subr.mxu0 0.0
      %371 = vmatpush1.xpose.msra.mxu0 0.0
      %372 = vmatprep.subr.mxu0 0.0
      %373 = vmatpush1.xpose.msra.mxu0 0.0
      %374 = vmatprep.subr.mxu0 0.0
      %375 = vmatpush1.xpose.msra.mxu0 0.0
      %376 = vmatprep.subr.mxu0 0.0
      %377 = vmatpush1.xpose.msra.mxu0 0.0
      %378 = vmatprep.subr.mxu0 0.0
      %379 = vmatpush1.xpose.msra.mxu0 0.0
      %380 = vmatprep.subr.mxu0 0.0
      %381 = vmatpush1.xpose.msra.mxu0 0.0
      %382 = vmatprep.subr.mxu0 0.0
      %383 = vmatpush1.xpose.msra.mxu0 0.0
      %384 = vmatprep.subr.mxu0 0.0
      %385 = vmatpush1.xpose.msra.mxu0 0.0
      %386 = vmatprep.subr.mxu0 0.0
      %387 = vmatpush1.xpose.msra.mxu0 0.0
      %388 = vmatprep.subr.mxu0 0.0
      %389 = vmatpush1.xpose.msra.mxu0 0.0
      %390 = vmatprep.subr.mxu0 0.0
      %391 = vmatpush1.xpose.msra.mxu0 0.0
      %392 = vmatprep.subr.mxu0 0.0
      %393 = vmatpush1.xpose.msra.mxu0 0.0
      %394 = vmatprep.subr.mxu0 0.0
      %395 = vmatpush1.xpose.msra.mxu0 0.0
      %396 = vmatprep.subr.mxu0 0.0
      %397 = vmatpush1.xpose.msra.mxu0 0.0
      %398 = vmatprep.subr.mxu0 0.0
      %399 = vmatpush1.xpose.msra.mxu0 0.0
      %400 = vmatprep.subr.mxu0 0.0
      %401 = vmatpush1.xpose.msra.mxu0 0.0
      %402 = vmatprep.subr.mxu0 0.0
      %403 = vmatpush1.xpose.msra.mxu0 0.0
      %404 = vmatprep.subr.mxu0 0.0
      %405 = vmatpush1.xpose.msra.mxu0 0.0
      %406 = vmatprep.subr.mxu0 0.0
      %407 = vmatpush1.xpose.msra.mxu0 0.0
      %408 = vmatprep.subr.mxu0 0.0
      %409 = vmatpush1.xpose.msra.mxu0 0.0
      %410 = vmatprep.subr.mxu0 0.0
      %411 = vmatpush1.xpose.msra.mxu0 0.0
      %412 = vmatprep.subr.mxu0 0.0
      %413 = vmatpush1.xpose.msra.mxu0 0.0
      %414 = vmatprep.subr.mxu0 0.0
      %415 = vmatpush1.xpose.msra.mxu0 0.0
      %416 = vmatprep.subr.mxu0 0.0
      %417 = vmatpush1.xpose.msra.mxu0 0.0
      %418 = vmatprep.subr.mxu0 0.0
      %419 = vmatpush1.xpose.msra.mxu0 0.0
      %420 = vmatprep.subr.mxu0 0.0
      %421 = vmatpush1.xpose.msra.mxu0 0.0
      %422 = vmatprep.subr.mxu0 0.0
      %423 = vmatpush1.xpose.msra.mxu0 0.0
      %424 = vmatprep.mubr.f32.mxu0 0.0
      %425 = vmatmul.mubr.f32.gmra.mrb[0].mxu0 %v354
      %v426 = vpop.f32.mrb[0].mxu0
      %v427 = vadd.f32 %v359, %v426
      %v428 = vpop.f32.mrb[0].mxu0
      %429 = vdwg.mxu0
      %v430 = vstv %s356
      %v431 = vmul.f32 %v430, %v427
      %vm432 = vcmask 31744
      %433 = vst.msk [vmem:[%s257] sm:$0xff] %vm432, %v431
      %p434 = scmp.lt.s32.totalorder %s20, 1
      %s435 = scalar_select %p434, %s20, 1
      %s436 = smul.addr %s435, 8
      %s437 = scalar_lea.vmem %s5, %s436
      // Predicated region
      $region41: #{protonet_forward.3} parent=39 // pred_check
        %p438 = pneg %p158
      $region42: #{protonet_forward.3} parent=39 // pred_check_branch
        %440 = sbr.rel (%p438) target = $region44
      $region43: #{protonet_forward.3} parent=39 // pred_region
        _
      $region44: #{protonet_forward.3} parent=39 // pred_fallthru
        _
    $region40: #{protonet_forward.3} parent=5 // pred_fallthru
      _
    %p441 = scmp.le.s32.totalorder 2, %s15
    // Predicated region
    $region45: #{protonet_forward.3} parent=5 // pred_check
      %p442 = pneg %p441
    $region46: #{protonet_forward.3} parent=5 // pred_check_branch
      %444 = sbr.rel (%p442) target = $region48
    $region47: #{protonet_forward.3} parent=5 // pred_region
      %s445 = ssub.s32 %s15, 2
      // Predicated region
      $region49: #{protonet_forward.3} parent=47 // pred_check
        %p446 = pneg %p164
      $region50: #{protonet_forward.3} parent=47 // pred_check_branch
        %448 = sbr.rel (%p446) target = $region52
      $region51: #{protonet_forward.3} parent=47 // pred_region
        %p449 = scmp.lt.s32.totalorder %s21, 1
        %s450 = scalar_select %p449, %s21, 1
        %s451 = smul.addr %s450, 8
        %s452 = scalar_lea.vmem %s5, %s451
      $region52: #{protonet_forward.3} parent=47 // pred_fallthru
        _
    $region48: #{protonet_forward.3} parent=5 // pred_fallthru
      _
  $region6: #{protonet_forward.3} parent=0 // loop_footer
    %s19 = sadd.s32 1, %s15
  $region7: #{protonet_forward.3} parent=0 // loop_footer_branch
    %14 = sbr.rel target = $region3
  $region8: #{protonet_forward.3} parent=0 // loop_exit
    _

// kernel: protonet_forward.2
$region0: #{protonet_forward.2}
  #allocation0 [shape = 'u32[]', space=smem, size = 0x4, offset = 0x4, fixed_abs, tag = 'smem constant byte address 0x4 - core index']
  #allocation1 [shape = 'u32[144,128]{1,0:T(1,128)}', space=vmem, size = 0x12000, scoped, tag = 'internal scratch']
  %s0 = inlined_call_operand.vmem [shape: bf16[8192,36], index: 0, kind: input, shape index: {}]
  %s1 = inlined_call_operand.vmem [shape: bf16[36,128], index: 1, kind: input, shape index: {}]
  %s2 = inlined_call_operand.vmem [shape: f32[1,128], index: 2, kind: input, shape index: {}]
  %s3 = inlined_call_operand.vmem [shape: f32[32,128], index: 3, kind: output, shape index: {}]
  %s4 = sld [smem:[#allocation0]]
  $region45: #{protonet_forward.2} parent=0
    _
  %s6 = ssub.s32 1, %s4
  %s7 = scalar_select 0, %s6, %s4
  loop: start=0, step=1, limit=4
  $region2: #{protonet_forward.2} parent=0 // loop_pre_header
    _
  $region3: #{protonet_forward.2} parent=0 // loop_header
    %s9 = sphi 0, %s13
    %p10 = scmp.ge.s32.totalorder %s9, 4
    %s19 = sphi 0, %s21
    %s22 = sphi 0, %s19
    %s23 = sphi 0, %s22
    %s39 = sphi 0, %s23
    %s43 = sphi 0, %s43
    %s45 = sphi 0, %s43
    %s46 = sphi 0, %s45
    %s60 = sphi 0, %s46
    %s64 = sphi 0, %s64
    %s66 = sphi 0, %s64
    %s67 = sphi 0, %s66
    %s81 = sphi 0, %s67
    %s87 = sphi 0, %s89
    %s90 = sphi 0, %s87
    %s91 = sphi 0, %s90
    %s107 = sphi 0, %s91
  $region4: #{protonet_forward.2} parent=0 // loop_header_branch
    %12 = sbr.rel (%p10) target = $region8
  $region5: #{protonet_forward.2} parent=0 // loop_body
    %s14 = ssub.s32 %s9, 1
    %s15 = ssub.s32 %s9, 2
    %s16 = sadd.s32 %s9, 1
    %s17 = ssub.s32 %s9, %s16
    %p18 = scmp.eq.s32.totalorder %s17, 0
    %s20 = sadd.s32 %s19, 1
    %s21 = scalar_select %p18, %s19, %s20
    %p24 = pneg %p18
    %p25 = scmp.eq.s32.totalorder %s9, 1
    %p26 = por %p24, %p25
    %p27 = scmp.ne.s32.totalorder %s19, %s22
    %p28 = scmp.eq.s32.totalorder %s9, 0
    %p29 = por %p27, %p28
    %p30 = scmp.ne.s32.totalorder %s19, %s22
    %p31 = scmp.eq.s32.totalorder %s14, 1
    %p32 = por %p30, %p31
    %p33 = scmp.ne.s32.totalorder %s22, %s23
    %p34 = scmp.eq.s32.totalorder %s14, 0
    %p35 = por %p33, %p34
    %p36 = scmp.ne.s32.totalorder %s22, %s23
    %p37 = scmp.eq.s32.totalorder %s15, 1
    %p38 = por %p36, %p37
    %p40 = scmp.ne.s32.totalorder %s23, %s39
    %p41 = scmp.eq.s32.totalorder %s15, 0
    %p42 = por %p40, %p41
    %s44 = sadd.s32 %s43, 1
    %p47 = scmp.eq.s32.totalorder %s9, 1
    %p48 = scmp.ne.s32.totalorder %s43, %s45
    %p49 = scmp.eq.s32.totalorder %s9, 0
    %p50 = por %p48, %p49
    %p51 = scmp.ne.s32.totalorder %s43, %s45
    %p52 = scmp.eq.s32.totalorder %s14, 1
    %p53 = por %p51, %p52
    %p54 = scmp.ne.s32.totalorder %s45, %s46
    %p55 = scmp.eq.s32.totalorder %s14, 0
    %p56 = por %p54, %p55
    %p57 = scmp.ne.s32.totalorder %s45, %s46
    %p58 = scmp.eq.s32.totalorder %s15, 1
    %p59 = por %p57, %p58
    %p61 = scmp.ne.s32.totalorder %s46, %s60
    %p62 = scmp.eq.s32.totalorder %s15, 0
    %p63 = por %p61, %p62
    %s65 = sadd.s32 %s64, 1
    %p68 = scmp.eq.s32.totalorder %s9, 1
    %p69 = scmp.ne.s32.totalorder %s64, %s66
    %p70 = scmp.eq.s32.totalorder %s9, 0
    %p71 = por %p69, %p70
    %p72 = scmp.ne.s32.totalorder %s64, %s66
    %p73 = scmp.eq.s32.totalorder %s14, 1
    %p74 = por %p72, %p73
    %p75 = scmp.ne.s32.totalorder %s66, %s67
    %p76 = scmp.eq.s32.totalorder %s14, 0
    %p77 = por %p75, %p76
    %p78 = scmp.ne.s32.totalorder %s66, %s67
    %p79 = scmp.eq.s32.totalorder %s15, 1
    %p80 = por %p78, %p79
    %p82 = scmp.ne.s32.totalorder %s67, %s81
    %p83 = scmp.eq.s32.totalorder %s15, 0
    %p84 = por %p82, %p83
    %s85 = ssub.s32 %s9, %s16
    %p86 = scmp.eq.s32.totalorder %s85, 0
    %s88 = sadd.s32 %s87, 1
    %s89 = scalar_select %p86, %s87, %s88
    %p92 = pneg %p86
    %p93 = scmp.eq.s32.totalorder %s9, 1
    %p94 = por %p92, %p93
    %p95 = scmp.ne.s32.totalorder %s87, %s90
    %p96 = scmp.eq.s32.totalorder %s9, 0
    %p97 = por %p95, %p96
    %p98 = scmp.ne.s32.totalorder %s87, %s90
    %p99 = scmp.eq.s32.totalorder %s14, 1
    %p100 = por %p98, %p99
    %p101 = scmp.ne.s32.totalorder %s90, %s91
    %p102 = scmp.eq.s32.totalorder %s14, 0
    %p103 = por %p101, %p102
    %p104 = scmp.ne.s32.totalorder %s90, %s91
    %p105 = scmp.eq.s32.totalorder %s15, 1
    %p106 = por %p104, %p105
    %p108 = scmp.ne.s32.totalorder %s91, %s107
    %p109 = scmp.eq.s32.totalorder %s15, 0
    %p110 = por %p108, %p109
    %p111 = scmp.le.s32.totalorder 1, %s9
    %p112 = scmp.lt.s32.totalorder %s9, 3
    %p113 = pnand %p111, %p112
    %p114 = pneg %p113
    // Predicated region
    $region9: #{protonet_forward.2} parent=5 // pred_check
      _
    $region10: #{protonet_forward.2} parent=5 // pred_check_branch
      %116 = sbr.rel (%p113) target = $region12
    $region11: #{protonet_forward.2} parent=5 // pred_region
      %s117 = ssub.s32 %s9, 1
      // Predicated region
      $region13: #{protonet_forward.2} parent=11 // pred_check
        %p118 = pneg %p56
      $region14: #{protonet_forward.2} parent=11 // pred_check_branch
        %120 = sbr.rel (%p118) target = $region16
      $region15: #{protonet_forward.2} parent=11 // pred_region
        _
      $region16: #{protonet_forward.2} parent=11 // pred_fallthru
        _
      // Predicated region
      $region17: #{protonet_forward.2} parent=11 // pred_check
        %p121 = pneg %p77
      $region18: #{protonet_forward.2} parent=11 // pred_check_branch
        %123 = sbr.rel (%p121) target = $region20
      $region19: #{protonet_forward.2} parent=11 // pred_region
        _
      $region20: #{protonet_forward.2} parent=11 // pred_fallthru
        _
    $region12: #{protonet_forward.2} parent=5 // pred_fallthru
      _
    %p124 = scmp.lt.s32.totalorder %s9, 2
    // Predicated region
    $region21: #{protonet_forward.2} parent=5 // pred_check
      %p125 = pneg %p124
    $region22: #{protonet_forward.2} parent=5 // pred_check_branch
      %127 = sbr.rel (%p125) target = $region24
    $region23: #{protonet_forward.2} parent=5 // pred_region
      // Predicated region
      $region25: #{protonet_forward.2} parent=23 // pred_check
        %p128 = pneg %p29
      $region26: #{protonet_forward.2} parent=23 // pred_check_branch
        %130 = sbr.rel (%p128) target = $region28
      $region27: #{protonet_forward.2} parent=23 // pred_region
        %s131 = smul.u32 512, %s9
        %p132 = scmp.lt.s32.totalorder %s131, 1023
        %s133 = scalar_select %p132, %s131, 1023
        %s134 = smul.addr %s133, 4
        %s135 = scalar_lea.vmem %s0, %s134
        %s136 = smul.u32 512, %s9
      $region28: #{protonet_forward.2} parent=23 // pred_fallthru
        _
    $region24: #{protonet_forward.2} parent=5 // pred_fallthru
      _
    %p137 = scmp.le.s32.totalorder 1, %s9
    %p138 = scmp.lt.s32.totalorder %s9, 3
    %p139 = pnand %p137, %p138
    %p140 = pneg %p139
    // Predicated region
    $region29: #{protonet_forward.2} parent=5 // pred_check
      _
    $region30: #{protonet_forward.2} parent=5 // pred_check_branch
      %142 = sbr.rel (%p139) target = $region32
    $region31: #{protonet_forward.2} parent=5 // pred_region
      %s143 = ssub.s32 %s9, 1
      %s144 = smul.u32 512, %s14
      %p145 = scmp.lt.s32.totalorder %s144, 1023
      %s146 = scalar_select %p145, %s144, 1023
      %s147 = smul.addr %s146, 4
      %s148 = scalar_lea.vmem %s0, %s147
      %p149 = pneg %p35
      %p150 = pneg %p32
      %p151 = pneg %p56
      %p152 = pneg %p53
      %p153 = pneg %p77
      %p154 = pneg %p74
      %p155 = pneg %p103
      %p156 = pneg %p100
      %s157 = smul.u32 2, %s14
      %p158 = scmp.lt.s32.totalorder %s157, 3
      %s159 = scalar_select %p158, %s157, 3
      %s160 = smul.addr %s159, 8
      %s161 = scalar_lea.vmem %s3, %s160
      %s162 = smul.u32 512, %s14
      %p163 = scmp.lt.s32.totalorder %s162, 1023
      %s164 = scalar_select %p163, %s162, 1023
      %s165 = smul.addr %s164, 4
      %s166 = scalar_lea.vmem %s0, %s165
      %s167 = smul.u32 512, %s14
      %s168 = smul.u32 2, %s14
      %p169 = scmp.lt.s32.totalorder %s168, 3
      %s170 = scalar_select %p169, %s168, 3
      %s171 = smul.addr %s170, 8
      %s172 = scalar_lea.vmem %s3, %s171
      %s173 = smul.u32 2, %s14
      %v175 = vld [vmem:[%s166] sm:$0xf]
      %v176 = vld [vmem:[%s166 + $0x4] sm:$0xf]
      %v177 = vld [vmem:[%s166 + $0x8] sm:$0xf]
      %v178 = vld [vmem:[%s166 + $0xc] sm:$0xf]
      %v179 = vld [vmem:[%s166 + $0x10] sm:$0xf]
      %v180 = vld [vmem:[%s166 + $0x14] sm:$0xf]
      %v181 = vld [vmem:[%s166 + $0x18] sm:$0xf]
      %v182 = vld [vmem:[%s166 + $0x1c] sm:$0xf]
      %v183 = vld [vmem:[%s166 + $0x20] sm:$0xf]
      %v184 = vld [vmem:[%s166 + $0x24] sm:$0xf]
      %v185 = vld [vmem:[%s166 + $0x28] sm:$0xf]
      %v186 = vld [vmem:[%s166 + $0x2c] sm:$0xf]
      %v187 = vld [vmem:[%s166 + $0x30] sm:$0xf]
      %v188 = vld [vmem:[%s166 + $0x34] sm:$0xf]
      %v189 = vld [vmem:[%s166 + $0x38] sm:$0xf]
      %v190 = vld [vmem:[%s166 + $0x3c] sm:$0xf]
      %v191 = vld [vmem:[%s166 + $0x40] sm:$0xf]
      %v192 = vld [vmem:[%s166 + $0x44] sm:$0xf]
      %v193 = vld [vmem:[%s166 + $0x48] sm:$0xf]
      %v194 = vld [vmem:[%s166 + $0x4c] sm:$0xf]
      %v195 = vld [vmem:[%s166 + $0x50] sm:$0xf]
      %v196 = vld [vmem:[%s166 + $0x54] sm:$0xf]
      %v197 = vld [vmem:[%s166 + $0x58] sm:$0xf]
      %v198 = vld [vmem:[%s166 + $0x5c] sm:$0xf]
      %v199 = vld [vmem:[%s166 + $0x60] sm:$0xf]
      %v200 = vld [vmem:[%s166 + $0x64] sm:$0xf]
      %v201 = vld [vmem:[%s166 + $0x68] sm:$0xf]
      %v202 = vld [vmem:[%s166 + $0x6c] sm:$0xf]
      %v203 = vld [vmem:[%s166 + $0x70] sm:$0xf]
      %v204 = vld [vmem:[%s166 + $0x74] sm:$0xf]
      %v205 = vld [vmem:[%s166 + $0x78] sm:$0xf]
      %v206 = vld [vmem:[%s166 + $0x7c] sm:$0xf]
      %v207 = vld [vmem:[%s166 + $0x80] sm:$0xf]
      %v208 = vld [vmem:[%s166 + $0x84] sm:$0xf]
      %v209 = vld [vmem:[%s166 + $0x88] sm:$0xf]
      %v210 = vld [vmem:[%s166 + $0x8c] sm:$0xf]
      %v211 = vld [vmem:[%s166 + $0x90] sm:$0xf]
      %v212 = vld [vmem:[%s166 + $0x94] sm:$0xf]
      %v213 = vld [vmem:[%s166 + $0x98] sm:$0xf]
      %v214 = vld [vmem:[%s166 + $0x9c] sm:$0xf]
      %v215 = vld [vmem:[%s166 + $0xa0] sm:$0xf]
      %v216 = vld [vmem:[%s166 + $0xa4] sm:$0xf]
      %v217 = vld [vmem:[%s166 + $0xa8] sm:$0xf]
      %v218 = vld [vmem:[%s166 + $0xac] sm:$0xf]
      %v219 = vld [vmem:[%s166 + $0xb0] sm:$0xf]
      %v220 = vld [vmem:[%s166 + $0xb4] sm:$0xf]
      %v221 = vld [vmem:[%s166 + $0xb8] sm:$0xf]
      %v222 = vld [vmem:[%s166 + $0xbc] sm:$0xf]
      %v223 = vld [vmem:[%s166 + $0xc0] sm:$0xf]
      %v224 = vld [vmem:[%s166 + $0xc4] sm:$0xf]
      %v225 = vld [vmem:[%s166 + $0xc8] sm:$0xf]
      %v226 = vld [vmem:[%s166 + $0xcc] sm:$0xf]
      %v227 = vld [vmem:[%s166 + $0xd0] sm:$0xf]
      %v228 = vld [vmem:[%s166 + $0xd4] sm:$0xf]
      %v229 = vld [vmem:[%s166 + $0xd8] sm:$0xf]
      %v230 = vld [vmem:[%s166 + $0xdc] sm:$0xf]
      %v231 = vld [vmem:[%s166 + $0xe0] sm:$0xf]
      %v232 = vld [vmem:[%s166 + $0xe4] sm:$0xf]
      %v233 = vld [vmem:[%s166 + $0xe8] sm:$0xf]
      %v234 = vld [vmem:[%s166 + $0xec] sm:$0xf]
      %v235 = vld [vmem:[%s166 + $0xf0] sm:$0xf]
      %v236 = vld [vmem:[%s166 + $0xf4] sm:$0xf]
      %v237 = vld [vmem:[%s166 + $0xf8] sm:$0xf]
      %v238 = vld [vmem:[%s166 + $0xfc] sm:$0xf]
      %v239 = vld [vmem:[%s166 + $0x100] sm:$0xf]
      %v240 = vld [vmem:[%s166 + $0x104] sm:$0xf]
      %v241 = vld [vmem:[%s166 + $0x108] sm:$0xf]
      %v242 = vld [vmem:[%s166 + $0x10c] sm:$0xf]
      %v243 = vld [vmem:[%s166 + $0x110] sm:$0xf]
      %v244 = vld [vmem:[%s166 + $0x114] sm:$0xf]
      %v245 = vld [vmem:[%s166 + $0x118] sm:$0xf]
      %v246 = vld [vmem:[%s166 + $0x11c] sm:$0xf]
      %v247 = vld [vmem:[%s166 + $0x120] sm:$0xf]
      %v248 = vld [vmem:[%s166 + $0x124] sm:$0xf]
      %v249 = vld [vmem:[%s166 + $0x128] sm:$0xf]
      %v250 = vld [vmem:[%s166 + $0x12c] sm:$0xf]
      %v251 = vld [vmem:[%s166 + $0x130] sm:$0xf]
      %v252 = vld [vmem:[%s166 + $0x134] sm:$0xf]
      %v253 = vld [vmem:[%s166 + $0x138] sm:$0xf]
      %v254 = vld [vmem:[%s166 + $0x13c] sm:$0xf]
      %v255 = vld [vmem:[%s166 + $0x140] sm:$0xf]
      %v256 = vld [vmem:[%s166 + $0x144] sm:$0xf]
      %v257 = vld [vmem:[%s166 + $0x148] sm:$0xf]
      %v258 = vld [vmem:[%s166 + $0x14c] sm:$0xf]
      %v259 = vld [vmem:[%s166 + $0x150] sm:$0xf]
      %v260 = vld [vmem:[%s166 + $0x154] sm:$0xf]
      %v261 = vld [vmem:[%s166 + $0x158] sm:$0xf]
      %v262 = vld [vmem:[%s166 + $0x15c] sm:$0xf]
      %v263 = vld [vmem:[%s166 + $0x160] sm:$0xf]
      %v264 = vld [vmem:[%s166 + $0x164] sm:$0xf]
      %v265 = vld [vmem:[%s166 + $0x168] sm:$0xf]
      %v266 = vld [vmem:[%s166 + $0x16c] sm:$0xf]
      %v267 = vld [vmem:[%s166 + $0x170] sm:$0xf]
      %v268 = vld [vmem:[%s166 + $0x174] sm:$0xf]
      %v269 = vld [vmem:[%s166 + $0x178] sm:$0xf]
      %v270 = vld [vmem:[%s166 + $0x17c] sm:$0xf]
      %v271 = vld [vmem:[%s166 + $0x180] sm:$0xf]
      %v272 = vld [vmem:[%s166 + $0x184] sm:$0xf]
      %v273 = vld [vmem:[%s166 + $0x188] sm:$0xf]
      %v274 = vld [vmem:[%s166 + $0x18c] sm:$0xf]
      %v275 = vld [vmem:[%s166 + $0x190] sm:$0xf]
      %v276 = vld [vmem:[%s166 + $0x194] sm:$0xf]
      %v277 = vld [vmem:[%s166 + $0x198] sm:$0xf]
      %v278 = vld [vmem:[%s166 + $0x19c] sm:$0xf]
      %v279 = vld [vmem:[%s166 + $0x1a0] sm:$0xf]
      %v280 = vld [vmem:[%s166 + $0x1a4] sm:$0xf]
      %v281 = vld [vmem:[%s166 + $0x1a8] sm:$0xf]
      %v282 = vld [vmem:[%s166 + $0x1ac] sm:$0xf]
      %v283 = vld [vmem:[%s166 + $0x1b0] sm:$0xf]
      %v284 = vld [vmem:[%s166 + $0x1b4] sm:$0xf]
      %v285 = vld [vmem:[%s166 + $0x1b8] sm:$0xf]
      %v286 = vld [vmem:[%s166 + $0x1bc] sm:$0xf]
      %v287 = vld [vmem:[%s166 + $0x1c0] sm:$0xf]
      %v288 = vld [vmem:[%s166 + $0x1c4] sm:$0xf]
      %v289 = vld [vmem:[%s166 + $0x1c8] sm:$0xf]
      %v290 = vld [vmem:[%s166 + $0x1cc] sm:$0xf]
      %v291 = vld [vmem:[%s166 + $0x1d0] sm:$0xf]
      %v292 = vld [vmem:[%s166 + $0x1d4] sm:$0xf]
      %v293 = vld [vmem:[%s166 + $0x1d8] sm:$0xf]
      %v294 = vld [vmem:[%s166 + $0x1dc] sm:$0xf]
      %v295 = vld [vmem:[%s166 + $0x1e0] sm:$0xf]
      %v296 = vld [vmem:[%s166 + $0x1e4] sm:$0xf]
      %v297 = vld [vmem:[%s166 + $0x1e8] sm:$0xf]
      %v298 = vld [vmem:[%s166 + $0x1ec] sm:$0xf]
      %v299 = vld [vmem:[%s166 + $0x1f0] sm:$0xf]
      %v300 = vld [vmem:[%s166 + $0x1f4] sm:$0xf]
      %v301 = vld [vmem:[%s166 + $0x1f8] sm:$0xf]
      %v302 = vld [vmem:[%s166 + $0x1fc] sm:$0xf]
      %v303 = vld [vmem:[%s166 + $0x200] sm:$0xf]
      %v304 = vld [vmem:[%s166 + $0x204] sm:$0xf]
      %v305 = vld [vmem:[%s166 + $0x208] sm:$0xf]
      %v306 = vld [vmem:[%s166 + $0x20c] sm:$0xf]
      %v307 = vld [vmem:[%s166 + $0x210] sm:$0xf]
      %v308 = vld [vmem:[%s166 + $0x214] sm:$0xf]
      %v309 = vld [vmem:[%s166 + $0x218] sm:$0xf]
      %v310 = vld [vmem:[%s166 + $0x21c] sm:$0xf]
      %v311 = vld [vmem:[%s166 + $0x220] sm:$0xf]
      %v312 = vld [vmem:[%s166 + $0x224] sm:$0xf]
      %v313 = vld [vmem:[%s166 + $0x228] sm:$0xf]
      %v314 = vld [vmem:[%s166 + $0x22c] sm:$0xf]
      %v315 = vld [vmem:[%s166 + $0x230] sm:$0xf]
      %v316 = vld [vmem:[%s166 + $0x234] sm:$0xf]
      %v317 = vld [vmem:[%s166 + $0x238] sm:$0xf]
      %v318 = vld [vmem:[%s166 + $0x23c] sm:$0xf]
      %v319 = vld [vmem:[%s166 + $0x240] sm:$0xf]
      %v320 = vld [vmem:[%s166 + $0x244] sm:$0xf]
      %v321 = vld [vmem:[%s166 + $0x248] sm:$0xf]
      %v322 = vld [vmem:[%s166 + $0x24c] sm:$0xf]
      %v323 = vld [vmem:[%s166 + $0x250] sm:$0xf]
      %v324 = vld [vmem:[%s166 + $0x254] sm:$0xf]
      %v325 = vld [vmem:[%s166 + $0x258] sm:$0xf]
      %v326 = vld [vmem:[%s166 + $0x25c] sm:$0xf]
      %v327 = vld [vmem:[%s166 + $0x260] sm:$0xf]
      %v328 = vld [vmem:[%s166 + $0x264] sm:$0xf]
      %v329 = vld [vmem:[%s166 + $0x268] sm:$0xf]
      %v330 = vld [vmem:[%s166 + $0x26c] sm:$0xf]
      %v331 = vld [vmem:[%s166 + $0x270] sm:$0xf]
      %v332 = vld [vmem:[%s166 + $0x274] sm:$0xf]
      %v333 = vld [vmem:[%s166 + $0x278] sm:$0xf]
      %v334 = vld [vmem:[%s166 + $0x27c] sm:$0xf]
      %v335 = vld [vmem:[%s166 + $0x280] sm:$0xf]
      %v336 = vld [vmem:[%s166 + $0x284] sm:$0xf]
      %v337 = vld [vmem:[%s166 + $0x288] sm:$0xf]
      %v338 = vld [vmem:[%s166 + $0x28c] sm:$0xf]
      %v339 = vld [vmem:[%s166 + $0x290] sm:$0xf]
      %v340 = vld [vmem:[%s166 + $0x294] sm:$0xf]
      %v341 = vld [vmem:[%s166 + $0x298] sm:$0xf]
      %v342 = vld [vmem:[%s166 + $0x29c] sm:$0xf]
      %v343 = vld [vmem:[%s166 + $0x2a0] sm:$0xf]
      %v344 = vld [vmem:[%s166 + $0x2a4] sm:$0xf]
      %v345 = vld [vmem:[%s166 + $0x2a8] sm:$0xf]
      %v346 = vld [vmem:[%s166 + $0x2ac] sm:$0xf]
      %v347 = vld [vmem:[%s166 + $0x2b0] sm:$0xf]
      %v348 = vld [vmem:[%s166 + $0x2b4] sm:$0xf]
      %v349 = vld [vmem:[%s166 + $0x2b8] sm:$0xf]
      %v350 = vld [vmem:[%s166 + $0x2bc] sm:$0xf]
      %v351 = vld [vmem:[%s166 + $0x2c0] sm:$0xf]
      %v352 = vld [vmem:[%s166 + $0x2c4] sm:$0xf]
      %v353 = vld [vmem:[%s166 + $0x2c8] sm:$0xf]
      %v354 = vld [vmem:[%s166 + $0x2cc] sm:$0xf]
      %v355 = vld [vmem:[%s166 + $0x2d0] sm:$0xf]
      %v356 = vld [vmem:[%s166 + $0x2d4] sm:$0xf]
      %v357 = vld [vmem:[%s166 + $0x2d8] sm:$0xf]
      %v358 = vld [vmem:[%s166 + $0x2dc] sm:$0xf]
      %v359 = vld [vmem:[%s166 + $0x2e0] sm:$0xf]
      %v360 = vld [vmem:[%s166 + $0x2e4] sm:$0xf]
      %v361 = vld [vmem:[%s166 + $0x2e8] sm:$0xf]
      %v362 = vld [vmem:[%s166 + $0x2ec] sm:$0xf]
      %v363 = vld [vmem:[%s166 + $0x2f0] sm:$0xf]
      %v364 = vld [vmem:[%s166 + $0x2f4] sm:$0xf]
      %v365 = vld [vmem:[%s166 + $0x2f8] sm:$0xf]
      %v366 = vld [vmem:[%s166 + $0x2fc] sm:$0xf]
      %v367 = vld [vmem:[%s166 + $0x300] sm:$0xf]
      %v368 = vld [vmem:[%s166 + $0x304] sm:$0xf]
      %v369 = vld [vmem:[%s166 + $0x308] sm:$0xf]
      %v370 = vld [vmem:[%s166 + $0x30c] sm:$0xf]
      %v371 = vld [vmem:[%s166 + $0x310] sm:$0xf]
      %v372 = vld [vmem:[%s166 + $0x314] sm:$0xf]
      %v373 = vld [vmem:[%s166 + $0x318] sm:$0xf]
      %v374 = vld [vmem:[%s166 + $0x31c] sm:$0xf]
      %v375 = vld [vmem:[%s166 + $0x320] sm:$0xf]
      %v376 = vld [vmem:[%s166 + $0x324] sm:$0xf]
      %v377 = vld [vmem:[%s166 + $0x328] sm:$0xf]
      %v378 = vld [vmem:[%s166 + $0x32c] sm:$0xf]
      %v379 = vld [vmem:[%s166 + $0x330] sm:$0xf]
      %v380 = vld [vmem:[%s166 + $0x334] sm:$0xf]
      %v381 = vld [vmem:[%s166 + $0x338] sm:$0xf]
      %v382 = vld [vmem:[%s166 + $0x33c] sm:$0xf]
      %v383 = vld [vmem:[%s166 + $0x340] sm:$0xf]
      %v384 = vld [vmem:[%s166 + $0x344] sm:$0xf]
      %v385 = vld [vmem:[%s166 + $0x348] sm:$0xf]
      %v386 = vld [vmem:[%s166 + $0x34c] sm:$0xf]
      %v387 = vld [vmem:[%s166 + $0x350] sm:$0xf]
      %v388 = vld [vmem:[%s166 + $0x354] sm:$0xf]
      %v389 = vld [vmem:[%s166 + $0x358] sm:$0xf]
      %v390 = vld [vmem:[%s166 + $0x35c] sm:$0xf]
      %v391 = vld [vmem:[%s166 + $0x360] sm:$0xf]
      %v392 = vld [vmem:[%s166 + $0x364] sm:$0xf]
      %v393 = vld [vmem:[%s166 + $0x368] sm:$0xf]
      %v394 = vld [vmem:[%s166 + $0x36c] sm:$0xf]
      %v395 = vld [vmem:[%s166 + $0x370] sm:$0xf]
      %v396 = vld [vmem:[%s166 + $0x374] sm:$0xf]
      %v397 = vld [vmem:[%s166 + $0x378] sm:$0xf]
      %v398 = vld [vmem:[%s166 + $0x37c] sm:$0xf]
      %v399 = vld [vmem:[%s166 + $0x380] sm:$0xf]
      %v400 = vld [vmem:[%s166 + $0x384] sm:$0xf]
      %v401 = vld [vmem:[%s166 + $0x388] sm:$0xf]
      %v402 = vld [vmem:[%s166 + $0x38c] sm:$0xf]
      %v403 = vld [vmem:[%s166 + $0x390] sm:$0xf]
      %v404 = vld [vmem:[%s166 + $0x394] sm:$0xf]
      %v405 = vld [vmem:[%s166 + $0x398] sm:$0xf]
      %v406 = vld [vmem:[%s166 + $0x39c] sm:$0xf]
      %v407 = vld [vmem:[%s166 + $0x3a0] sm:$0xf]
      %v408 = vld [vmem:[%s166 + $0x3a4] sm:$0xf]
      %v409 = vld [vmem:[%s166 + $0x3a8] sm:$0xf]
      %v410 = vld [vmem:[%s166 + $0x3ac] sm:$0xf]
      %v411 = vld [vmem:[%s166 + $0x3b0] sm:$0xf]
      %v412 = vld [vmem:[%s166 + $0x3b4] sm:$0xf]
      %v413 = vld [vmem:[%s166 + $0x3b8] sm:$0xf]
      %v414 = vld [vmem:[%s166 + $0x3bc] sm:$0xf]
      %v415 = vld [vmem:[%s166 + $0x3c0] sm:$0xf]
      %v416 = vld [vmem:[%s166 + $0x3c4] sm:$0xf]
      %v417 = vld [vmem:[%s166 + $0x3c8] sm:$0xf]
      %v418 = vld [vmem:[%s166 + $0x3cc] sm:$0xf]
      %v419 = vld [vmem:[%s166 + $0x3d0] sm:$0xf]
      %v420 = vld [vmem:[%s166 + $0x3d4] sm:$0xf]
      %v421 = vld [vmem:[%s166 + $0x3d8] sm:$0xf]
      %v422 = vld [vmem:[%s166 + $0x3dc] sm:$0xf]
      %v423 = vld [vmem:[%s166 + $0x3e0] sm:$0xf]
      %v424 = vld [vmem:[%s166 + $0x3e4] sm:$0xf]
      %v425 = vld [vmem:[%s166 + $0x3e8] sm:$0xf]
      %v426 = vld [vmem:[%s166 + $0x3ec] sm:$0xf]
      %v427 = vld [vmem:[%s166 + $0x3f0] sm:$0xf]
      %v428 = vld [vmem:[%s166 + $0x3f4] sm:$0xf]
      %v429 = vld [vmem:[%s166 + $0x3f8] sm:$0xf]
      %v430 = vld [vmem:[%s166 + $0x3fc] sm:$0xf]
      %v431 = vld [vmem:[%s166 + $0x400] sm:$0xf]
      %v432 = vld [vmem:[%s166 + $0x404] sm:$0xf]
      %v433 = vld [vmem:[%s166 + $0x408] sm:$0xf]
      %v434 = vld [vmem:[%s166 + $0x40c] sm:$0xf]
      %v435 = vld [vmem:[%s166 + $0x410] sm:$0xf]
      %v436 = vld [vmem:[%s166 + $0x414] sm:$0xf]
      %v437 = vld [vmem:[%s166 + $0x418] sm:$0xf]
      %v438 = vld [vmem:[%s166 + $0x41c] sm:$0xf]
      %v439 = vld [vmem:[%s166 + $0x420] sm:$0xf]
      %v440 = vld [vmem:[%s166 + $0x424] sm:$0xf]
      %v441 = vld [vmem:[%s166 + $0x428] sm:$0xf]
      %v442 = vld [vmem:[%s166 + $0x42c] sm:$0xf]
      %v443 = vld [vmem:[%s166 + $0x430] sm:$0xf]
      %v444 = vld [vmem:[%s166 + $0x434] sm:$0xf]
      %v445 = vld [vmem:[%s166 + $0x438] sm:$0xf]
      %v446 = vld [vmem:[%s166 + $0x43c] sm:$0xf]
      %v447 = vld [vmem:[%s166 + $0x440] sm:$0xf]
      %v448 = vld [vmem:[%s166 + $0x444] sm:$0xf]
      %v449 = vld [vmem:[%s166 + $0x448] sm:$0xf]
      %v450 = vld [vmem:[%s166 + $0x44c] sm:$0xf]
      %v451 = vld [vmem:[%s166 + $0x450] sm:$0xf]
      %v452 = vld [vmem:[%s166 + $0x454] sm:$0xf]
      %v453 = vld [vmem:[%s166 + $0x458] sm:$0xf]
      %v454 = vld [vmem:[%s166 + $0x45c] sm:$0xf]
      %v455 = vld [vmem:[%s166 + $0x460] sm:$0xf]
      %v456 = vld [vmem:[%s166 + $0x464] sm:$0xf]
      %v457 = vld [vmem:[%s166 + $0x468] sm:$0xf]
      %v458 = vld [vmem:[%s166 + $0x46c] sm:$0xf]
      %v459 = vld [vmem:[%s166 + $0x470] sm:$0xf]
      %v460 = vld [vmem:[%s166 + $0x474] sm:$0xf]
      %v461 = vld [vmem:[%s166 + $0x478] sm:$0xf]
      %v462 = vld [vmem:[%s166 + $0x47c] sm:$0xf]
      %v463 = vld [vmem:[%s166 + $0x480] sm:$0xf]
      %v464 = vld [vmem:[%s166 + $0x484] sm:$0xf]
      %v465 = vld [vmem:[%s166 + $0x488] sm:$0xf]
      %v466 = vld [vmem:[%s166 + $0x48c] sm:$0xf]
      %v467 = vld [vmem:[%s166 + $0x490] sm:$0xf]
      %v468 = vld [vmem:[%s166 + $0x494] sm:$0xf]
      %v469 = vld [vmem:[%s166 + $0x498] sm:$0xf]
      %v470 = vld [vmem:[%s166 + $0x49c] sm:$0xf]
      %v471 = vld [vmem:[%s166 + $0x4a0] sm:$0xf]
      %v472 = vld [vmem:[%s166 + $0x4a4] sm:$0xf]
      %v473 = vld [vmem:[%s166 + $0x4a8] sm:$0xf]
      %v474 = vld [vmem:[%s166 + $0x4ac] sm:$0xf]
      %v475 = vld [vmem:[%s166 + $0x4b0] sm:$0xf]
      %v476 = vld [vmem:[%s166 + $0x4b4] sm:$0xf]
      %v477 = vld [vmem:[%s166 + $0x4b8] sm:$0xf]
      %v478 = vld [vmem:[%s166 + $0x4bc] sm:$0xf]
      %v479 = vld [vmem:[%s166 + $0x4c0] sm:$0xf]
      %v480 = vld [vmem:[%s166 + $0x4c4] sm:$0xf]
      %v481 = vld [vmem:[%s166 + $0x4c8] sm:$0xf]
      %v482 = vld [vmem:[%s166 + $0x4cc] sm:$0xf]
      %v483 = vld [vmem:[%s166 + $0x4d0] sm:$0xf]
      %v484 = vld [vmem:[%s166 + $0x4d4] sm:$0xf]
      %v485 = vld [vmem:[%s166 + $0x4d8] sm:$0xf]
      %v486 = vld [vmem:[%s166 + $0x4dc] sm:$0xf]
      %v487 = vld [vmem:[%s166 + $0x4e0] sm:$0xf]
      %v488 = vld [vmem:[%s166 + $0x4e4] sm:$0xf]
      %v489 = vld [vmem:[%s166 + $0x4e8] sm:$0xf]
      %v490 = vld [vmem:[%s166 + $0x4ec] sm:$0xf]
      %v491 = vld [vmem:[%s166 + $0x4f0] sm:$0xf]
      %v492 = vld [vmem:[%s166 + $0x4f4] sm:$0xf]
      %v493 = vld [vmem:[%s166 + $0x4f8] sm:$0xf]
      %v494 = vld [vmem:[%s166 + $0x4fc] sm:$0xf]
      %v495 = vld [vmem:[%s166 + $0x500] sm:$0xf]
      %v496 = vld [vmem:[%s166 + $0x504] sm:$0xf]
      %v497 = vld [vmem:[%s166 + $0x508] sm:$0xf]
      %v498 = vld [vmem:[%s166 + $0x50c] sm:$0xf]
      %v499 = vld [vmem:[%s166 + $0x510] sm:$0xf]
      %v500 = vld [vmem:[%s166 + $0x514] sm:$0xf]
      %v501 = vld [vmem:[%s166 + $0x518] sm:$0xf]
      %v502 = vld [vmem:[%s166 + $0x51c] sm:$0xf]
      %v503 = vld [vmem:[%s166 + $0x520] sm:$0xf]
      %v504 = vld [vmem:[%s166 + $0x524] sm:$0xf]
      %v505 = vld [vmem:[%s166 + $0x528] sm:$0xf]
      %v506 = vld [vmem:[%s166 + $0x52c] sm:$0xf]
      %v507 = vld [vmem:[%s166 + $0x530] sm:$0xf]
      %v508 = vld [vmem:[%s166 + $0x534] sm:$0xf]
      %v509 = vld [vmem:[%s166 + $0x538] sm:$0xf]
      %v510 = vld [vmem:[%s166 + $0x53c] sm:$0xf]
      %v511 = vld [vmem:[%s166 + $0x540] sm:$0xf]
      %v512 = vld [vmem:[%s166 + $0x544] sm:$0xf]
      %v513 = vld [vmem:[%s166 + $0x548] sm:$0xf]
      %v514 = vld [vmem:[%s166 + $0x54c] sm:$0xf]
      %v515 = vld [vmem:[%s166 + $0x550] sm:$0xf]
      %v516 = vld [vmem:[%s166 + $0x554] sm:$0xf]
      %v517 = vld [vmem:[%s166 + $0x558] sm:$0xf]
      %v518 = vld [vmem:[%s166 + $0x55c] sm:$0xf]
      %v519 = vld [vmem:[%s166 + $0x560] sm:$0xf]
      %v520 = vld [vmem:[%s166 + $0x564] sm:$0xf]
      %v521 = vld [vmem:[%s166 + $0x568] sm:$0xf]
      %v522 = vld [vmem:[%s166 + $0x56c] sm:$0xf]
      %v523 = vld [vmem:[%s166 + $0x570] sm:$0xf]
      %v524 = vld [vmem:[%s166 + $0x574] sm:$0xf]
      %v525 = vld [vmem:[%s166 + $0x578] sm:$0xf]
      %v526 = vld [vmem:[%s166 + $0x57c] sm:$0xf]
      %v527 = vld [vmem:[%s166 + $0x580] sm:$0xf]
      %v528 = vld [vmem:[%s166 + $0x584] sm:$0xf]
      %v529 = vld [vmem:[%s166 + $0x588] sm:$0xf]
      %v530 = vld [vmem:[%s166 + $0x58c] sm:$0xf]
      %v531 = vld [vmem:[%s166 + $0x590] sm:$0xf]
      %v532 = vld [vmem:[%s166 + $0x594] sm:$0xf]
      %v533 = vld [vmem:[%s166 + $0x598] sm:$0xf]
      %v534 = vld [vmem:[%s166 + $0x59c] sm:$0xf]
      %v535 = vld [vmem:[%s166 + $0x5a0] sm:$0xf]
      %v536 = vld [vmem:[%s166 + $0x5a4] sm:$0xf]
      %v537 = vld [vmem:[%s166 + $0x5a8] sm:$0xf]
      %v538 = vld [vmem:[%s166 + $0x5ac] sm:$0xf]
      %v539 = vld [vmem:[%s166 + $0x5b0] sm:$0xf]
      %v540 = vld [vmem:[%s166 + $0x5b4] sm:$0xf]
      %v541 = vld [vmem:[%s166 + $0x5b8] sm:$0xf]
      %v542 = vld [vmem:[%s166 + $0x5bc] sm:$0xf]
      %v543 = vld [vmem:[%s166 + $0x5c0] sm:$0xf]
      %v544 = vld [vmem:[%s166 + $0x5c4] sm:$0xf]
      %v545 = vld [vmem:[%s166 + $0x5c8] sm:$0xf]
      %v546 = vld [vmem:[%s166 + $0x5cc] sm:$0xf]
      %v547 = vld [vmem:[%s166 + $0x5d0] sm:$0xf]
      %v548 = vld [vmem:[%s166 + $0x5d4] sm:$0xf]
      %v549 = vld [vmem:[%s166 + $0x5d8] sm:$0xf]
      %v550 = vld [vmem:[%s166 + $0x5dc] sm:$0xf]
      %v551 = vld [vmem:[%s166 + $0x5e0] sm:$0xf]
      %v552 = vld [vmem:[%s166 + $0x5e4] sm:$0xf]
      %v553 = vld [vmem:[%s166 + $0x5e8] sm:$0xf]
      %v554 = vld [vmem:[%s166 + $0x5ec] sm:$0xf]
      %v555 = vld [vmem:[%s166 + $0x5f0] sm:$0xf]
      %v556 = vld [vmem:[%s166 + $0x5f4] sm:$0xf]
      %v557 = vld [vmem:[%s166 + $0x5f8] sm:$0xf]
      %v558 = vld [vmem:[%s166 + $0x5fc] sm:$0xf]
      %v559 = vld [vmem:[%s166 + $0x600] sm:$0xf]
      %v560 = vld [vmem:[%s166 + $0x604] sm:$0xf]
      %v561 = vld [vmem:[%s166 + $0x608] sm:$0xf]
      %v562 = vld [vmem:[%s166 + $0x60c] sm:$0xf]
      %v563 = vld [vmem:[%s166 + $0x610] sm:$0xf]
      %v564 = vld [vmem:[%s166 + $0x614] sm:$0xf]
      %v565 = vld [vmem:[%s166 + $0x618] sm:$0xf]
      %v566 = vld [vmem:[%s166 + $0x61c] sm:$0xf]
      %v567 = vld [vmem:[%s166 + $0x620] sm:$0xf]
      %v568 = vld [vmem:[%s166 + $0x624] sm:$0xf]
      %v569 = vld [vmem:[%s166 + $0x628] sm:$0xf]
      %v570 = vld [vmem:[%s166 + $0x62c] sm:$0xf]
      %v571 = vld [vmem:[%s166 + $0x630] sm:$0xf]
      %v572 = vld [vmem:[%s166 + $0x634] sm:$0xf]
      %v573 = vld [vmem:[%s166 + $0x638] sm:$0xf]
      %v574 = vld [vmem:[%s166 + $0x63c] sm:$0xf]
      %v575 = vld [vmem:[%s166 + $0x640] sm:$0xf]
      %v576 = vld [vmem:[%s166 + $0x644] sm:$0xf]
      %v577 = vld [vmem:[%s166 + $0x648] sm:$0xf]
      %v578 = vld [vmem:[%s166 + $0x64c] sm:$0xf]
      %v579 = vld [vmem:[%s166 + $0x650] sm:$0xf]
      %v580 = vld [vmem:[%s166 + $0x654] sm:$0xf]
      %v581 = vld [vmem:[%s166 + $0x658] sm:$0xf]
      %v582 = vld [vmem:[%s166 + $0x65c] sm:$0xf]
      %v583 = vld [vmem:[%s166 + $0x660] sm:$0xf]
      %v584 = vld [vmem:[%s166 + $0x664] sm:$0xf]
      %v585 = vld [vmem:[%s166 + $0x668] sm:$0xf]
      %v586 = vld [vmem:[%s166 + $0x66c] sm:$0xf]
      %v587 = vld [vmem:[%s166 + $0x670] sm:$0xf]
      %v588 = vld [vmem:[%s166 + $0x674] sm:$0xf]
      %v589 = vld [vmem:[%s166 + $0x678] sm:$0xf]
      %v590 = vld [vmem:[%s166 + $0x67c] sm:$0xf]
      %v591 = vld [vmem:[%s166 + $0x680] sm:$0xf]
      %v592 = vld [vmem:[%s166 + $0x684] sm:$0xf]
      %v593 = vld [vmem:[%s166 + $0x688] sm:$0xf]
      %v594 = vld [vmem:[%s166 + $0x68c] sm:$0xf]
      %v595 = vld [vmem:[%s166 + $0x690] sm:$0xf]
      %v596 = vld [vmem:[%s166 + $0x694] sm:$0xf]
      %v597 = vld [vmem:[%s166 + $0x698] sm:$0xf]
      %v598 = vld [vmem:[%s166 + $0x69c] sm:$0xf]
      %v599 = vld [vmem:[%s166 + $0x6a0] sm:$0xf]
      %v600 = vld [vmem:[%s166 + $0x6a4] sm:$0xf]
      %v601 = vld [vmem:[%s166 + $0x6a8] sm:$0xf]
      %v602 = vld [vmem:[%s166 + $0x6ac] sm:$0xf]
      %v603 = vld [vmem:[%s166 + $0x6b0] sm:$0xf]
      %v604 = vld [vmem:[%s166 + $0x6b4] sm:$0xf]
      %v605 = vld [vmem:[%s166 + $0x6b8] sm:$0xf]
      %v606 = vld [vmem:[%s166 + $0x6bc] sm:$0xf]
      %v607 = vld [vmem:[%s166 + $0x6c0] sm:$0xf]
      %v608 = vld [vmem:[%s166 + $0x6c4] sm:$0xf]
      %v609 = vld [vmem:[%s166 + $0x6c8] sm:$0xf]
      %v610 = vld [vmem:[%s166 + $0x6cc] sm:$0xf]
      %v611 = vld [vmem:[%s166 + $0x6d0] sm:$0xf]
      %v612 = vld [vmem:[%s166 + $0x6d4] sm:$0xf]
      %v613 = vld [vmem:[%s166 + $0x6d8] sm:$0xf]
      %v614 = vld [vmem:[%s166 + $0x6dc] sm:$0xf]
      %v615 = vld [vmem:[%s166 + $0x6e0] sm:$0xf]
      %v616 = vld [vmem:[%s166 + $0x6e4] sm:$0xf]
      %v617 = vld [vmem:[%s166 + $0x6e8] sm:$0xf]
      %v618 = vld [vmem:[%s166 + $0x6ec] sm:$0xf]
      %v619 = vld [vmem:[%s166 + $0x6f0] sm:$0xf]
      %v620 = vld [vmem:[%s166 + $0x6f4] sm:$0xf]
      %v621 = vld [vmem:[%s166 + $0x6f8] sm:$0xf]
      %v622 = vld [vmem:[%s166 + $0x6fc] sm:$0xf]
      %v623 = vld [vmem:[%s166 + $0x700] sm:$0xf]
      %v624 = vld [vmem:[%s166 + $0x704] sm:$0xf]
      %v625 = vld [vmem:[%s166 + $0x708] sm:$0xf]
      %v626 = vld [vmem:[%s166 + $0x70c] sm:$0xf]
      %v627 = vld [vmem:[%s166 + $0x710] sm:$0xf]
      %v628 = vld [vmem:[%s166 + $0x714] sm:$0xf]
      %v629 = vld [vmem:[%s166 + $0x718] sm:$0xf]
      %v630 = vld [vmem:[%s166 + $0x71c] sm:$0xf]
      %v631 = vld [vmem:[%s166 + $0x720] sm:$0xf]
      %v632 = vld [vmem:[%s166 + $0x724] sm:$0xf]
      %v633 = vld [vmem:[%s166 + $0x728] sm:$0xf]
      %v634 = vld [vmem:[%s166 + $0x72c] sm:$0xf]
      %v635 = vld [vmem:[%s166 + $0x730] sm:$0xf]
      %v636 = vld [vmem:[%s166 + $0x734] sm:$0xf]
      %v637 = vld [vmem:[%s166 + $0x738] sm:$0xf]
      %v638 = vld [vmem:[%s166 + $0x73c] sm:$0xf]
      %v639 = vld [vmem:[%s166 + $0x740] sm:$0xf]
      %v640 = vld [vmem:[%s166 + $0x744] sm:$0xf]
      %v641 = vld [vmem:[%s166 + $0x748] sm:$0xf]
      %v642 = vld [vmem:[%s166 + $0x74c] sm:$0xf]
      %v643 = vld [vmem:[%s166 + $0x750] sm:$0xf]
      %v644 = vld [vmem:[%s166 + $0x754] sm:$0xf]
      %v645 = vld [vmem:[%s166 + $0x758] sm:$0xf]
      %v646 = vld [vmem:[%s166 + $0x75c] sm:$0xf]
      %v647 = vld [vmem:[%s166 + $0x760] sm:$0xf]
      %v648 = vld [vmem:[%s166 + $0x764] sm:$0xf]
      %v649 = vld [vmem:[%s166 + $0x768] sm:$0xf]
      %v650 = vld [vmem:[%s166 + $0x76c] sm:$0xf]
      %v651 = vld [vmem:[%s166 + $0x770] sm:$0xf]
      %v652 = vld [vmem:[%s166 + $0x774] sm:$0xf]
      %v653 = vld [vmem:[%s166 + $0x778] sm:$0xf]
      %v654 = vld [vmem:[%s166 + $0x77c] sm:$0xf]
      %v655 = vld [vmem:[%s166 + $0x780] sm:$0xf]
      %v656 = vld [vmem:[%s166 + $0x784] sm:$0xf]
      %v657 = vld [vmem:[%s166 + $0x788] sm:$0xf]
      %v658 = vld [vmem:[%s166 + $0x78c] sm:$0xf]
      %v659 = vld [vmem:[%s166 + $0x790] sm:$0xf]
      %v660 = vld [vmem:[%s166 + $0x794] sm:$0xf]
      %v661 = vld [vmem:[%s166 + $0x798] sm:$0xf]
      %v662 = vld [vmem:[%s166 + $0x79c] sm:$0xf]
      %v663 = vld [vmem:[%s166 + $0x7a0] sm:$0xf]
      %v664 = vld [vmem:[%s166 + $0x7a4] sm:$0xf]
      %v665 = vld [vmem:[%s166 + $0x7a8] sm:$0xf]
      %v666 = vld [vmem:[%s166 + $0x7ac] sm:$0xf]
      %v667 = vld [vmem:[%s166 + $0x7b0] sm:$0xf]
      %v668 = vld [vmem:[%s166 + $0x7b4] sm:$0xf]
      %v669 = vld [vmem:[%s166 + $0x7b8] sm:$0xf]
      %v670 = vld [vmem:[%s166 + $0x7bc] sm:$0xf]
      %v671 = vld [vmem:[%s166 + $0x7c0] sm:$0xf]
      %v672 = vld [vmem:[%s166 + $0x7c4] sm:$0xf]
      %v673 = vld [vmem:[%s166 + $0x7c8] sm:$0xf]
      %v674 = vld [vmem:[%s166 + $0x7cc] sm:$0xf]
      %v675 = vld [vmem:[%s166 + $0x7d0] sm:$0xf]
      %v676 = vld [vmem:[%s166 + $0x7d4] sm:$0xf]
      %v677 = vld [vmem:[%s166 + $0x7d8] sm:$0xf]
      %v678 = vld [vmem:[%s166 + $0x7dc] sm:$0xf]
      %v679 = vld [vmem:[%s166 + $0x7e0] sm:$0xf]
      %v680 = vld [vmem:[%s166 + $0x7e4] sm:$0xf]
      %v681 = vld [vmem:[%s166 + $0x7e8] sm:$0xf]
      %v682 = vld [vmem:[%s166 + $0x7ec] sm:$0xf]
      %v683 = vld [vmem:[%s166 + $0x7f0] sm:$0xf]
      %v684 = vld [vmem:[%s166 + $0x7f4] sm:$0xf]
      %v685 = vld [vmem:[%s166 + $0x7f8] sm:$0xf]
      %v686 = vld [vmem:[%s166 + $0x7fc] sm:$0xf]
      %v687 = vld [vmem:[%s1] sm:$0xf]
      %v688 = vld [vmem:[%s1 + $0x4] sm:$0xf]
      %v689 = vld [vmem:[%s1 + $0x8] sm:$0xf]
      %v690 = vld [vmem:[%s1 + $0xc] sm:$0xf]
      %v691 = vld [vmem:[%s1 + $0x10] sm:$0x3]
      %v692 = vld [vmem:[%s2] sm:$0x1]
      %v694 = vlaneseq
      %v695 = vshrl.u32 %v694, 7
      %v696 = vsub.s32 0, %v695
      %v697 = vrot.slane %v692, %v696
      %v1211 = vunpack.c.l.b16 %v175
      %v1212 = vunpack.c.l.b16 %v176
      %v1213 = vunpack.c.l.b16 %v177
      %v1214 = vunpack.c.l.b16 %v178
      %v1215 = vunpack.c.l.b16 %v179
      %v1216 = vunpack.c.l.b16 %v180
      %v1217 = vunpack.c.l.b16 %v181
      %v1218 = vunpack.c.l.b16 %v182
      %v1219 = vunpack.c.l.b16 %v183
      %v1220 = vunpack.c.l.b16 %v184
      %v1221 = vunpack.c.l.b16 %v185
      %v1222 = vunpack.c.l.b16 %v186
      %v1223 = vunpack.c.l.b16 %v187
      %v1224 = vunpack.c.l.b16 %v188
      %v1225 = vunpack.c.l.b16 %v189
      %v1226 = vunpack.c.l.b16 %v190
      %v1227 = vunpack.c.l.b16 %v191
      %v1228 = vunpack.c.l.b16 %v192
      %v1229 = vunpack.c.l.b16 %v193
      %v1230 = vunpack.c.l.b16 %v194
      %v1231 = vunpack.c.l.b16 %v195
      %v1232 = vunpack.c.l.b16 %v196
      %v1233 = vunpack.c.l.b16 %v197
      %v1234 = vunpack.c.l.b16 %v198
      %v1235 = vunpack.c.l.b16 %v199
      %v1236 = vunpack.c.l.b16 %v200
      %v1237 = vunpack.c.l.b16 %v201
      %v1238 = vunpack.c.l.b16 %v202
      %v1239 = vunpack.c.l.b16 %v203
      %v1240 = vunpack.c.l.b16 %v204
      %v1241 = vunpack.c.l.b16 %v205
      %v1242 = vunpack.c.l.b16 %v206
      %v1243 = vunpack.c.l.b16 %v207
      %v1244 = vunpack.c.l.b16 %v208
      %v1245 = vunpack.c.l.b16 %v209
      %v1246 = vunpack.c.l.b16 %v210
      %v1247 = vunpack.c.l.b16 %v211
      %v1248 = vunpack.c.l.b16 %v212
      %v1249 = vunpack.c.l.b16 %v213
      %v1250 = vunpack.c.l.b16 %v214
      %v1251 = vunpack.c.l.b16 %v215
      %v1252 = vunpack.c.l.b16 %v216
      %v1253 = vunpack.c.l.b16 %v217
      %v1254 = vunpack.c.l.b16 %v218
      %v1255 = vunpack.c.l.b16 %v219
      %v1256 = vunpack.c.l.b16 %v220
      %v1257 = vunpack.c.l.b16 %v221
      %v1258 = vunpack.c.l.b16 %v222
      %v1259 = vunpack.c.l.b16 %v223
      %v1260 = vunpack.c.l.b16 %v224
      %v1261 = vunpack.c.l.b16 %v225
      %v1262 = vunpack.c.l.b16 %v226
      %v1263 = vunpack.c.l.b16 %v227
      %v1264 = vunpack.c.l.b16 %v228
      %v1265 = vunpack.c.l.b16 %v229
      %v1266 = vunpack.c.l.b16 %v230
      %v1267 = vunpack.c.l.b16 %v231
      %v1268 = vunpack.c.l.b16 %v232
      %v1269 = vunpack.c.l.b16 %v233
      %v1270 = vunpack.c.l.b16 %v234
      %v1271 = vunpack.c.l.b16 %v235
      %v1272 = vunpack.c.l.b16 %v236
      %v1273 = vunpack.c.l.b16 %v237
      %v1274 = vunpack.c.l.b16 %v238
      %v1275 = vunpack.c.l.b16 %v239
      %v1276 = vunpack.c.l.b16 %v240
      %v1277 = vunpack.c.l.b16 %v241
      %v1278 = vunpack.c.l.b16 %v242
      %v1279 = vunpack.c.l.b16 %v243
      %v1280 = vunpack.c.l.b16 %v244
      %v1281 = vunpack.c.l.b16 %v245
      %v1282 = vunpack.c.l.b16 %v246
      %v1283 = vunpack.c.l.b16 %v247
      %v1284 = vunpack.c.l.b16 %v248
      %v1285 = vunpack.c.l.b16 %v249
      %v1286 = vunpack.c.l.b16 %v250
      %v1287 = vunpack.c.l.b16 %v251
      %v1288 = vunpack.c.l.b16 %v252
      %v1289 = vunpack.c.l.b16 %v253
      %v1290 = vunpack.c.l.b16 %v254
      %v1291 = vunpack.c.l.b16 %v255
      %v1292 = vunpack.c.l.b16 %v256
      %v1293 = vunpack.c.l.b16 %v257
      %v1294 = vunpack.c.l.b16 %v258
      %v1295 = vunpack.c.l.b16 %v259
      %v1296 = vunpack.c.l.b16 %v260
      %v1297 = vunpack.c.l.b16 %v261
      %v1298 = vunpack.c.l.b16 %v262
      %v1299 = vunpack.c.l.b16 %v263
      %v1300 = vunpack.c.l.b16 %v264
      %v1301 = vunpack.c.l.b16 %v265
      %v1302 = vunpack.c.l.b16 %v266
      %v1303 = vunpack.c.l.b16 %v267
      %v1304 = vunpack.c.l.b16 %v268
      %v1305 = vunpack.c.l.b16 %v269
      %v1306 = vunpack.c.l.b16 %v270
      %v1307 = vunpack.c.l.b16 %v271
      %v1308 = vunpack.c.l.b16 %v272
      %v1309 = vunpack.c.l.b16 %v273
      %v1310 = vunpack.c.l.b16 %v274
      %v1311 = vunpack.c.l.b16 %v275
      %v1312 = vunpack.c.l.b16 %v276
      %v1313 = vunpack.c.l.b16 %v277
      %v1314 = vunpack.c.l.b16 %v278
      %v1315 = vunpack.c.l.b16 %v279
      %v1316 = vunpack.c.l.b16 %v280
      %v1317 = vunpack.c.l.b16 %v281
      %v1318 = vunpack.c.l.b16 %v282
      %v1319 = vunpack.c.l.b16 %v283
      %v1320 = vunpack.c.l.b16 %v284
      %v1321 = vunpack.c.l.b16 %v285
      %v1322 = vunpack.c.l.b16 %v286
      %v1323 = vunpack.c.l.b16 %v287
      %v1324 = vunpack.c.l.b16 %v288
      %v1325 = vunpack.c.l.b16 %v289
      %v1326 = vunpack.c.l.b16 %v290
      %v1327 = vunpack.c.l.b16 %v291
      %v1328 = vunpack.c.l.b16 %v292
      %v1329 = vunpack.c.l.b16 %v293
      %v1330 = vunpack.c.l.b16 %v294
      %v1331 = vunpack.c.l.b16 %v295
      %v1332 = vunpack.c.l.b16 %v296
      %v1333 = vunpack.c.l.b16 %v297
      %v1334 = vunpack.c.l.b16 %v298
      %v1335 = vunpack.c.l.b16 %v299
      %v1336 = vunpack.c.l.b16 %v300
      %v1337 = vunpack.c.l.b16 %v301
      %v1338 = vunpack.c.l.b16 %v302
      %v1339 = vunpack.c.l.b16 %v303
      %v1340 = vunpack.c.l.b16 %v304
      %v1341 = vunpack.c.l.b16 %v305
      %v1342 = vunpack.c.l.b16 %v306
      %v1343 = vunpack.c.l.b16 %v307
      %v1344 = vunpack.c.l.b16 %v308
      %v1345 = vunpack.c.l.b16 %v309
      %v1346 = vunpack.c.l.b16 %v310
      %v1347 = vunpack.c.l.b16 %v311
      %v1348 = vunpack.c.l.b16 %v312
      %v1349 = vunpack.c.l.b16 %v313
      %v1350 = vunpack.c.l.b16 %v314
      %v1351 = vunpack.c.l.b16 %v315
      %v1352 = vunpack.c.l.b16 %v316
      %v1353 = vunpack.c.l.b16 %v317
      %v1354 = vunpack.c.l.b16 %v318
      %v1355 = vunpack.c.l.b16 %v319
      %v1356 = vunpack.c.l.b16 %v320
      %v1357 = vunpack.c.l.b16 %v321
      %v1358 = vunpack.c.l.b16 %v322
      %v1359 = vunpack.c.l.b16 %v323
      %v1360 = vunpack.c.l.b16 %v324
      %v1361 = vunpack.c.l.b16 %v325
      %v1362 = vunpack.c.l.b16 %v326
      %v1363 = vunpack.c.l.b16 %v327
      %v1364 = vunpack.c.l.b16 %v328
      %v1365 = vunpack.c.l.b16 %v329
      %v1366 = vunpack.c.l.b16 %v330
      %v1367 = vunpack.c.l.b16 %v331
      %v1368 = vunpack.c.l.b16 %v332
      %v1369 = vunpack.c.l.b16 %v333
      %v1370 = vunpack.c.l.b16 %v334
      %v1371 = vunpack.c.l.b16 %v335
      %v1372 = vunpack.c.l.b16 %v336
      %v1373 = vunpack.c.l.b16 %v337
      %v1374 = vunpack.c.l.b16 %v338
      %v1375 = vunpack.c.l.b16 %v339
      %v1376 = vunpack.c.l.b16 %v340
      %v1377 = vunpack.c.l.b16 %v341
      %v1378 = vunpack.c.l.b16 %v342
      %v1379 = vunpack.c.l.b16 %v343
      %v1380 = vunpack.c.l.b16 %v344
      %v1381 = vunpack.c.l.b16 %v345
      %v1382 = vunpack.c.l.b16 %v346
      %v1383 = vunpack.c.l.b16 %v347
      %v1384 = vunpack.c.l.b16 %v348
      %v1385 = vunpack.c.l.b16 %v349
      %v1386 = vunpack.c.l.b16 %v350
      %v1387 = vunpack.c.l.b16 %v351
      %v1388 = vunpack.c.l.b16 %v352
      %v1389 = vunpack.c.l.b16 %v353
      %v1390 = vunpack.c.l.b16 %v354
      %v1391 = vunpack.c.l.b16 %v355
      %v1392 = vunpack.c.l.b16 %v356
      %v1393 = vunpack.c.l.b16 %v357
      %v1394 = vunpack.c.l.b16 %v358
      %v1395 = vunpack.c.l.b16 %v359
      %v1396 = vunpack.c.l.b16 %v360
      %v1397 = vunpack.c.l.b16 %v361
      %v1398 = vunpack.c.l.b16 %v362
      %v1399 = vunpack.c.l.b16 %v363
      %v1400 = vunpack.c.l.b16 %v364
      %v1401 = vunpack.c.l.b16 %v365
      %v1402 = vunpack.c.l.b16 %v366
      %v1403 = vunpack.c.l.b16 %v367
      %v1404 = vunpack.c.l.b16 %v368
      %v1405 = vunpack.c.l.b16 %v369
      %v1406 = vunpack.c.l.b16 %v370
      %v1407 = vunpack.c.l.b16 %v371
      %v1408 = vunpack.c.l.b16 %v372
      %v1409 = vunpack.c.l.b16 %v373
      %v1410 = vunpack.c.l.b16 %v374
      %v1411 = vunpack.c.l.b16 %v375
      %v1412 = vunpack.c.l.b16 %v376
      %v1413 = vunpack.c.l.b16 %v377
      %v1414 = vunpack.c.l.b16 %v378
      %v1415 = vunpack.c.l.b16 %v379
      %v1416 = vunpack.c.l.b16 %v380
      %v1417 = vunpack.c.l.b16 %v381
      %v1418 = vunpack.c.l.b16 %v382
      %v1419 = vunpack.c.l.b16 %v383
      %v1420 = vunpack.c.l.b16 %v384
      %v1421 = vunpack.c.l.b16 %v385
      %v1422 = vunpack.c.l.b16 %v386
      %v1423 = vunpack.c.l.b16 %v387
      %v1424 = vunpack.c.l.b16 %v388
      %v1425 = vunpack.c.l.b16 %v389
      %v1426 = vunpack.c.l.b16 %v390
      %v1427 = vunpack.c.l.b16 %v391
      %v1428 = vunpack.c.l.b16 %v392
      %v1429 = vunpack.c.l.b16 %v393
      %v1430 = vunpack.c.l.b16 %v394
      %v1431 = vunpack.c.l.b16 %v395
      %v1432 = vunpack.c.l.b16 %v396
      %v1433 = vunpack.c.l.b16 %v397
      %v1434 = vunpack.c.l.b16 %v398
      %v1435 = vunpack.c.l.b16 %v399
      %v1436 = vunpack.c.l.b16 %v400
      %v1437 = vunpack.c.l.b16 %v401
      %v1438 = vunpack.c.l.b16 %v402
      %v1439 = vunpack.c.l.b16 %v403
      %v1440 = vunpack.c.l.b16 %v404
      %v1441 = vunpack.c.l.b16 %v405
      %v1442 = vunpack.c.l.b16 %v406
      %v1443 = vunpack.c.l.b16 %v407
      %v1444 = vunpack.c.l.b16 %v408
      %v1445 = vunpack.c.l.b16 %v409
      %v1446 = vunpack.c.l.b16 %v410
      %v1447 = vunpack.c.l.b16 %v411
      %v1448 = vunpack.c.l.b16 %v412
      %v1449 = vunpack.c.l.b16 %v413
      %v1450 = vunpack.c.l.b16 %v414
      %v1451 = vunpack.c.l.b16 %v415
      %v1452 = vunpack.c.l.b16 %v416
      %v1453 = vunpack.c.l.b16 %v417
      %v1454 = vunpack.c.l.b16 %v418
      %v1455 = vunpack.c.l.b16 %v419
      %v1456 = vunpack.c.l.b16 %v420
      %v1457 = vunpack.c.l.b16 %v421
      %v1458 = vunpack.c.l.b16 %v422
      %v1459 = vunpack.c.l.b16 %v423
      %v1460 = vunpack.c.l.b16 %v424
      %v1461 = vunpack.c.l.b16 %v425
      %v1462 = vunpack.c.l.b16 %v426
      %v1463 = vunpack.c.l.b16 %v427
      %v1464 = vunpack.c.l.b16 %v428
      %v1465 = vunpack.c.l.b16 %v429
      %v1466 = vunpack.c.l.b16 %v430
      %v1467 = vunpack.c.l.b16 %v431
      %v1468 = vunpack.c.l.b16 %v432
      %v1469 = vunpack.c.l.b16 %v433
      %v1470 = vunpack.c.l.b16 %v434
      %v1471 = vunpack.c.l.b16 %v435
      %v1472 = vunpack.c.l.b16 %v436
      %v1473 = vunpack.c.l.b16 %v437
      %v1474 = vunpack.c.l.b16 %v438
      %v1475 = vunpack.c.l.b16 %v439
      %v1476 = vunpack.c.l.b16 %v440
      %v1477 = vunpack.c.l.b16 %v441
      %v1478 = vunpack.c.l.b16 %v442
      %v1479 = vunpack.c.l.b16 %v443
      %v1480 = vunpack.c.l.b16 %v444
      %v1481 = vunpack.c.l.b16 %v445
      %v1482 = vunpack.c.l.b16 %v446
      %v1483 = vunpack.c.l.b16 %v447
      %v1484 = vunpack.c.l.b16 %v448
      %v1485 = vunpack.c.l.b16 %v449
      %v1486 = vunpack.c.l.b16 %v450
      %v1487 = vunpack.c.l.b16 %v451
      %v1488 = vunpack.c.l.b16 %v452
      %v1489 = vunpack.c.l.b16 %v453
      %v1490 = vunpack.c.l.b16 %v454
      %v1491 = vunpack.c.l.b16 %v455
      %v1492 = vunpack.c.l.b16 %v456
      %v1493 = vunpack.c.l.b16 %v457
      %v1494 = vunpack.c.l.b16 %v458
      %v1495 = vunpack.c.l.b16 %v459
      %v1496 = vunpack.c.l.b16 %v460
      %v1497 = vunpack.c.l.b16 %v461
      %v1498 = vunpack.c.l.b16 %v462
      %v1499 = vunpack.c.l.b16 %v463
      %v1500 = vunpack.c.l.b16 %v464
      %v1501 = vunpack.c.l.b16 %v465
      %v1502 = vunpack.c.l.b16 %v466
      %v1503 = vunpack.c.l.b16 %v467
      %v1504 = vunpack.c.l.b16 %v468
      %v1505 = vunpack.c.l.b16 %v469
      %v1506 = vunpack.c.l.b16 %v470
      %v1507 = vunpack.c.l.b16 %v471
      %v1508 = vunpack.c.l.b16 %v472
      %v1509 = vunpack.c.l.b16 %v473
      %v1510 = vunpack.c.l.b16 %v474
      %v1511 = vunpack.c.l.b16 %v475
      %v1512 = vunpack.c.l.b16 %v476
      %v1513 = vunpack.c.l.b16 %v477
      %v1514 = vunpack.c.l.b16 %v478
      %v1515 = vunpack.c.l.b16 %v479
      %v1516 = vunpack.c.l.b16 %v480
      %v1517 = vunpack.c.l.b16 %v481
      %v1518 = vunpack.c.l.b16 %v482
      %v1519 = vunpack.c.l.b16 %v483
      %v1520 = vunpack.c.l.b16 %v484
      %v1521 = vunpack.c.l.b16 %v485
      %v1522 = vunpack.c.l.b16 %v486
      %v1523 = vunpack.c.l.b16 %v487
      %v1524 = vunpack.c.l.b16 %v488
      %v1525 = vunpack.c.l.b16 %v489
      %v1526 = vunpack.c.l.b16 %v490
      %v1527 = vunpack.c.l.b16 %v491
      %v1528 = vunpack.c.l.b16 %v492
      %v1529 = vunpack.c.l.b16 %v493
      %v1530 = vunpack.c.l.b16 %v494
      %v1531 = vunpack.c.l.b16 %v495
      %v1532 = vunpack.c.l.b16 %v496
      %v1533 = vunpack.c.l.b16 %v497
      %v1534 = vunpack.c.l.b16 %v498
      %v1535 = vunpack.c.l.b16 %v499
      %v1536 = vunpack.c.l.b16 %v500
      %v1537 = vunpack.c.l.b16 %v501
      %v1538 = vunpack.c.l.b16 %v502
      %v1539 = vunpack.c.l.b16 %v503
      %v1540 = vunpack.c.l.b16 %v504
      %v1541 = vunpack.c.l.b16 %v505
      %v1542 = vunpack.c.l.b16 %v506
      %v1543 = vunpack.c.l.b16 %v507
      %v1544 = vunpack.c.l.b16 %v508
      %v1545 = vunpack.c.l.b16 %v509
      %v1546 = vunpack.c.l.b16 %v510
      %v1547 = vunpack.c.l.b16 %v511
      %v1548 = vunpack.c.l.b16 %v512
      %v1549 = vunpack.c.l.b16 %v513
      %v1550 = vunpack.c.l.b16 %v514
      %v1551 = vunpack.c.l.b16 %v515
      %v1552 = vunpack.c.l.b16 %v516
      %v1553 = vunpack.c.l.b16 %v517
      %v1554 = vunpack.c.l.b16 %v518
      %v1555 = vunpack.c.l.b16 %v519
      %v1556 = vunpack.c.l.b16 %v520
      %v1557 = vunpack.c.l.b16 %v521
      %v1558 = vunpack.c.l.b16 %v522
      %v1559 = vunpack.c.l.b16 %v523
      %v1560 = vunpack.c.l.b16 %v524
      %v1561 = vunpack.c.l.b16 %v525
      %v1562 = vunpack.c.l.b16 %v526
      %v1563 = vunpack.c.l.b16 %v527
      %v1564 = vunpack.c.l.b16 %v528
      %v1565 = vunpack.c.l.b16 %v529
      %v1566 = vunpack.c.l.b16 %v530
      %v1567 = vunpack.c.l.b16 %v531
      %v1568 = vunpack.c.l.b16 %v532
      %v1569 = vunpack.c.l.b16 %v533
      %v1570 = vunpack.c.l.b16 %v534
      %v1571 = vunpack.c.l.b16 %v535
      %v1572 = vunpack.c.l.b16 %v536
      %v1573 = vunpack.c.l.b16 %v537
      %v1574 = vunpack.c.l.b16 %v538
      %v1575 = vunpack.c.l.b16 %v539
      %v1576 = vunpack.c.l.b16 %v540
      %v1577 = vunpack.c.l.b16 %v541
      %v1578 = vunpack.c.l.b16 %v542
      %v1579 = vunpack.c.l.b16 %v543
      %v1580 = vunpack.c.l.b16 %v544
      %v1581 = vunpack.c.l.b16 %v545
      %v1582 = vunpack.c.l.b16 %v546
      %v1583 = vunpack.c.l.b16 %v547
      %v1584 = vunpack.c.l.b16 %v548
      %v1585 = vunpack.c.l.b16 %v549
      %v1586 = vunpack.c.l.b16 %v550
      %v1587 = vunpack.c.l.b16 %v551
      %v1588 = vunpack.c.l.b16 %v552
      %v1589 = vunpack.c.l.b16 %v553
      %v1590 = vunpack.c.l.b16 %v554
      %v1591 = vunpack.c.l.b16 %v555
      %v1592 = vunpack.c.l.b16 %v556
      %v1593 = vunpack.c.l.b16 %v557
      %v1594 = vunpack.c.l.b16 %v558
      %v1595 = vunpack.c.l.b16 %v559
      %v1596 = vunpack.c.l.b16 %v560
      %v1597 = vunpack.c.l.b16 %v561
      %v1598 = vunpack.c.l.b16 %v562
      %v1599 = vunpack.c.l.b16 %v563
      %v1600 = vunpack.c.l.b16 %v564
      %v1601 = vunpack.c.l.b16 %v565
      %v1602 = vunpack.c.l.b16 %v566
      %v1603 = vunpack.c.l.b16 %v567
      %v1604 = vunpack.c.l.b16 %v568
      %v1605 = vunpack.c.l.b16 %v569
      %v1606 = vunpack.c.l.b16 %v570
      %v1607 = vunpack.c.l.b16 %v571
      %v1608 = vunpack.c.l.b16 %v572
      %v1609 = vunpack.c.l.b16 %v573
      %v1610 = vunpack.c.l.b16 %v574
      %v1611 = vunpack.c.l.b16 %v575
      %v1612 = vunpack.c.l.b16 %v576
      %v1613 = vunpack.c.l.b16 %v577
      %v1614 = vunpack.c.l.b16 %v578
      %v1615 = vunpack.c.l.b16 %v579
      %v1616 = vunpack.c.l.b16 %v580
      %v1617 = vunpack.c.l.b16 %v581
      %v1618 = vunpack.c.l.b16 %v582
      %v1619 = vunpack.c.l.b16 %v583
      %v1620 = vunpack.c.l.b16 %v584
      %v1621 = vunpack.c.l.b16 %v585
      %v1622 = vunpack.c.l.b16 %v586
      %v1623 = vunpack.c.l.b16 %v587
      %v1624 = vunpack.c.l.b16 %v588
      %v1625 = vunpack.c.l.b16 %v589
      %v1626 = vunpack.c.l.b16 %v590
      %v1627 = vunpack.c.l.b16 %v591
      %v1628 = vunpack.c.l.b16 %v592
      %v1629 = vunpack.c.l.b16 %v593
      %v1630 = vunpack.c.l.b16 %v594
      %v1631 = vunpack.c.l.b16 %v595
      %v1632 = vunpack.c.l.b16 %v596
      %v1633 = vunpack.c.l.b16 %v597
      %v1634 = vunpack.c.l.b16 %v598
      %v1635 = vunpack.c.l.b16 %v599
      %v1636 = vunpack.c.l.b16 %v600
      %v1637 = vunpack.c.l.b16 %v601
      %v1638 = vunpack.c.l.b16 %v602
      %v1639 = vunpack.c.l.b16 %v603
      %v1640 = vunpack.c.l.b16 %v604
      %v1641 = vunpack.c.l.b16 %v605
      %v1642 = vunpack.c.l.b16 %v606
      %v1643 = vunpack.c.l.b16 %v607
      %v1644 = vunpack.c.l.b16 %v608
      %v1645 = vunpack.c.l.b16 %v609
      %v1646 = vunpack.c.l.b16 %v610
      %v1647 = vunpack.c.l.b16 %v611
      %v1648 = vunpack.c.l.b16 %v612
      %v1649 = vunpack.c.l.b16 %v613
      %v1650 = vunpack.c.l.b16 %v614
      %v1651 = vunpack.c.l.b16 %v615
      %v1652 = vunpack.c.l.b16 %v616
      %v1653 = vunpack.c.l.b16 %v617
      %v1654 = vunpack.c.l.b16 %v618
      %v1655 = vunpack.c.l.b16 %v619
      %v1656 = vunpack.c.l.b16 %v620
      %v1657 = vunpack.c.l.b16 %v621
      %v1658 = vunpack.c.l.b16 %v622
      %v1659 = vunpack.c.l.b16 %v623
      %v1660 = vunpack.c.l.b16 %v624
      %v1661 = vunpack.c.l.b16 %v625
      %v1662 = vunpack.c.l.b16 %v626
      %v1663 = vunpack.c.l.b16 %v627
      %v1664 = vunpack.c.l.b16 %v628
      %v1665 = vunpack.c.l.b16 %v629
      %v1666 = vunpack.c.l.b16 %v630
      %v1667 = vunpack.c.l.b16 %v631
      %v1668 = vunpack.c.l.b16 %v632
      %v1669 = vunpack.c.l.b16 %v633
      %v1670 = vunpack.c.l.b16 %v634
      %v1671 = vunpack.c.l.b16 %v635
      %v1672 = vunpack.c.l.b16 %v636
      %v1673 = vunpack.c.l.b16 %v637
      %v1674 = vunpack.c.l.b16 %v638
      %v1675 = vunpack.c.l.b16 %v639
      %v1676 = vunpack.c.l.b16 %v640
      %v1677 = vunpack.c.l.b16 %v641
      %v1678 = vunpack.c.l.b16 %v642
      %v1679 = vunpack.c.l.b16 %v643
      %v1680 = vunpack.c.l.b16 %v644
      %v1681 = vunpack.c.l.b16 %v645
      %v1682 = vunpack.c.l.b16 %v646
      %v1683 = vunpack.c.l.b16 %v647
      %v1684 = vunpack.c.l.b16 %v648
      %v1685 = vunpack.c.l.b16 %v649
      %v1686 = vunpack.c.l.b16 %v650
      %v1687 = vunpack.c.l.b16 %v651
      %v1688 = vunpack.c.l.b16 %v652
      %v1689 = vunpack.c.l.b16 %v653
      %v1690 = vunpack.c.l.b16 %v654
      %v1691 = vunpack.c.l.b16 %v655
      %v1692 = vunpack.c.l.b16 %v656
      %v1693 = vunpack.c.l.b16 %v657
      %v1694 = vunpack.c.l.b16 %v658
      %v1695 = vunpack.c.l.b16 %v659
      %v1696 = vunpack.c.l.b16 %v660
      %v1697 = vunpack.c.l.b16 %v661
      %v1698 = vunpack.c.l.b16 %v662
      %v1699 = vunpack.c.l.b16 %v663
      %v1700 = vunpack.c.l.b16 %v664
      %v1701 = vunpack.c.l.b16 %v665
      %v1702 = vunpack.c.l.b16 %v666
      %v1703 = vunpack.c.l.b16 %v667
      %v1704 = vunpack.c.l.b16 %v668
      %v1705 = vunpack.c.l.b16 %v669
      %v1706 = vunpack.c.l.b16 %v670
      %v1707 = vunpack.c.l.b16 %v671
      %v1708 = vunpack.c.l.b16 %v672
      %v1709 = vunpack.c.l.b16 %v673
      %v1710 = vunpack.c.l.b16 %v674
      %v1711 = vunpack.c.l.b16 %v675
      %v1712 = vunpack.c.l.b16 %v676
      %v1713 = vunpack.c.l.b16 %v677
      %v1714 = vunpack.c.l.b16 %v678
      %v1715 = vunpack.c.l.b16 %v679
      %v1716 = vunpack.c.l.b16 %v680
      %v1717 = vunpack.c.l.b16 %v681
      %v1718 = vunpack.c.l.b16 %v682
      %v1719 = vunpack.c.l.b16 %v683
      %v1720 = vunpack.c.l.b16 %v684
      %v1721 = vunpack.c.l.b16 %v685
      %v1722 = vunpack.c.l.b16 %v686
      %v1723 = vpack.c.b16 %v1212, %v1211
      %v1724 = vpack.c.b16 %v1214, %v1213
      %v1725 = vpack.c.b16 %v1216, %v1215
      %v1726 = vpack.c.b16 %v1218, %v1217
      %v1727 = vpack.c.b16 %v1220, %v1219
      %v1728 = vpack.c.b16 %v1222, %v1221
      %v1729 = vpack.c.b16 %v1224, %v1223
      %v1730 = vpack.c.b16 %v1226, %v1225
      %v1731 = vpack.c.b16 %v1228, %v1227
      %v1732 = vpack.c.b16 %v1230, %v1229
      %v1733 = vpack.c.b16 %v1232, %v1231
      %v1734 = vpack.c.b16 %v1234, %v1233
      %v1735 = vpack.c.b16 %v1236, %v1235
      %v1736 = vpack.c.b16 %v1238, %v1237
      %v1737 = vpack.c.b16 %v1240, %v1239
      %v1738 = vpack.c.b16 %v1242, %v1241
      %v1739 = vpack.c.b16 %v1244, %v1243
      %v1740 = vpack.c.b16 %v1246, %v1245
      %v1741 = vpack.c.b16 %v1248, %v1247
      %v1742 = vpack.c.b16 %v1250, %v1249
      %v1743 = vpack.c.b16 %v1252, %v1251
      %v1744 = vpack.c.b16 %v1254, %v1253
      %v1745 = vpack.c.b16 %v1256, %v1255
      %v1746 = vpack.c.b16 %v1258, %v1257
      %v1747 = vpack.c.b16 %v1260, %v1259
      %v1748 = vpack.c.b16 %v1262, %v1261
      %v1749 = vpack.c.b16 %v1264, %v1263
      %v1750 = vpack.c.b16 %v1266, %v1265
      %v1751 = vpack.c.b16 %v1268, %v1267
      %v1752 = vpack.c.b16 %v1270, %v1269
      %v1753 = vpack.c.b16 %v1272, %v1271
      %v1754 = vpack.c.b16 %v1274, %v1273
      %v1755 = vpack.c.b16 %v1276, %v1275
      %v1756 = vpack.c.b16 %v1278, %v1277
      %v1757 = vpack.c.b16 %v1280, %v1279
      %v1758 = vpack.c.b16 %v1282, %v1281
      %v1759 = vpack.c.b16 %v1284, %v1283
      %v1760 = vpack.c.b16 %v1286, %v1285
      %v1761 = vpack.c.b16 %v1288, %v1287
      %v1762 = vpack.c.b16 %v1290, %v1289
      %v1763 = vpack.c.b16 %v1292, %v1291
      %v1764 = vpack.c.b16 %v1294, %v1293
      %v1765 = vpack.c.b16 %v1296, %v1295
      %v1766 = vpack.c.b16 %v1298, %v1297
      %v1767 = vpack.c.b16 %v1300, %v1299
      %v1768 = vpack.c.b16 %v1302, %v1301
      %v1769 = vpack.c.b16 %v1304, %v1303
      %v1770 = vpack.c.b16 %v1306, %v1305
      %v1771 = vpack.c.b16 %v1308, %v1307
      %v1772 = vpack.c.b16 %v1310, %v1309
      %v1773 = vpack.c.b16 %v1312, %v1311
      %v1774 = vpack.c.b16 %v1314, %v1313
      %v1775 = vpack.c.b16 %v1316, %v1315
      %v1776 = vpack.c.b16 %v1318, %v1317
      %v1777 = vpack.c.b16 %v1320, %v1319
      %v1778 = vpack.c.b16 %v1322, %v1321
      %v1779 = vpack.c.b16 %v1324, %v1323
      %v1780 = vpack.c.b16 %v1326, %v1325
      %v1781 = vpack.c.b16 %v1328, %v1327
      %v1782 = vpack.c.b16 %v1330, %v1329
      %v1783 = vpack.c.b16 %v1332, %v1331
      %v1784 = vpack.c.b16 %v1334, %v1333
      %v1785 = vpack.c.b16 %v1336, %v1335
      %v1786 = vpack.c.b16 %v1338, %v1337
      %v1787 = vpack.c.b16 %v1340, %v1339
      %v1788 = vpack.c.b16 %v1342, %v1341
      %v1789 = vpack.c.b16 %v1344, %v1343
      %v1790 = vpack.c.b16 %v1346, %v1345
      %v1791 = vpack.c.b16 %v1348, %v1347
      %v1792 = vpack.c.b16 %v1350, %v1349
      %v1793 = vpack.c.b16 %v1352, %v1351
      %v1794 = vpack.c.b16 %v1354, %v1353
      %v1795 = vpack.c.b16 %v1356, %v1355
      %v1796 = vpack.c.b16 %v1358, %v1357
      %v1797 = vpack.c.b16 %v1360, %v1359
      %v1798 = vpack.c.b16 %v1362, %v1361
      %v1799 = vpack.c.b16 %v1364, %v1363
      %v1800 = vpack.c.b16 %v1366, %v1365
      %v1801 = vpack.c.b16 %v1368, %v1367
      %v1802 = vpack.c.b16 %v1370, %v1369
      %v1803 = vpack.c.b16 %v1372, %v1371
      %v1804 = vpack.c.b16 %v1374, %v1373
      %v1805 = vpack.c.b16 %v1376, %v1375
      %v1806 = vpack.c.b16 %v1378, %v1377
      %v1807 = vpack.c.b16 %v1380, %v1379
      %v1808 = vpack.c.b16 %v1382, %v1381
      %v1809 = vpack.c.b16 %v1384, %v1383
      %v1810 = vpack.c.b16 %v1386, %v1385
      %v1811 = vpack.c.b16 %v1388, %v1387
      %v1812 = vpack.c.b16 %v1390, %v1389
      %v1813 = vpack.c.b16 %v1392, %v1391
      %v1814 = vpack.c.b16 %v1394, %v1393
      %v1815 = vpack.c.b16 %v1396, %v1395
      %v1816 = vpack.c.b16 %v1398, %v1397
      %v1817 = vpack.c.b16 %v1400, %v1399
      %v1818 = vpack.c.b16 %v1402, %v1401
      %v1819 = vpack.c.b16 %v1404, %v1403
      %v1820 = vpack.c.b16 %v1406, %v1405
      %v1821 = vpack.c.b16 %v1408, %v1407
      %v1822 = vpack.c.b16 %v1410, %v1409
      %v1823 = vpack.c.b16 %v1412, %v1411
      %v1824 = vpack.c.b16 %v1414, %v1413
      %v1825 = vpack.c.b16 %v1416, %v1415
      %v1826 = vpack.c.b16 %v1418, %v1417
      %v1827 = vpack.c.b16 %v1420, %v1419
      %v1828 = vpack.c.b16 %v1422, %v1421
      %v1829 = vpack.c.b16 %v1424, %v1423
      %v1830 = vpack.c.b16 %v1426, %v1425
      %v1831 = vpack.c.b16 %v1428, %v1427
      %v1832 = vpack.c.b16 %v1430, %v1429
      %v1833 = vpack.c.b16 %v1432, %v1431
      %v1834 = vpack.c.b16 %v1434, %v1433
      %v1835 = vpack.c.b16 %v1436, %v1435
      %v1836 = vpack.c.b16 %v1438, %v1437
      %v1837 = vpack.c.b16 %v1440, %v1439
      %v1838 = vpack.c.b16 %v1442, %v1441
      %v1839 = vpack.c.b16 %v1444, %v1443
      %v1840 = vpack.c.b16 %v1446, %v1445
      %v1841 = vpack.c.b16 %v1448, %v1447
      %v1842 = vpack.c.b16 %v1450, %v1449
      %v1843 = vpack.c.b16 %v1452, %v1451
      %v1844 = vpack.c.b16 %v1454, %v1453
      %v1845 = vpack.c.b16 %v1456, %v1455
      %v1846 = vpack.c.b16 %v1458, %v1457
      %v1847 = vpack.c.b16 %v1460, %v1459
      %v1848 = vpack.c.b16 %v1462, %v1461
      %v1849 = vpack.c.b16 %v1464, %v1463
      %v1850 = vpack.c.b16 %v1466, %v1465
      %v1851 = vpack.c.b16 %v1468, %v1467
      %v1852 = vpack.c.b16 %v1470, %v1469
      %v1853 = vpack.c.b16 %v1472, %v1471
      %v1854 = vpack.c.b16 %v1474, %v1473
      %v1855 = vpack.c.b16 %v1476, %v1475
      %v1856 = vpack.c.b16 %v1478, %v1477
      %v1857 = vpack.c.b16 %v1480, %v1479
      %v1858 = vpack.c.b16 %v1482, %v1481
      %v1859 = vpack.c.b16 %v1484, %v1483
      %v1860 = vpack.c.b16 %v1486, %v1485
      %v1861 = vpack.c.b16 %v1488, %v1487
      %v1862 = vpack.c.b16 %v1490, %v1489
      %v1863 = vpack.c.b16 %v1492, %v1491
      %v1864 = vpack.c.b16 %v1494, %v1493
      %v1865 = vpack.c.b16 %v1496, %v1495
      %v1866 = vpack.c.b16 %v1498, %v1497
      %v1867 = vpack.c.b16 %v1500, %v1499
      %v1868 = vpack.c.b16 %v1502, %v1501
      %v1869 = vpack.c.b16 %v1504, %v1503
      %v1870 = vpack.c.b16 %v1506, %v1505
      %v1871 = vpack.c.b16 %v1508, %v1507
      %v1872 = vpack.c.b16 %v1510, %v1509
      %v1873 = vpack.c.b16 %v1512, %v1511
      %v1874 = vpack.c.b16 %v1514, %v1513
      %v1875 = vpack.c.b16 %v1516, %v1515
      %v1876 = vpack.c.b16 %v1518, %v1517
      %v1877 = vpack.c.b16 %v1520, %v1519
      %v1878 = vpack.c.b16 %v1522, %v1521
      %v1879 = vpack.c.b16 %v1524, %v1523
      %v1880 = vpack.c.b16 %v1526, %v1525
      %v1881 = vpack.c.b16 %v1528, %v1527
      %v1882 = vpack.c.b16 %v1530, %v1529
      %v1883 = vpack.c.b16 %v1532, %v1531
      %v1884 = vpack.c.b16 %v1534, %v1533
      %v1885 = vpack.c.b16 %v1536, %v1535
      %v1886 = vpack.c.b16 %v1538, %v1537
      %v1887 = vpack.c.b16 %v1540, %v1539
      %v1888 = vpack.c.b16 %v1542, %v1541
      %v1889 = vpack.c.b16 %v1544, %v1543
      %v1890 = vpack.c.b16 %v1546, %v1545
      %v1891 = vpack.c.b16 %v1548, %v1547
      %v1892 = vpack.c.b16 %v1550, %v1549
      %v1893 = vpack.c.b16 %v1552, %v1551
      %v1894 = vpack.c.b16 %v1554, %v1553
      %v1895 = vpack.c.b16 %v1556, %v1555
      %v1896 = vpack.c.b16 %v1558, %v1557
      %v1897 = vpack.c.b16 %v1560, %v1559
      %v1898 = vpack.c.b16 %v1562, %v1561
      %v1899 = vpack.c.b16 %v1564, %v1563
      %v1900 = vpack.c.b16 %v1566, %v1565
      %v1901 = vpack.c.b16 %v1568, %v1567
      %v1902 = vpack.c.b16 %v1570, %v1569
      %v1903 = vpack.c.b16 %v1572, %v1571
      %v1904 = vpack.c.b16 %v1574, %v1573
      %v1905 = vpack.c.b16 %v1576, %v1575
      %v1906 = vpack.c.b16 %v1578, %v1577
      %v1907 = vpack.c.b16 %v1580, %v1579
      %v1908 = vpack.c.b16 %v1582, %v1581
      %v1909 = vpack.c.b16 %v1584, %v1583
      %v1910 = vpack.c.b16 %v1586, %v1585
      %v1911 = vpack.c.b16 %v1588, %v1587
      %v1912 = vpack.c.b16 %v1590, %v1589
      %v1913 = vpack.c.b16 %v1592, %v1591
      %v1914 = vpack.c.b16 %v1594, %v1593
      %v1915 = vpack.c.b16 %v1596, %v1595
      %v1916 = vpack.c.b16 %v1598, %v1597
      %v1917 = vpack.c.b16 %v1600, %v1599
      %v1918 = vpack.c.b16 %v1602, %v1601
      %v1919 = vpack.c.b16 %v1604, %v1603
      %v1920 = vpack.c.b16 %v1606, %v1605
      %v1921 = vpack.c.b16 %v1608, %v1607
      %v1922 = vpack.c.b16 %v1610, %v1609
      %v1923 = vpack.c.b16 %v1612, %v1611
      %v1924 = vpack.c.b16 %v1614, %v1613
      %v1925 = vpack.c.b16 %v1616, %v1615
      %v1926 = vpack.c.b16 %v1618, %v1617
      %v1927 = vpack.c.b16 %v1620, %v1619
      %v1928 = vpack.c.b16 %v1622, %v1621
      %v1929 = vpack.c.b16 %v1624, %v1623
      %v1930 = vpack.c.b16 %v1626, %v1625
      %v1931 = vpack.c.b16 %v1628, %v1627
      %v1932 = vpack.c.b16 %v1630, %v1629
      %v1933 = vpack.c.b16 %v1632, %v1631
      %v1934 = vpack.c.b16 %v1634, %v1633
      %v1935 = vpack.c.b16 %v1636, %v1635
      %v1936 = vpack.c.b16 %v1638, %v1637
      %v1937 = vpack.c.b16 %v1640, %v1639
      %v1938 = vpack.c.b16 %v1642, %v1641
      %v1939 = vpack.c.b16 %v1644, %v1643
      %v1940 = vpack.c.b16 %v1646, %v1645
      %v1941 = vpack.c.b16 %v1648, %v1647
      %v1942 = vpack.c.b16 %v1650, %v1649
      %v1943 = vpack.c.b16 %v1652, %v1651
      %v1944 = vpack.c.b16 %v1654, %v1653
      %v1945 = vpack.c.b16 %v1656, %v1655
      %v1946 = vpack.c.b16 %v1658, %v1657
      %v1947 = vpack.c.b16 %v1660, %v1659
      %v1948 = vpack.c.b16 %v1662, %v1661
      %v1949 = vpack.c.b16 %v1664, %v1663
      %v1950 = vpack.c.b16 %v1666, %v1665
      %v1951 = vpack.c.b16 %v1668, %v1667
      %v1952 = vpack.c.b16 %v1670, %v1669
      %v1953 = vpack.c.b16 %v1672, %v1671
      %v1954 = vpack.c.b16 %v1674, %v1673
      %v1955 = vpack.c.b16 %v1676, %v1675
      %v1956 = vpack.c.b16 %v1678, %v1677
      %v1957 = vpack.c.b16 %v1680, %v1679
      %v1958 = vpack.c.b16 %v1682, %v1681
      %v1959 = vpack.c.b16 %v1684, %v1683
      %v1960 = vpack.c.b16 %v1686, %v1685
      %v1961 = vpack.c.b16 %v1688, %v1687
      %v1962 = vpack.c.b16 %v1690, %v1689
      %v1963 = vpack.c.b16 %v1692, %v1691
      %v1964 = vpack.c.b16 %v1694, %v1693
      %v1965 = vpack.c.b16 %v1696, %v1695
      %v1966 = vpack.c.b16 %v1698, %v1697
      %v1967 = vpack.c.b16 %v1700, %v1699
      %v1968 = vpack.c.b16 %v1702, %v1701
      %v1969 = vpack.c.b16 %v1704, %v1703
      %v1970 = vpack.c.b16 %v1706, %v1705
      %v1971 = vpack.c.b16 %v1708, %v1707
      %v1972 = vpack.c.b16 %v1710, %v1709
      %v1973 = vpack.c.b16 %v1712, %v1711
      %v1974 = vpack.c.b16 %v1714, %v1713
      %v1975 = vpack.c.b16 %v1716, %v1715
      %v1976 = vpack.c.b16 %v1718, %v1717
      %v1977 = vpack.c.b16 %v1720, %v1719
      %v1978 = vpack.c.b16 %v1722, %v1721
      %v1984 = vunpack.c.l.b16 %v687
      %v1985 = vunpack.c.l.b16 %v688
      %v1986 = vunpack.c.l.b16 %v689
      %v1987 = vunpack.c.l.b16 %v690
      %v1988 = vunpack.c.l.b16 %v691
      %v1989 = vpack.c.b16 %v1985, %v1984
      %v1990 = vpack.c.b16 %v1987, %v1986
      %v1991 = vpack.c.b16 %v1988, %v1988
      %vm1994 = vcmask 293888
      %v1996 = vsel %vm1994, %v1723, 0
      %v1999 = vsel %vm1994, %v1724, 0
      %v2002 = vsel %vm1994, %v1725, 0
      %v2005 = vsel %vm1994, %v1726, 0
      %v2008 = vsel %vm1994, %v1727, 0
      %v2011 = vsel %vm1994, %v1728, 0
      %v2014 = vsel %vm1994, %v1729, 0
      %v2017 = vsel %vm1994, %v1730, 0
      %v2020 = vsel %vm1994, %v1731, 0
      %v2023 = vsel %vm1994, %v1732, 0
      %v2026 = vsel %vm1994, %v1733, 0
      %v2029 = vsel %vm1994, %v1734, 0
      %v2032 = vsel %vm1994, %v1735, 0
      %v2035 = vsel %vm1994, %v1736, 0
      %v2038 = vsel %vm1994, %v1737, 0
      %v2041 = vsel %vm1994, %v1738, 0
      %v2044 = vsel %vm1994, %v1739, 0
      %v2047 = vsel %vm1994, %v1740, 0
      %v2050 = vsel %vm1994, %v1741, 0
      %v2053 = vsel %vm1994, %v1742, 0
      %v2056 = vsel %vm1994, %v1743, 0
      %v2059 = vsel %vm1994, %v1744, 0
      %v2062 = vsel %vm1994, %v1745, 0
      %v2065 = vsel %vm1994, %v1746, 0
      %v2068 = vsel %vm1994, %v1747, 0
      %v2071 = vsel %vm1994, %v1748, 0
      %v2074 = vsel %vm1994, %v1749, 0
      %v2077 = vsel %vm1994, %v1750, 0
      %v2080 = vsel %vm1994, %v1751, 0
      %v2083 = vsel %vm1994, %v1752, 0
      %v2086 = vsel %vm1994, %v1753, 0
      %v2089 = vsel %vm1994, %v1754, 0
      %v2092 = vsel %vm1994, %v1755, 0
      %v2095 = vsel %vm1994, %v1756, 0
      %v2098 = vsel %vm1994, %v1757, 0
      %v2101 = vsel %vm1994, %v1758, 0
      %v2104 = vsel %vm1994, %v1759, 0
      %v2107 = vsel %vm1994, %v1760, 0
      %v2110 = vsel %vm1994, %v1761, 0
      %v2113 = vsel %vm1994, %v1762, 0
      %v2116 = vsel %vm1994, %v1763, 0
      %v2119 = vsel %vm1994, %v1764, 0
      %v2122 = vsel %vm1994, %v1765, 0
      %v2125 = vsel %vm1994, %v1766, 0
      %v2128 = vsel %vm1994, %v1767, 0
      %v2131 = vsel %vm1994, %v1768, 0
      %v2134 = vsel %vm1994, %v1769, 0
      %v2137 = vsel %vm1994, %v1770, 0
      %v2140 = vsel %vm1994, %v1771, 0
      %v2143 = vsel %vm1994, %v1772, 0
      %v2146 = vsel %vm1994, %v1773, 0
      %v2149 = vsel %vm1994, %v1774, 0
      %v2152 = vsel %vm1994, %v1775, 0
      %v2155 = vsel %vm1994, %v1776, 0
      %v2158 = vsel %vm1994, %v1777, 0
      %v2161 = vsel %vm1994, %v1778, 0
      %v2164 = vsel %vm1994, %v1779, 0
      %v2167 = vsel %vm1994, %v1780, 0
      %v2170 = vsel %vm1994, %v1781, 0
      %v2173 = vsel %vm1994, %v1782, 0
      %v2176 = vsel %vm1994, %v1783, 0
      %v2179 = vsel %vm1994, %v1784, 0
      %v2182 = vsel %vm1994, %v1785, 0
      %v2185 = vsel %vm1994, %v1786, 0
      %v2188 = vsel %vm1994, %v1787, 0
      %v2191 = vsel %vm1994, %v1788, 0
      %v2194 = vsel %vm1994, %v1789, 0
      %v2197 = vsel %vm1994, %v1790, 0
      %v2200 = vsel %vm1994, %v1791, 0
      %v2203 = vsel %vm1994, %v1792, 0
      %v2206 = vsel %vm1994, %v1793, 0
      %v2209 = vsel %vm1994, %v1794, 0
      %v2212 = vsel %vm1994, %v1795, 0
      %v2215 = vsel %vm1994, %v1796, 0
      %v2218 = vsel %vm1994, %v1797, 0
      %v2221 = vsel %vm1994, %v1798, 0
      %v2224 = vsel %vm1994, %v1799, 0
      %v2227 = vsel %vm1994, %v1800, 0
      %v2230 = vsel %vm1994, %v1801, 0
      %v2233 = vsel %vm1994, %v1802, 0
      %v2236 = vsel %vm1994, %v1803, 0
      %v2239 = vsel %vm1994, %v1804, 0
      %v2242 = vsel %vm1994, %v1805, 0
      %v2245 = vsel %vm1994, %v1806, 0
      %v2248 = vsel %vm1994, %v1807, 0
      %v2251 = vsel %vm1994, %v1808, 0
      %v2254 = vsel %vm1994, %v1809, 0
      %v2257 = vsel %vm1994, %v1810, 0
      %v2260 = vsel %vm1994, %v1811, 0
      %v2263 = vsel %vm1994, %v1812, 0
      %v2266 = vsel %vm1994, %v1813, 0
      %v2269 = vsel %vm1994, %v1814, 0
      %v2272 = vsel %vm1994, %v1815, 0
      %v2275 = vsel %vm1994, %v1816, 0
      %v2278 = vsel %vm1994, %v1817, 0
      %v2281 = vsel %vm1994, %v1818, 0
      %v2284 = vsel %vm1994, %v1819, 0
      %v2287 = vsel %vm1994, %v1820, 0
      %v2290 = vsel %vm1994, %v1821, 0
      %v2293 = vsel %vm1994, %v1822, 0
      %v2296 = vsel %vm1994, %v1823, 0
      %v2299 = vsel %vm1994, %v1824, 0
      %v2302 = vsel %vm1994, %v1825, 0
      %v2305 = vsel %vm1994, %v1826, 0
      %v2308 = vsel %vm1994, %v1827, 0
      %v2311 = vsel %vm1994, %v1828, 0
      %v2314 = vsel %vm1994, %v1829, 0
      %v2317 = vsel %vm1994, %v1830, 0
      %v2320 = vsel %vm1994, %v1831, 0
      %v2323 = vsel %vm1994, %v1832, 0
      %v2326 = vsel %vm1994, %v1833, 0
      %v2329 = vsel %vm1994, %v1834, 0
      %v2332 = vsel %vm1994, %v1835, 0
      %v2335 = vsel %vm1994, %v1836, 0
      %v2338 = vsel %vm1994, %v1837, 0
      %v2341 = vsel %vm1994, %v1838, 0
      %v2344 = vsel %vm1994, %v1839, 0
      %v2347 = vsel %vm1994, %v1840, 0
      %v2350 = vsel %vm1994, %v1841, 0
      %v2353 = vsel %vm1994, %v1842, 0
      %v2356 = vsel %vm1994, %v1843, 0
      %v2359 = vsel %vm1994, %v1844, 0
      %v2362 = vsel %vm1994, %v1845, 0
      %v2365 = vsel %vm1994, %v1846, 0
      %v2368 = vsel %vm1994, %v1847, 0
      %v2371 = vsel %vm1994, %v1848, 0
      %v2374 = vsel %vm1994, %v1849, 0
      %v2377 = vsel %vm1994, %v1850, 0
      %v2380 = vsel %vm1994, %v1851, 0
      %v2383 = vsel %vm1994, %v1852, 0
      %v2386 = vsel %vm1994, %v1853, 0
      %v2389 = vsel %vm1994, %v1854, 0
      %v2392 = vsel %vm1994, %v1855, 0
      %v2395 = vsel %vm1994, %v1856, 0
      %v2398 = vsel %vm1994, %v1857, 0
      %v2401 = vsel %vm1994, %v1858, 0
      %v2404 = vsel %vm1994, %v1859, 0
      %v2407 = vsel %vm1994, %v1860, 0
      %v2410 = vsel %vm1994, %v1861, 0
      %v2413 = vsel %vm1994, %v1862, 0
      %v2416 = vsel %vm1994, %v1863, 0
      %v2419 = vsel %vm1994, %v1864, 0
      %v2422 = vsel %vm1994, %v1865, 0
      %v2425 = vsel %vm1994, %v1866, 0
      %v2428 = vsel %vm1994, %v1867, 0
      %v2431 = vsel %vm1994, %v1868, 0
      %v2434 = vsel %vm1994, %v1869, 0
      %v2437 = vsel %vm1994, %v1870, 0
      %v2440 = vsel %vm1994, %v1871, 0
      %v2443 = vsel %vm1994, %v1872, 0
      %v2446 = vsel %vm1994, %v1873, 0
      %v2449 = vsel %vm1994, %v1874, 0
      %v2452 = vsel %vm1994, %v1875, 0
      %v2455 = vsel %vm1994, %v1876, 0
      %v2458 = vsel %vm1994, %v1877, 0
      %v2461 = vsel %vm1994, %v1878, 0
      %v2464 = vsel %vm1994, %v1879, 0
      %v2467 = vsel %vm1994, %v1880, 0
      %v2470 = vsel %vm1994, %v1881, 0
      %v2473 = vsel %vm1994, %v1882, 0
      %v2476 = vsel %vm1994, %v1883, 0
      %v2479 = vsel %vm1994, %v1884, 0
      %v2482 = vsel %vm1994, %v1885, 0
      %v2485 = vsel %vm1994, %v1886, 0
      %v2488 = vsel %vm1994, %v1887, 0
      %v2491 = vsel %vm1994, %v1888, 0
      %v2494 = vsel %vm1994, %v1889, 0
      %v2497 = vsel %vm1994, %v1890, 0
      %v2500 = vsel %vm1994, %v1891, 0
      %v2503 = vsel %vm1994, %v1892, 0
      %v2506 = vsel %vm1994, %v1893, 0
      %v2509 = vsel %vm1994, %v1894, 0
      %v2512 = vsel %vm1994, %v1895, 0
      %v2515 = vsel %vm1994, %v1896, 0
      %v2518 = vsel %vm1994, %v1897, 0
      %v2521 = vsel %vm1994, %v1898, 0
      %v2524 = vsel %vm1994, %v1899, 0
      %v2527 = vsel %vm1994, %v1900, 0
      %v2530 = vsel %vm1994, %v1901, 0
      %v2533 = vsel %vm1994, %v1902, 0
      %v2536 = vsel %vm1994, %v1903, 0
      %v2539 = vsel %vm1994, %v1904, 0
      %v2542 = vsel %vm1994, %v1905, 0
      %v2545 = vsel %vm1994, %v1906, 0
      %v2548 = vsel %vm1994, %v1907, 0
      %v2551 = vsel %vm1994, %v1908, 0
      %v2554 = vsel %vm1994, %v1909, 0
      %v2557 = vsel %vm1994, %v1910, 0
      %v2560 = vsel %vm1994, %v1911, 0
      %v2563 = vsel %vm1994, %v1912, 0
      %v2566 = vsel %vm1994, %v1913, 0
      %v2569 = vsel %vm1994, %v1914, 0
      %v2572 = vsel %vm1994, %v1915, 0
      %v2575 = vsel %vm1994, %v1916, 0
      %v2578 = vsel %vm1994, %v1917, 0
      %v2581 = vsel %vm1994, %v1918, 0
      %v2584 = vsel %vm1994, %v1919, 0
      %v2587 = vsel %vm1994, %v1920, 0
      %v2590 = vsel %vm1994, %v1921, 0
      %v2593 = vsel %vm1994, %v1922, 0
      %v2596 = vsel %vm1994, %v1923, 0
      %v2599 = vsel %vm1994, %v1924, 0
      %v2602 = vsel %vm1994, %v1925, 0
      %v2605 = vsel %vm1994, %v1926, 0
      %v2608 = vsel %vm1994, %v1927, 0
      %v2611 = vsel %vm1994, %v1928, 0
      %v2614 = vsel %vm1994, %v1929, 0
      %v2617 = vsel %vm1994, %v1930, 0
      %v2620 = vsel %vm1994, %v1931, 0
      %v2623 = vsel %vm1994, %v1932, 0
      %v2626 = vsel %vm1994, %v1933, 0
      %v2629 = vsel %vm1994, %v1934, 0
      %v2632 = vsel %vm1994, %v1935, 0
      %v2635 = vsel %vm1994, %v1936, 0
      %v2638 = vsel %vm1994, %v1937, 0
      %v2641 = vsel %vm1994, %v1938, 0
      %v2644 = vsel %vm1994, %v1939, 0
      %v2647 = vsel %vm1994, %v1940, 0
      %v2650 = vsel %vm1994, %v1941, 0
      %v2653 = vsel %vm1994, %v1942, 0
      %v2656 = vsel %vm1994, %v1943, 0
      %v2659 = vsel %vm1994, %v1944, 0
      %v2662 = vsel %vm1994, %v1945, 0
      %v2665 = vsel %vm1994, %v1946, 0
      %v2668 = vsel %vm1994, %v1947, 0
      %v2671 = vsel %vm1994, %v1948, 0
      %v2674 = vsel %vm1994, %v1949, 0
      %v2677 = vsel %vm1994, %v1950, 0
      %v2680 = vsel %vm1994, %v1951, 0
      %v2683 = vsel %vm1994, %v1952, 0
      %v2686 = vsel %vm1994, %v1953, 0
      %v2689 = vsel %vm1994, %v1954, 0
      %v2692 = vsel %vm1994, %v1955, 0
      %v2695 = vsel %vm1994, %v1956, 0
      %v2698 = vsel %vm1994, %v1957, 0
      %v2701 = vsel %vm1994, %v1958, 0
      %v2704 = vsel %vm1994, %v1959, 0
      %v2707 = vsel %vm1994, %v1960, 0
      %v2710 = vsel %vm1994, %v1961, 0
      %v2713 = vsel %vm1994, %v1962, 0
      %v2716 = vsel %vm1994, %v1963, 0
      %v2719 = vsel %vm1994, %v1964, 0
      %v2722 = vsel %vm1994, %v1965, 0
      %v2725 = vsel %vm1994, %v1966, 0
      %v2728 = vsel %vm1994, %v1967, 0
      %v2731 = vsel %vm1994, %v1968, 0
      %v2734 = vsel %vm1994, %v1969, 0
      %v2737 = vsel %vm1994, %v1970, 0
      %v2740 = vsel %vm1994, %v1971, 0
      %v2743 = vsel %vm1994, %v1972, 0
      %v2746 = vsel %vm1994, %v1973, 0
      %v2749 = vsel %vm1994, %v1974, 0
      %v2752 = vsel %vm1994, %v1975, 0
      %v2755 = vsel %vm1994, %v1976, 0
      %v2758 = vsel %vm1994, %v1977, 0
      %v2761 = vsel %vm1994, %v1978, 0
      %vm2763 = vcmask 1041408
      %v2765 = vsel %vm2763, %v1991, 0
      %2767 = vmatprep.subr.bf16.mxu0 0
      %2768 = vmatpush1.bf16.msra.mxu0 %v1989
      %2769 = vmatprep.subr.bf16.mxu0 0
      %2770 = vmatpush1.bf16.msra.mxu0 %v1990
      %2771 = vmatprep.subr.bf16.mxu0 0
      %2772 = vmatpush1.bf16.msra.mxu0 %v2765
      %2773 = vmatprep.subr.bf16.mxu0 0
      %2774 = vmatpush1.bf16.msra.mxu0 0
      %2775 = vmatprep.subr.bf16.mxu0 0
      %2776 = vmatpush1.bf16.msra.mxu0 0
      %2777 = vmatprep.subr.bf16.mxu0 0
      %2778 = vmatpush1.bf16.msra.mxu0 0
      %2779 = vmatprep.subr.bf16.mxu0 0
      %2780 = vmatpush1.bf16.msra.mxu0 0
      %2781 = vmatprep.subr.bf16.mxu0 0
      %2782 = vmatpush1.bf16.msra.mxu0 0
      %2783 = vmatprep.subr.bf16.mxu0 0
      %2784 = vmatpush1.bf16.msra.mxu0 0
      %2785 = vmatprep.subr.bf16.mxu0 0
      %2786 = vmatpush1.bf16.msra.mxu0 0
      %2787 = vmatprep.subr.bf16.mxu0 0
      %2788 = vmatpush1.bf16.msra.mxu0 0
      %2789 = vmatprep.subr.bf16.mxu0 0
      %2790 = vmatpush1.bf16.msra.mxu0 0
      %2791 = vmatprep.subr.bf16.mxu0 0
      %2792 = vmatpush1.bf16.msra.mxu0 0
      %2793 = vmatprep.subr.bf16.mxu0 0
      %2794 = vmatpush1.bf16.msra.mxu0 0
      %2795 = vmatprep.subr.bf16.mxu0 0
      %2796 = vmatpush1.bf16.msra.mxu0 0
      %2797 = vmatprep.subr.bf16.mxu0 0
      %2798 = vmatpush1.bf16.msra.mxu0 0
      %2799 = vmatprep.mubr.bf16.mxu0 0
      %2800 = vmatmul.mubr.bf16.gmra.mrb[0].mxu0 %v1996
      %v2801 = vpop.f32.mrb[0].mxu0
      %v2802 = vadd.f32 %v697, %v2801
      %v2803 = vpop.f32.mrb[0].mxu0
      %v2804 = vpop.f32.mrb[0].mxu0
      %v2805 = vadd.f32 %v697, %v2804
      %v2806 = vpop.f32.mrb[0].mxu0
      %2807 = vmatprep.mubr.bf16.mxu0 0
      %2808 = vmatmul.mubr.bf16.gmra.mrb[0].mxu0 %v1999
      %v2809 = vpop.f32.mrb[0].mxu0
      %v2810 = vadd.f32 %v697, %v2809
      %v2811 = vpop.f32.mrb[0].mxu0
      %v2812 = vpop.f32.mrb[0].mxu0
      %v2813 = vadd.f32 %v697, %v2812
      %v2814 = vpop.f32.mrb[0].mxu0
      %2815 = vmatprep.mubr.bf16.mxu0 0
      %2816 = vmatmul.mubr.bf16.gmra.mrb[0].mxu0 %v2002
      %v2817 = vpop.f32.mrb[0].mxu0
      %v2818 = vadd.f32 %v697, %v2817
      %v2819 = vpop.f32.mrb[0].mxu0
      %v2820 = vpop.f32.mrb[0].mxu0
      %v2821 = vadd.f32 %v697, %v2820
      %v2822 = vpop.f32.mrb[0].mxu0
      %2823 = vmatprep.mubr.bf16.mxu0 0
      %2824 = vmatmul.mubr.bf16.gmra.mrb[0].mxu0 %v2005
      %v2825 = vpop.f32.mrb[0].mxu0
      %v2826 = vadd.f32 %v697, %v2825
      %v2827 = vpop.f32.mrb[0].mxu0
      %v2828 = vpop.f32.mrb[0].mxu0
      %v2829 = vadd.f32 %v697, %v2828
      %v2830 = vpop.f32.mrb[0].mxu0
      %2831 = vmatprep.mubr.bf16.mxu0 0
      %2832 = vmatmul.mubr.bf16.gmra.mrb[0].mxu0 %v2008
      %v2833 = vpop.f32.mrb[0].mxu0
      %v2834 = vadd.f32 %v697, %v2833
      %v2835 = vpop.f32.mrb[0].mxu0
      %v2836 = vpop.f32.mrb[0].mxu0
      %v2837 = vadd.f32 %v697, %v2836
      %v2838 = vpop.f32.mrb[0].mxu0
      %2839 = vmatprep.mubr.bf16.mxu0 0
      %2840 = vmatmul.mubr.bf16.gmra.mrb[0].mxu0 %v2011
      %v2841 = vpop.f32.mrb[0].mxu0
      %v2842 = vadd.f32 %v697, %v2841
      %v2843 = vpop.f32.mrb[0].mxu0
      %v2844 = vpop.f32.mrb[0].mxu0
      %v2845 = vadd.f32 %v697, %v2844
      %v2846 = vpop.f32.mrb[0].mxu0
      %2847 = vmatprep.mubr.bf16.mxu0 0
      %2848 = vmatmul.mubr.bf16.gmra.mrb[0].mxu0 %v2014
      %v2849 = vpop.f32.mrb[0].mxu0
      %v2850 = vadd.f32 %v697, %v2849
      %v2851 = vpop.f32.mrb[0].mxu0
      %v2852 = vpop.f32.mrb[0].mxu0
      %v2853 = vadd.f32 %v697, %v2852
      %v2854 = vpop.f32.mrb[0].mxu0
      %2855 = vmatprep.mubr.bf16.mxu0 0
      %2856 = vmatmul.mubr.bf16.gmra.mrb[0].mxu0 %v2017
      %v2857 = vpop.f32.mrb[0].mxu0
      %v2858 = vadd.f32 %v697, %v2857
      %v2859 = vpop.f32.mrb[0].mxu0
      %v2860 = vpop.f32.mrb[0].mxu0
      %v2861 = vadd.f32 %v697, %v2860
      %v2862 = vpop.f32.mrb[0].mxu0
      %2863 = vmatprep.mubr.bf16.mxu0 0
      %2864 = vmatmul.mubr.bf16.gmra.mrb[0].mxu0 %v2020
      %v2865 = vpop.f32.mrb[0].mxu0
      %v2866 = vadd.f32 %v697, %v2865
      %v2867 = vpop.f32.mrb[0].mxu0
      %v2868 = vpop.f32.mrb[0].mxu0
      %v2869 = vadd.f32 %v697, %v2868
      %v2870 = vpop.f32.mrb[0].mxu0
      %2871 = vmatprep.mubr.bf16.mxu0 0
      %2872 = vmatmul.mubr.bf16.gmra.mrb[0].mxu0 %v2023
      %v2873 = vpop.f32.mrb[0].mxu0
      %v2874 = vadd.f32 %v697, %v2873
      %v2875 = vpop.f32.mrb[0].mxu0
      %v2876 = vpop.f32.mrb[0].mxu0
      %v2877 = vadd.f32 %v697, %v2876
      %v2878 = vpop.f32.mrb[0].mxu0
      %2879 = vmatprep.mubr.bf16.mxu0 0
      %2880 = vmatmul.mubr.bf16.gmra.mrb[0].mxu0 %v2026
      %v2881 = vpop.f32.mrb[0].mxu0
      %v2882 = vadd.f32 %v697, %v2881
      %v2883 = vpop.f32.mrb[0].mxu0
      %v2884 = vpop.f32.mrb[0].mxu0
      %v2885 = vadd.f32 %v697, %v2884
      %v2886 = vpop.f32.mrb[0].mxu0
      %2887 = vmatprep.mubr.bf16.mxu0 0
      %2888 = vmatmul.mubr.bf16.gmra.mrb[0].mxu0 %v2029
      %v2889 = vpop.f32.mrb[0].mxu0
      %v2890 = vadd.f32 %v697, %v2889
      %v2891 = vpop.f32.mrb[0].mxu0
      %v2892 = vpop.f32.mrb[0].mxu0
      %v2893 = vadd.f32 %v697, %v2892
      %v2894 = vpop.f32.mrb[0].mxu0
      %2895 = vmatprep.mubr.bf16.mxu0 0
      %2896 = vmatmul.mubr.bf16.gmra.mrb[0].mxu0 %v2032
      %v2897 = vpop.f32.mrb[0].mxu0
      %v2898 = vadd.f32 %v697, %v2897
      %v2899 = vpop.f32.mrb[0].mxu0
      %v2900 = vpop.f32.mrb[0].mxu0
      %v2901 = vadd.f32 %v697, %v2900
      %v2902 = vpop.f32.mrb[0].mxu0
      %2903 = vmatprep.mubr.bf16.mxu0 0
      %2904 = vmatmul.mubr.bf16.gmra.mrb[0].mxu0 %v2035
      %v2905 = vpop.f32.mrb[0].mxu0
      %v2906 = vadd.f32 %v697, %v2905
      %v2907 = vpop.f32.mrb[0].mxu0
      %v2908 = vpop.f32.mrb[0].mxu0
      %v2909 = vadd.f32 %v697, %v2908
      %v2910 = vpop.f32.mrb[0].mxu0
      %2911 = vmatprep.mubr.bf16.mxu0 0
      %2912 = vmatmul.mubr.bf16.gmra.mrb[0].mxu0 %v2038
      %v2913 = vpop.f32.mrb[0].mxu0
      %v2914 = vadd.f32 %v697, %v2913
      %v2915 = vpop.f32.mrb[0].mxu0
      %v2916 = vpop.f32.mrb[0].mxu0
      %v2917 = vadd.f32 %v697, %v2916
      %v2918 = vpop.f32.mrb[0].mxu0
      %2919 = vmatprep.mubr.bf16.mxu0 0
      %2920 = vmatmul.mubr.bf16.gmra.mrb[0].mxu0 %v2041
      %v2921 = vpop.f32.mrb[0].mxu0
      %v2922 = vadd.f32 %v697, %v2921
      %v2923 = vpop.f32.mrb[0].mxu0
      %v2924 = vpop.f32.mrb[0].mxu0
      %v2925 = vadd.f32 %v697, %v2924
      %v2926 = vpop.f32.mrb[0].mxu0
      %2927 = vmatprep.mubr.bf16.mxu0 0
      %2928 = vmatmul.mubr.bf16.gmra.mrb[0].mxu0 %v2044
      %v2929 = vpop.f32.mrb[0].mxu0
      %v2930 = vadd.f32 %v697, %v2929
      %v2931 = vpop.f32.mrb[0].mxu0
      %v2932 = vpop.f32.mrb[0].mxu0
      %v2933 = vadd.f32 %v697, %v2932
      %v2934 = vpop.f32.mrb[0].mxu0
      %2935 = vmatprep.mubr.bf16.mxu0 0
      %2936 = vmatmul.mubr.bf16.gmra.mrb[0].mxu0 %v2047
      %v2937 = vpop.f32.mrb[0].mxu0
      %v2938 = vadd.f32 %v697, %v2937
      %v2939 = vpop.f32.mrb[0].mxu0
      %v2940 = vpop.f32.mrb[0].mxu0
      %v2941 = vadd.f32 %v697, %v2940
      %v2942 = vpop.f32.mrb[0].mxu0
      %2943 = vmatprep.mubr.bf16.mxu0 0
      %2944 = vmatmul.mubr.bf16.gmra.mrb[0].mxu0 %v2050
      %v2945 = vpop.f32.mrb[0].mxu0
      %v2946 = vadd.f32 %v697, %v2945
      %v2947 = vpop.f32.mrb[0].mxu0
      %v2948 = vpop.f32.mrb[0].mxu0
      %v2949 = vadd.f32 %v697, %v2948
      %v2950 = vpop.f32.mrb[0].mxu0
      %2951 = vmatprep.mubr.bf16.mxu0 0
      %2952 = vmatmul.mubr.bf16.gmra.mrb[0].mxu0 %v2053
      %v2953 = vpop.f32.mrb[0].mxu0
      %v2954 = vadd.f32 %v697, %v2953
      %v2955 = vpop.f32.mrb[0].mxu0
      %v2956 = vpop.f32.mrb[0].mxu0
      %v2957 = vadd.f32 %v697, %v2956
      %v2958 = vpop.f32.mrb[0].mxu0
      %2959 = vmatprep.mubr.bf16.mxu0 0
      %2960 = vmatmul.mubr.bf16.gmra.mrb[0].mxu0 %v2056
      %v2961 = vpop.f32.mrb[0].mxu0
      %v2962 = vadd.f32 %v697, %v2961
      %v2963 = vpop.f32.mrb[0].mxu0
      %v2964 = vpop.f32.mrb[0].mxu0
      %v2965 = vadd.f32 %v697, %v2964
      %v2966 = vpop.f32.mrb[0].mxu0
      %2967 = vmatprep.mubr.bf16.mxu0 0
      %2968 = vmatmul.mubr.bf16.gmra.mrb[0].mxu0 %v2059
      %v2969 = vpop.f32.mrb[0].mxu0
      %v2970 = vadd.f32 %v697, %v2969
      %v2971 = vpop.f32.mrb[0].mxu0
      %v2972 = vpop.f32.mrb[0].mxu0
      %v2973 = vadd.f32 %v697, %v2972
      %v2974 = vpop.f32.mrb[0].mxu0
      %2975 = vmatprep.mubr.bf16.mxu0 0
      %2976 = vmatmul.mubr.bf16.gmra.mrb[0].mxu0 %v2062
      %v2977 = vpop.f32.mrb[0].mxu0
      %v2978 = vadd.f32 %v697, %v2977
      %v2979 = vpop.f32.mrb[0].mxu0
      %v2980 = vpop.f32.mrb[0].mxu0
      %v2981 = vadd.f32 %v697, %v2980
      %v2982 = vpop.f32.mrb[0].mxu0
      %2983 = vmatprep.mubr.bf16.mxu0 0
      %2984 = vmatmul.mubr.bf16.gmra.mrb[0].mxu0 %v2065
      %v2985 = vpop.f32.mrb[0].mxu0
      %v2986 = vadd.f32 %v697, %v2985
      %v2987 = vpop.f32.mrb[0].mxu0
      %v2988 = vpop.f32.mrb[0].mxu0
      %v2989 = vadd.f32 %v697, %v2988
      %v2990 = vpop.f32.mrb[0].mxu0
      %2991 = vmatprep.mubr.bf16.mxu0 0
      %2992 = vmatmul.mubr.bf16.gmra.mrb[0].mxu0 %v2068
      %v2993 = vpop.f32.mrb[0].mxu0
      %v2994 = vadd.f32 %v697, %v2993
      %v2995 = vpop.f32.mrb[0].mxu0
      %v2996 = vpop.f32.mrb[0].mxu0
      %v2997 = vadd.f32 %v697, %v2996
      %v2998 = vpop.f32.mrb[0].mxu0
      %2999 = vmatprep.mubr.bf16.mxu0 0
      %3000 = vmatmul.mubr.bf16.gmra.mrb[0].mxu0 %v2071
      %v3001 = vpop.f32.mrb[0].mxu0
      %v3002 = vadd.f32 %v697, %v3001
      %v3003 = vpop.f32.mrb[0].mxu0
      %v3004 = vpop.f32.mrb[0].mxu0
      %v3005 = vadd.f32 %v697, %v3004
      %v3006 = vpop.f32.mrb[0].mxu0
      %3007 = vmatprep.mubr.bf16.mxu0 0
      %3008 = vmatmul.mubr.bf16.gmra.mrb[0].mxu0 %v2074
      %v3009 = vpop.f32.mrb[0].mxu0
      %v3010 = vadd.f32 %v697, %v3009
      %v3011 = vpop.f32.mrb[0].mxu0
      %v3012 = vpop.f32.mrb[0].mxu0
      %v3013 = vadd.f32 %v697, %v3012
      %v3014 = vpop.f32.mrb[0].mxu0
      %3015 = vmatprep.mubr.bf16.mxu0 0
      %3016 = vmatmul.mubr.bf16.gmra.mrb[0].mxu0 %v2077
      %v3017 = vpop.f32.mrb[0].mxu0
      %v3018 = vadd.f32 %v697, %v3017
      %v3019 = vpop.f32.mrb[0].mxu0
      %v3020 = vpop.f32.mrb[0].mxu0
      %v3021 = vadd.f32 %v697, %v3020
      %v3022 = vpop.f32.mrb[0].mxu0
      %3023 = vmatprep.mubr.bf16.mxu0 0
      %3024 = vmatmul.mubr.bf16.gmra.mrb[0].mxu0 %v2080
      %v3025 = vpop.f32.mrb[0].mxu0
      %v3026 = vadd.f32 %v697, %v3025
      %v3027 = vpop.f32.mrb[0].mxu0
      %v3028 = vpop.f32.mrb[0].mxu0
      %v3029 = vadd.f32 %v697, %v3028
      %v3030 = vpop.f32.mrb[0].mxu0
      %3031 = vmatprep.mubr.bf16.mxu0 0
      %3032 = vmatmul.mubr.bf16.gmra.mrb[0].mxu0 %v2083
      %v3033 = vpop.f32.mrb[0].mxu0
      %v3034 = vadd.f32 %v697, %v3033
      %v3035 = vpop.f32.mrb[0].mxu0
      %v3036 = vpop.f32.mrb[0].mxu0
      %v3037 = vadd.f32 %v697, %v3036
      %v3038 = vpop.f32.mrb[0].mxu0
      %3039 = vmatprep.mubr.bf16.mxu0 0
      %3040 = vmatmul.mubr.bf16.gmra.mrb[0].mxu0 %v2086
      %v3041 = vpop.f32.mrb[0].mxu0
      %v3042 = vadd.f32 %v697, %v3041
      %v3043 = vpop.f32.mrb[0].mxu0
      %v3044 = vpop.f32.mrb[0].mxu0
      %v3045 = vadd.f32 %v697, %v3044
      %v3046 = vpop.f32.mrb[0].mxu0
      %3047 = vmatprep.mubr.bf16.mxu0 0
      %3048 = vmatmul.mubr.bf16.gmra.mrb[0].mxu0 %v2089
      %v3049 = vpop.f32.mrb[0].mxu0
      %v3050 = vadd.f32 %v697, %v3049
      %v3051 = vpop.f32.mrb[0].mxu0
      %v3052 = vpop.f32.mrb[0].mxu0
      %v3053 = vadd.f32 %v697, %v3052
      %v3054 = vpop.f32.mrb[0].mxu0
      %3055 = vmatprep.mubr.bf16.mxu0 0
      %3056 = vmatmul.mubr.bf16.gmra.mrb[0].mxu0 %v2092
      %v3057 = vpop.f32.mrb[0].mxu0
      %v3058 = vadd.f32 %v697, %v3057
      %v3059 = vpop.f32.mrb[0].mxu0
      %v3060 = vpop.f32.mrb[0].mxu0
      %v3061 = vadd.f32 %v697, %v3060
      %v3062 = vpop.f32.mrb[0].mxu0
      %3063 = vmatprep.mubr.bf16.mxu0 0
      %3064 = vmatmul.mubr.bf16.gmra.mrb[0].mxu0 %v2095
      %v3065 = vpop.f32.mrb[0].mxu0
      %v3066 = vadd.f32 %v697, %v3065
      %v3067 = vpop.f32.mrb[0].mxu0
      %v3068 = vpop.f32.mrb[0].mxu0
      %v3069 = vadd.f32 %v697, %v3068
      %v3070 = vpop.f32.mrb[0].mxu0
      %3071 = vmatprep.mubr.bf16.mxu0 0
      %3072 = vmatmul.mubr.bf16.gmra.mrb[0].mxu0 %v2098
      %v3073 = vpop.f32.mrb[0].mxu0
      %v3074 = vadd.f32 %v697, %v3073
      %v3075 = vpop.f32.mrb[0].mxu0
      %v3076 = vpop.f32.mrb[0].mxu0
      %v3077 = vadd.f32 %v697, %v3076
      %v3078 = vpop.f32.mrb[0].mxu0
      %3079 = vmatprep.mubr.bf16.mxu0 0
      %3080 = vmatmul.mubr.bf16.gmra.mrb[0].mxu0 %v2101
      %v3081 = vpop.f32.mrb[0].mxu0
      %v3082 = vadd.f32 %v697, %v3081
      %v3083 = vpop.f32.mrb[0].mxu0
      %v3084 = vpop.f32.mrb[0].mxu0
      %v3085 = vadd.f32 %v697, %v3084
      %v3086 = vpop.f32.mrb[0].mxu0
      %3087 = vmatprep.mubr.bf16.mxu0 0
      %3088 = vmatmul.mubr.bf16.gmra.mrb[0].mxu0 %v2104
      %v3089 = vpop.f32.mrb[0].mxu0
      %v3090 = vadd.f32 %v697, %v3089
      %v3091 = vpop.f32.mrb[0].mxu0
      %v3092 = vpop.f32.mrb[0].mxu0
      %v3093 = vadd.f32 %v697, %v3092
      %v3094 = vpop.f32.mrb[0].mxu0
      %3095 = vmatprep.mubr.bf16.mxu0 0
      %3096 = vmatmul.mubr.bf16.gmra.mrb[0].mxu0 %v2107
      %v3097 = vpop.f32.mrb[0].mxu0
      %v3098 = vadd.f32 %v697, %v3097
      %v3099 = vpop.f32.mrb[0].mxu0
      %v3100 = vpop.f32.mrb[0].mxu0
      %v3101 = vadd.f32 %v697, %v3100
      %v3102 = vpop.f32.mrb[0].mxu0
      %3103 = vmatprep.mubr.bf16.mxu0 0
      %3104 = vmatmul.mubr.bf16.gmra.mrb[0].mxu0 %v2110
      %v3105 = vpop.f32.mrb[0].mxu0
      %v3106 = vadd.f32 %v697, %v3105
      %v3107 = vpop.f32.mrb[0].mxu0
      %v3108 = vpop.f32.mrb[0].mxu0
      %v3109 = vadd.f32 %v697, %v3108
      %v3110 = vpop.f32.mrb[0].mxu0
      %3111 = vmatprep.mubr.bf16.mxu0 0
      %3112 = vmatmul.mubr.bf16.gmra.mrb[0].mxu0 %v2113
      %v3113 = vpop.f32.mrb[0].mxu0
      %v3114 = vadd.f32 %v697, %v3113
      %v3115 = vpop.f32.mrb[0].mxu0
      %v3116 = vpop.f32.mrb[0].mxu0
      %v3117 = vadd.f32 %v697, %v3116
      %v3118 = vpop.f32.mrb[0].mxu0
      %3119 = vmatprep.mubr.bf16.mxu0 0
      %3120 = vmatmul.mubr.bf16.gmra.mrb[0].mxu0 %v2116
      %v3121 = vpop.f32.mrb[0].mxu0
      %v3122 = vadd.f32 %v697, %v3121
      %v3123 = vpop.f32.mrb[0].mxu0
      %v3124 = vpop.f32.mrb[0].mxu0
      %v3125 = vadd.f32 %v697, %v3124
      %v3126 = vpop.f32.mrb[0].mxu0
      %3127 = vmatprep.mubr.bf16.mxu0 0
      %3128 = vmatmul.mubr.bf16.gmra.mrb[0].mxu0 %v2119
      %v3129 = vpop.f32.mrb[0].mxu0
      %v3130 = vadd.f32 %v697, %v3129
      %v3131 = vpop.f32.mrb[0].mxu0
      %v3132 = vpop.f32.mrb[0].mxu0
      %v3133 = vadd.f32 %v697, %v3132
      %v3134 = vpop.f32.mrb[0].mxu0
      %3135 = vmatprep.mubr.bf16.mxu0 0
      %3136 = vmatmul.mubr.bf16.gmra.mrb[0].mxu0 %v2122
      %v3137 = vpop.f32.mrb[0].mxu0
      %v3138 = vadd.f32 %v697, %v3137
      %v3139 = vpop.f32.mrb[0].mxu0
      %v3140 = vpop.f32.mrb[0].mxu0
      %v3141 = vadd.f32 %v697, %v3140
      %v3142 = vpop.f32.mrb[0].mxu0
      %3143 = vmatprep.mubr.bf16.mxu0 0
      %3144 = vmatmul.mubr.bf16.gmra.mrb[0].mxu0 %v2125
      %v3145 = vpop.f32.mrb[0].mxu0
      %v3146 = vadd.f32 %v697, %v3145
      %v3147 = vpop.f32.mrb[0].mxu0
      %v3148 = vpop.f32.mrb[0].mxu0
      %v3149 = vadd.f32 %v697, %v3148
      %v3150 = vpop.f32.mrb[0].mxu0
      %3151 = vmatprep.mubr.bf16.mxu0 0
      %3152 = vmatmul.mubr.bf16.gmra.mrb[0].mxu0 %v2128
      %v3153 = vpop.f32.mrb[0].mxu0
      %v3154 = vadd.f32 %v697, %v3153
      %v3155 = vpop.f32.mrb[0].mxu0
      %v3156 = vpop.f32.mrb[0].mxu0
      %v3157 = vadd.f32 %v697, %v3156
      %v3158 = vpop.f32.mrb[0].mxu0
      %3159 = vmatprep.mubr.bf16.mxu0 0
      %3160 = vmatmul.mubr.bf16.gmra.mrb[0].mxu0 %v2131
      %v3161 = vpop.f32.mrb[0].mxu0
      %v3162 = vadd.f32 %v697, %v3161
      %v3163 = vpop.f32.mrb[0].mxu0
      %v3164 = vpop.f32.mrb[0].mxu0
      %v3165 = vadd.f32 %v697, %v3164
      %v3166 = vpop.f32.mrb[0].mxu0
      %3167 = vmatprep.mubr.bf16.mxu0 0
      %3168 = vmatmul.mubr.bf16.gmra.mrb[0].mxu0 %v2134
      %v3169 = vpop.f32.mrb[0].mxu0
      %v3170 = vadd.f32 %v697, %v3169
      %v3171 = vpop.f32.mrb[0].mxu0
      %v3172 = vpop.f32.mrb[0].mxu0
      %v3173 = vadd.f32 %v697, %v3172
      %v3174 = vpop.f32.mrb[0].mxu0
      %3175 = vmatprep.mubr.bf16.mxu0 0
      %3176 = vmatmul.mubr.bf16.gmra.mrb[0].mxu0 %v2137
      %v3177 = vpop.f32.mrb[0].mxu0
      %v3178 = vadd.f32 %v697, %v3177
      %v3179 = vpop.f32.mrb[0].mxu0
      %v3180 = vpop.f32.mrb[0].mxu0
      %v3181 = vadd.f32 %v697, %v3180
      %v3182 = vpop.f32.mrb[0].mxu0
      %3183 = vmatprep.mubr.bf16.mxu0 0
      %3184 = vmatmul.mubr.bf16.gmra.mrb[0].mxu0 %v2140
      %v3185 = vpop.f32.mrb[0].mxu0
      %v3186 = vadd.f32 %v697, %v3185
      %v3187 = vpop.f32.mrb[0].mxu0
      %v3188 = vpop.f32.mrb[0].mxu0
      %v3189 = vadd.f32 %v697, %v3188
      %v3190 = vpop.f32.mrb[0].mxu0
      %3191 = vmatprep.mubr.bf16.mxu0 0
      %3192 = vmatmul.mubr.bf16.gmra.mrb[0].mxu0 %v2143
      %v3193 = vpop.f32.mrb[0].mxu0
      %v3194 = vadd.f32 %v697, %v3193
      %v3195 = vpop.f32.mrb[0].mxu0
      %v3196 = vpop.f32.mrb[0].mxu0
      %v3197 = vadd.f32 %v697, %v3196
      %v3198 = vpop.f32.mrb[0].mxu0
      %3199 = vmatprep.mubr.bf16.mxu0 0
      %3200 = vmatmul.mubr.bf16.gmra.mrb[0].mxu0 %v2146
      %v3201 = vpop.f32.mrb[0].mxu0
      %v3202 = vadd.f32 %v697, %v3201
      %v3203 = vpop.f32.mrb[0].mxu0
      %v3204 = vpop.f32.mrb[0].mxu0
      %v3205 = vadd.f32 %v697, %v3204
      %v3206 = vpop.f32.mrb[0].mxu0
      %3207 = vmatprep.mubr.bf16.mxu0 0
      %3208 = vmatmul.mubr.bf16.gmra.mrb[0].mxu0 %v2149
      %v3209 = vpop.f32.mrb[0].mxu0
      %v3210 = vadd.f32 %v697, %v3209
      %v3211 = vpop.f32.mrb[0].mxu0
      %v3212 = vpop.f32.mrb[0].mxu0
      %v3213 = vadd.f32 %v697, %v3212
      %v3214 = vpop.f32.mrb[0].mxu0
      %3215 = vmatprep.mubr.bf16.mxu0 0
      %3216 = vmatmul.mubr.bf16.gmra.mrb[0].mxu0 %v2152
      %v3217 = vpop.f32.mrb[0].mxu0
      %v3218 = vadd.f32 %v697, %v3217
      %v3219 = vpop.f32.mrb[0].mxu0
      %v3220 = vpop.f32.mrb[0].mxu0
      %v3221 = vadd.f32 %v697, %v3220
      %v3222 = vpop.f32.mrb[0].mxu0
      %3223 = vmatprep.mubr.bf16.mxu0 0
      %3224 = vmatmul.mubr.bf16.gmra.mrb[0].mxu0 %v2155
      %v3225 = vpop.f32.mrb[0].mxu0
      %v3226 = vadd.f32 %v697, %v3225
      %v3227 = vpop.f32.mrb[0].mxu0
      %v3228 = vpop.f32.mrb[0].mxu0
      %v3229 = vadd.f32 %v697, %v3228
      %v3230 = vpop.f32.mrb[0].mxu0
      %3231 = vmatprep.mubr.bf16.mxu0 0
      %3232 = vmatmul.mubr.bf16.gmra.mrb[0].mxu0 %v2158
      %v3233 = vpop.f32.mrb[0].mxu0
      %v3234 = vadd.f32 %v697, %v3233
      %v3235 = vpop.f32.mrb[0].mxu0
      %v3236 = vpop.f32.mrb[0].mxu0
      %v3237 = vadd.f32 %v697, %v3236
      %v3238 = vpop.f32.mrb[0].mxu0
      %3239 = vmatprep.mubr.bf16.mxu0 0
      %3240 = vmatmul.mubr.bf16.gmra.mrb[0].mxu0 %v2161
      %v3241 = vpop.f32.mrb[0].mxu0
      %v3242 = vadd.f32 %v697, %v3241
      %v3243 = vpop.f32.mrb[0].mxu0
      %v3244 = vpop.f32.mrb[0].mxu0
      %v3245 = vadd.f32 %v697, %v3244
      %v3246 = vpop.f32.mrb[0].mxu0
      %3247 = vmatprep.mubr.bf16.mxu0 0
      %3248 = vmatmul.mubr.bf16.gmra.mrb[0].mxu0 %v2164
      %v3249 = vpop.f32.mrb[0].mxu0
      %v3250 = vadd.f32 %v697, %v3249
      %v3251 = vpop.f32.mrb[0].mxu0
      %v3252 = vpop.f32.mrb[0].mxu0
      %v3253 = vadd.f32 %v697, %v3252
      %v3254 = vpop.f32.mrb[0].mxu0
      %3255 = vmatprep.mubr.bf16.mxu0 0
      %3256 = vmatmul.mubr.bf16.gmra.mrb[0].mxu0 %v2167
      %v3257 = vpop.f32.mrb[0].mxu0
      %v3258 = vadd.f32 %v697, %v3257
      %v3259 = vpop.f32.mrb[0].mxu0
      %v3260 = vpop.f32.mrb[0].mxu0
      %v3261 = vadd.f32 %v697, %v3260
      %v3262 = vpop.f32.mrb[0].mxu0
      %3263 = vmatprep.mubr.bf16.mxu0 0
      %3264 = vmatmul.mubr.bf16.gmra.mrb[0].mxu0 %v2170
      %v3265 = vpop.f32.mrb[0].mxu0
      %v3266 = vadd.f32 %v697, %v3265
      %v3267 = vpop.f32.mrb[0].mxu0
      %v3268 = vpop.f32.mrb[0].mxu0
      %v3269 = vadd.f32 %v697, %v3268
      %v3270 = vpop.f32.mrb[0].mxu0
      %3271 = vmatprep.mubr.bf16.mxu0 0
      %3272 = vmatmul.mubr.bf16.gmra.mrb[0].mxu0 %v2173
      %v3273 = vpop.f32.mrb[0].mxu0
      %v3274 = vadd.f32 %v697, %v3273
      %v3275 = vpop.f32.mrb[0].mxu0
      %v3276 = vpop.f32.mrb[0].mxu0
      %v3277 = vadd.f32 %v697, %v3276
      %v3278 = vpop.f32.mrb[0].mxu0
      %3279 = vmatprep.mubr.bf16.mxu0 0
      %3280 = vmatmul.mubr.bf16.gmra.mrb[0].mxu0 %v2176
      %v3281 = vpop.f32.mrb[0].mxu0
      %v3282 = vadd.f32 %v697, %v3281
      %v3283 = vpop.f32.mrb[0].mxu0
      %v3284 = vpop.f32.mrb[0].mxu0
      %v3285 = vadd.f32 %v697, %v3284
      %v3286 = vpop.f32.mrb[0].mxu0
      %3287 = vmatprep.mubr.bf16.mxu0 0
      %3288 = vmatmul.mubr.bf16.gmra.mrb[0].mxu0 %v2179
      %v3289 = vpop.f32.mrb[0].mxu0
      %v3290 = vadd.f32 %v697, %v3289
      %v3291 = vpop.f32.mrb[0].mxu0
      %v3292 = vpop.f32.mrb[0].mxu0
      %v3293 = vadd.f32 %v697, %v3292
      %v3294 = vpop.f32.mrb[0].mxu0
      %3295 = vmatprep.mubr.bf16.mxu0 0
      %3296 = vmatmul.mubr.bf16.gmra.mrb[0].mxu0 %v2182
      %v3297 = vpop.f32.mrb[0].mxu0
      %v3298 = vadd.f32 %v697, %v3297
      %v3299 = vpop.f32.mrb[0].mxu0
      %v3300 = vpop.f32.mrb[0].mxu0
      %v3301 = vadd.f32 %v697, %v3300
      %v3302 = vpop.f32.mrb[0].mxu0
      %3303 = vmatprep.mubr.bf16.mxu0 0
      %3304 = vmatmul.mubr.bf16.gmra.mrb[0].mxu0 %v2185
      %v3305 = vpop.f32.mrb[0].mxu0
      %v3306 = vadd.f32 %v697, %v3305
      %v3307 = vpop.f32.mrb[0].mxu0
      %v3308 = vpop.f32.mrb[0].mxu0
      %v3309 = vadd.f32 %v697, %v3308
      %v3310 = vpop.f32.mrb[0].mxu0
      %3311 = vmatprep.mubr.bf16.mxu0 0
      %3312 = vmatmul.mubr.bf16.gmra.mrb[0].mxu0 %v2188
      %v3313 = vpop.f32.mrb[0].mxu0
      %v3314 = vadd.f32 %v697, %v3313
      %v3315 = vpop.f32.mrb[0].mxu0
      %v3316 = vpop.f32.mrb[0].mxu0
      %v3317 = vadd.f32 %v697, %v3316
      %v3318 = vpop.f32.mrb[0].mxu0
      %3319 = vmatprep.mubr.bf16.mxu0 0
      %3320 = vmatmul.mubr.bf16.gmra.mrb[0].mxu0 %v2191
      %v3321 = vpop.f32.mrb[0].mxu0
      %v3322 = vadd.f32 %v697, %v3321
      %v3323 = vpop.f32.mrb[0].mxu0
      %v3324 = vpop.f32.mrb[0].mxu0
      %v3325 = vadd.f32 %v697, %v3324
      %v3326 = vpop.f32.mrb[0].mxu0
      %3327 = vmatprep.mubr.bf16.mxu0 0
      %3328 = vmatmul.mubr.bf16.gmra.mrb[0].mxu0 %v2194
      %v3329 = vpop.f32.mrb[0].mxu0
      %v3330 = vadd.f32 %v697, %v3329
      %v3331 = vpop.f32.mrb[0].mxu0
      %v3332 = vpop.f32.mrb[0].mxu0
      %v3333 = vadd.f32 %v697, %v3332
      %v3334 = vpop.f32.mrb[0].mxu0
      %3335 = vmatprep.mubr.bf16.mxu0 0
      %3336 = vmatmul.mubr.bf16.gmra.mrb[0].mxu0 %v2197
      %v3337 = vpop.f32.mrb[0].mxu0
      %v3338 = vadd.f32 %v697, %v3337
      %v3339 = vpop.f32.mrb[0].mxu0
      %v3340 = vpop.f32.mrb[0].mxu0
      %v3341 = vadd.f32 %v697, %v3340
      %v3342 = vpop.f32.mrb[0].mxu0
      %3343 = vmatprep.mubr.bf16.mxu0 0
      %3344 = vmatmul.mubr.bf16.gmra.mrb[0].mxu0 %v2200
      %v3345 = vpop.f32.mrb[0].mxu0
      %v3346 = vadd.f32 %v697, %v3345
      %v3347 = vpop.f32.mrb[0].mxu0
      %v3348 = vpop.f32.mrb[0].mxu0
      %v3349 = vadd.f32 %v697, %v3348
      %v3350 = vpop.f32.mrb[0].mxu0
      %3351 = vmatprep.mubr.bf16.mxu0 0
      %3352 = vmatmul.mubr.bf16.gmra.mrb[0].mxu0 %v2203
      %v3353 = vpop.f32.mrb[0].mxu0
      %v3354 = vadd.f32 %v697, %v3353
      %v3355 = vpop.f32.mrb[0].mxu0
      %v3356 = vpop.f32.mrb[0].mxu0
      %v3357 = vadd.f32 %v697, %v3356
      %v3358 = vpop.f32.mrb[0].mxu0
      %3359 = vmatprep.mubr.bf16.mxu0 0
      %3360 = vmatmul.mubr.bf16.gmra.mrb[0].mxu0 %v2206
      %v3361 = vpop.f32.mrb[0].mxu0
      %v3362 = vadd.f32 %v697, %v3361
      %v3363 = vpop.f32.mrb[0].mxu0
      %v3364 = vpop.f32.mrb[0].mxu0
      %v3365 = vadd.f32 %v697, %v3364
      %v3366 = vpop.f32.mrb[0].mxu0
      %3367 = vmatprep.mubr.bf16.mxu0 0
      %3368 = vmatmul.mubr.bf16.gmra.mrb[0].mxu0 %v2209
      %v3369 = vpop.f32.mrb[0].mxu0
      %v3370 = vadd.f32 %v697, %v3369
      %v3371 = vpop.f32.mrb[0].mxu0
      %v3372 = vpop.f32.mrb[0].mxu0
      %v3373 = vadd.f32 %v697, %v3372
      %v3374 = vpop.f32.mrb[0].mxu0
      %3375 = vmatprep.mubr.bf16.mxu0 0
      %3376 = vmatmul.mubr.bf16.gmra.mrb[0].mxu0 %v2212
      %v3377 = vpop.f32.mrb[0].mxu0
      %v3378 = vadd.f32 %v697, %v3377
      %v3379 = vpop.f32.mrb[0].mxu0
      %v3380 = vpop.f32.mrb[0].mxu0
      %v3381 = vadd.f32 %v697, %v3380
      %v3382 = vpop.f32.mrb[0].mxu0
      %3383 = vmatprep.mubr.bf16.mxu0 0
      %3384 = vmatmul.mubr.bf16.gmra.mrb[0].mxu0 %v2215
      %v3385 = vpop.f32.mrb[0].mxu0
      %v3386 = vadd.f32 %v697, %v3385
      %v3387 = vpop.f32.mrb[0].mxu0
      %v3388 = vpop.f32.mrb[0].mxu0
      %v3389 = vadd.f32 %v697, %v3388
      %v3390 = vpop.f32.mrb[0].mxu0
      %3391 = vmatprep.mubr.bf16.mxu0 0
      %3392 = vmatmul.mubr.bf16.gmra.mrb[0].mxu0 %v2218
      %v3393 = vpop.f32.mrb[0].mxu0
      %v3394 = vadd.f32 %v697, %v3393
      %v3395 = vpop.f32.mrb[0].mxu0
      %v3396 = vpop.f32.mrb[0].mxu0
      %v3397 = vadd.f32 %v697, %v3396
      %v3398 = vpop.f32.mrb[0].mxu0
      %3399 = vmatprep.mubr.bf16.mxu0 0
      %3400 = vmatmul.mubr.bf16.gmra.mrb[0].mxu0 %v2221
      %v3401 = vpop.f32.mrb[0].mxu0
      %v3402 = vadd.f32 %v697, %v3401
      %v3403 = vpop.f32.mrb[0].mxu0
      %v3404 = vpop.f32.mrb[0].mxu0
      %v3405 = vadd.f32 %v697, %v3404
      %v3406 = vpop.f32.mrb[0].mxu0
      %3407 = vmatprep.mubr.bf16.mxu0 0
      %3408 = vmatmul.mubr.bf16.gmra.mrb[0].mxu0 %v2224
      %v3409 = vpop.f32.mrb[0].mxu0
      %v3410 = vadd.f32 %v697, %v3409
      %v3411 = vpop.f32.mrb[0].mxu0
      %v3412 = vpop.f32.mrb[0].mxu0
      %v3413 = vadd.f32 %v697, %v3412
      %v3414 = vpop.f32.mrb[0].mxu0
      %3415 = vmatprep.mubr.bf16.mxu0 0
      %3416 = vmatmul.mubr.bf16.gmra.mrb[0].mxu0 %v2227
      %v3417 = vpop.f32.mrb[0].mxu0
      %v3418 = vadd.f32 %v697, %v3417
      %v3419 = vpop.f32.mrb[0].mxu0
      %v3420 = vpop.f32.mrb[0].mxu0
      %v3421 = vadd.f32 %v697, %v3420
      %v3422 = vpop.f32.mrb[0].mxu0
      %3423 = vmatprep.mubr.bf16.mxu0 0
      %3424 = vmatmul.mubr.bf16.gmra.mrb[0].mxu0 %v2230
      %v3425 = vpop.f32.mrb[0].mxu0
      %v3426 = vadd.f32 %v697, %v3425
      %v3427 = vpop.f32.mrb[0].mxu0
      %v3428 = vpop.f32.mrb[0].mxu0
      %v3429 = vadd.f32 %v697, %v3428
      %v3430 = vpop.f32.mrb[0].mxu0
      %3431 = vmatprep.mubr.bf16.mxu0 0
      %3432 = vmatmul.mubr.bf16.gmra.mrb[0].mxu0 %v2233
      %v3433 = vpop.f32.mrb[0].mxu0
      %v3434 = vadd.f32 %v697, %v3433
      %v3435 = vpop.f32.mrb[0].mxu0
      %v3436 = vpop.f32.mrb[0].mxu0
      %v3437 = vadd.f32 %v697, %v3436
      %v3438 = vpop.f32.mrb[0].mxu0
      %3439 = vmatprep.mubr.bf16.mxu0 0
      %3440 = vmatmul.mubr.bf16.gmra.mrb[0].mxu0 %v2236
      %v3441 = vpop.f32.mrb[0].mxu0
      %v3442 = vadd.f32 %v697, %v3441
      %v3443 = vpop.f32.mrb[0].mxu0
      %v3444 = vpop.f32.mrb[0].mxu0
      %v3445 = vadd.f32 %v697, %v3444
      %v3446 = vpop.f32.mrb[0].mxu0
      %3447 = vmatprep.mubr.bf16.mxu0 0
      %3448 = vmatmul.mubr.bf16.gmra.mrb[0].mxu0 %v2239
      %v3449 = vpop.f32.mrb[0].mxu0
      %v3450 = vadd.f32 %v697, %v3449
      %v3451 = vpop.f32.mrb[0].mxu0
      %v3452 = vpop.f32.mrb[0].mxu0
      %v3453 = vadd.f32 %v697, %v3452
      %v3454 = vpop.f32.mrb[0].mxu0
      %3455 = vmatprep.mubr.bf16.mxu0 0
      %3456 = vmatmul.mubr.bf16.gmra.mrb[0].mxu0 %v2242
      %v3457 = vpop.f32.mrb[0].mxu0
      %v3458 = vadd.f32 %v697, %v3457
      %v3459 = vpop.f32.mrb[0].mxu0
      %v3460 = vpop.f32.mrb[0].mxu0
      %v3461 = vadd.f32 %v697, %v3460
      %v3462 = vpop.f32.mrb[0].mxu0
      %3463 = vmatprep.mubr.bf16.mxu0 0
      %3464 = vmatmul.mubr.bf16.gmra.mrb[0].mxu0 %v2245
      %v3465 = vpop.f32.mrb[0].mxu0
      %v3466 = vadd.f32 %v697, %v3465
      %v3467 = vpop.f32.mrb[0].mxu0
      %v3468 = vpop.f32.mrb[0].mxu0
      %v3469 = vadd.f32 %v697, %v3468
      %v3470 = vpop.f32.mrb[0].mxu0
      %3471 = vmatprep.mubr.bf16.mxu0 0
      %3472 = vmatmul.mubr.bf16.gmra.mrb[0].mxu0 %v2248
      %v3473 = vpop.f32.mrb[0].mxu0
      %v3474 = vadd.f32 %v697, %v3473
      %v3475 = vpop.f32.mrb[0].mxu0
      %v3476 = vpop.f32.mrb[0].mxu0
      %v3477 = vadd.f32 %v697, %v3476
      %v3478 = vpop.f32.mrb[0].mxu0
      %3479 = vmatprep.mubr.bf16.mxu0 0
      %3480 = vmatmul.mubr.bf16.gmra.mrb[0].mxu0 %v2251
      %v3481 = vpop.f32.mrb[0].mxu0
      %v3482 = vadd.f32 %v697, %v3481
      %v3483 = vpop.f32.mrb[0].mxu0
      %v3484 = vpop.f32.mrb[0].mxu0
      %v3485 = vadd.f32 %v697, %v3484
      %v3486 = vpop.f32.mrb[0].mxu0
      %3487 = vmatprep.mubr.bf16.mxu0 0
      %3488 = vmatmul.mubr.bf16.gmra.mrb[0].mxu0 %v2254
      %v3489 = vpop.f32.mrb[0].mxu0
      %v3490 = vadd.f32 %v697, %v3489
      %v3491 = vpop.f32.mrb[0].mxu0
      %v3492 = vpop.f32.mrb[0].mxu0
      %v3493 = vadd.f32 %v697, %v3492
      %v3494 = vpop.f32.mrb[0].mxu0
      %3495 = vmatprep.mubr.bf16.mxu0 0
      %3496 = vmatmul.mubr.bf16.gmra.mrb[0].mxu0 %v2257
      %v3497 = vpop.f32.mrb[0].mxu0
      %v3498 = vadd.f32 %v697, %v3497
      %v3499 = vpop.f32.mrb[0].mxu0
      %v3500 = vpop.f32.mrb[0].mxu0
      %v3501 = vadd.f32 %v697, %v3500
      %v3502 = vpop.f32.mrb[0].mxu0
      %3503 = vmatprep.mubr.bf16.mxu0 0
      %3504 = vmatmul.mubr.bf16.gmra.mrb[0].mxu0 %v2260
      %v3505 = vpop.f32.mrb[0].mxu0
      %v3506 = vadd.f32 %v697, %v3505
      %v3507 = vpop.f32.mrb[0].mxu0
      %v3508 = vpop.f32.mrb[0].mxu0
      %v3509 = vadd.f32 %v697, %v3508
      %v3510 = vpop.f32.mrb[0].mxu0
      %3511 = vmatprep.mubr.bf16.mxu0 0
      %3512 = vmatmul.mubr.bf16.gmra.mrb[0].mxu0 %v2263
      %v3513 = vpop.f32.mrb[0].mxu0
      %v3514 = vadd.f32 %v697, %v3513
      %v3515 = vpop.f32.mrb[0].mxu0
      %v3516 = vpop.f32.mrb[0].mxu0
      %v3517 = vadd.f32 %v697, %v3516
      %v3518 = vpop.f32.mrb[0].mxu0
      %3519 = vmatprep.mubr.bf16.mxu0 0
      %3520 = vmatmul.mubr.bf16.gmra.mrb[0].mxu0 %v2266
      %v3521 = vpop.f32.mrb[0].mxu0
      %v3522 = vadd.f32 %v697, %v3521
      %v3523 = vpop.f32.mrb[0].mxu0
      %v3524 = vpop.f32.mrb[0].mxu0
      %v3525 = vadd.f32 %v697, %v3524
      %v3526 = vpop.f32.mrb[0].mxu0
      %3527 = vmatprep.mubr.bf16.mxu0 0
      %3528 = vmatmul.mubr.bf16.gmra.mrb[0].mxu0 %v2269
      %v3529 = vpop.f32.mrb[0].mxu0
      %v3530 = vadd.f32 %v697, %v3529
      %v3531 = vpop.f32.mrb[0].mxu0
      %v3532 = vpop.f32.mrb[0].mxu0
      %v3533 = vadd.f32 %v697, %v3532
      %v3534 = vpop.f32.mrb[0].mxu0
      %3535 = vmatprep.mubr.bf16.mxu0 0
      %3536 = vmatmul.mubr.bf16.gmra.mrb[0].mxu0 %v2272
      %v3537 = vpop.f32.mrb[0].mxu0
      %v3538 = vadd.f32 %v697, %v3537
      %v3539 = vpop.f32.mrb[0].mxu0
      %v3540 = vpop.f32.mrb[0].mxu0
      %v3541 = vadd.f32 %v697, %v3540
      %v3542 = vpop.f32.mrb[0].mxu0
      %3543 = vmatprep.mubr.bf16.mxu0 0
      %3544 = vmatmul.mubr.bf16.gmra.mrb[0].mxu0 %v2275
      %v3545 = vpop.f32.mrb[0].mxu0
      %v3546 = vadd.f32 %v697, %v3545
      %v3547 = vpop.f32.mrb[0].mxu0
      %v3548 = vpop.f32.mrb[0].mxu0
      %v3549 = vadd.f32 %v697, %v3548
      %v3550 = vpop.f32.mrb[0].mxu0
      %3551 = vmatprep.mubr.bf16.mxu0 0
      %3552 = vmatmul.mubr.bf16.gmra.mrb[0].mxu0 %v2278
      %v3553 = vpop.f32.mrb[0].mxu0
      %v3554 = vadd.f32 %v697, %v3553
      %v3555 = vpop.f32.mrb[0].mxu0
      %v3556 = vpop.f32.mrb[0].mxu0
      %v3557 = vadd.f32 %v697, %v3556
      %v3558 = vpop.f32.mrb[0].mxu0
      %3559 = vmatprep.mubr.bf16.mxu0 0
      %3560 = vmatmul.mubr.bf16.gmra.mrb[0].mxu0 %v2281
      %v3561 = vpop.f32.mrb[0].mxu0
      %v3562 = vadd.f32 %v697, %v3561
      %v3563 = vpop.f32.mrb[0].mxu0
      %v3564 = vpop.f32.mrb[0].mxu0
      %v3565 = vadd.f32 %v697, %v3564
      %v3566 = vpop.f32.mrb[0].mxu0
      %3567 = vmatprep.mubr.bf16.mxu0 0
      %3568 = vmatmul.mubr.bf16.gmra.mrb[0].mxu0 %v2284
      %v3569 = vpop.f32.mrb[0].mxu0
      %v3570 = vadd.f32 %v697, %v3569
      %v3571 = vpop.f32.mrb[0].mxu0
      %v3572 = vpop.f32.mrb[0].mxu0
      %v3573 = vadd.f32 %v697, %v3572
      %v3574 = vpop.f32.mrb[0].mxu0
      %3575 = vmatprep.mubr.bf16.mxu0 0
      %3576 = vmatmul.mubr.bf16.gmra.mrb[0].mxu0 %v2287
      %v3577 = vpop.f32.mrb[0].mxu0
      %v3578 = vadd.f32 %v697, %v3577
      %v3579 = vpop.f32.mrb[0].mxu0
      %v3580 = vpop.f32.mrb[0].mxu0
      %v3581 = vadd.f32 %v697, %v3580
      %v3582 = vpop.f32.mrb[0].mxu0
      %3583 = vmatprep.mubr.bf16.mxu0 0
      %3584 = vmatmul.mubr.bf16.gmra.mrb[0].mxu0 %v2290
      %v3585 = vpop.f32.mrb[0].mxu0
      %v3586 = vadd.f32 %v697, %v3585
      %v3587 = vpop.f32.mrb[0].mxu0
      %v3588 = vpop.f32.mrb[0].mxu0
      %v3589 = vadd.f32 %v697, %v3588
      %v3590 = vpop.f32.mrb[0].mxu0
      %3591 = vmatprep.mubr.bf16.mxu0 0
      %3592 = vmatmul.mubr.bf16.gmra.mrb[0].mxu0 %v2293
      %v3593 = vpop.f32.mrb[0].mxu0
      %v3594 = vadd.f32 %v697, %v3593
      %v3595 = vpop.f32.mrb[0].mxu0
      %v3596 = vpop.f32.mrb[0].mxu0
      %v3597 = vadd.f32 %v697, %v3596
      %v3598 = vpop.f32.mrb[0].mxu0
      %3599 = vmatprep.mubr.bf16.mxu0 0
      %3600 = vmatmul.mubr.bf16.gmra.mrb[0].mxu0 %v2296
      %v3601 = vpop.f32.mrb[0].mxu0
      %v3602 = vadd.f32 %v697, %v3601
      %v3603 = vpop.f32.mrb[0].mxu0
      %v3604 = vpop.f32.mrb[0].mxu0
      %v3605 = vadd.f32 %v697, %v3604
      %v3606 = vpop.f32.mrb[0].mxu0
      %3607 = vmatprep.mubr.bf16.mxu0 0
      %3608 = vmatmul.mubr.bf16.gmra.mrb[0].mxu0 %v2299
      %v3609 = vpop.f32.mrb[0].mxu0
      %v3610 = vadd.f32 %v697, %v3609
      %v3611 = vpop.f32.mrb[0].mxu0
      %v3612 = vpop.f32.mrb[0].mxu0
      %v3613 = vadd.f32 %v697, %v3612
      %v3614 = vpop.f32.mrb[0].mxu0
      %3615 = vmatprep.mubr.bf16.mxu0 0
      %3616 = vmatmul.mubr.bf16.gmra.mrb[0].mxu0 %v2302
      %v3617 = vpop.f32.mrb[0].mxu0
      %v3618 = vadd.f32 %v697, %v3617
      %v3619 = vpop.f32.mrb[0].mxu0
      %v3620 = vpop.f32.mrb[0].mxu0
      %v3621 = vadd.f32 %v697, %v3620
      %v3622 = vpop.f32.mrb[0].mxu0
      %3623 = vmatprep.mubr.bf16.mxu0 0
      %3624 = vmatmul.mubr.bf16.gmra.mrb[0].mxu0 %v2305
      %v3625 = vpop.f32.mrb[0].mxu0
      %v3626 = vadd.f32 %v697, %v3625
      %v3627 = vpop.f32.mrb[0].mxu0
      %v3628 = vpop.f32.mrb[0].mxu0
      %v3629 = vadd.f32 %v697, %v3628
      %v3630 = vpop.f32.mrb[0].mxu0
      %3631 = vmatprep.mubr.bf16.mxu0 0
      %3632 = vmatmul.mubr.bf16.gmra.mrb[0].mxu0 %v2308
      %v3633 = vpop.f32.mrb[0].mxu0
      %v3634 = vadd.f32 %v697, %v3633
      %v3635 = vpop.f32.mrb[0].mxu0
      %v3636 = vpop.f32.mrb[0].mxu0
      %v3637 = vadd.f32 %v697, %v3636
      %v3638 = vpop.f32.mrb[0].mxu0
      %3639 = vmatprep.mubr.bf16.mxu0 0
      %3640 = vmatmul.mubr.bf16.gmra.mrb[0].mxu0 %v2311
      %v3641 = vpop.f32.mrb[0].mxu0
      %v3642 = vadd.f32 %v697, %v3641
      %v3643 = vpop.f32.mrb[0].mxu0
      %v3644 = vpop.f32.mrb[0].mxu0
      %v3645 = vadd.f32 %v697, %v3644
      %v3646 = vpop.f32.mrb[0].mxu0
      %3647 = vmatprep.mubr.bf16.mxu0 0
      %3648 = vmatmul.mubr.bf16.gmra.mrb[0].mxu0 %v2314
      %v3649 = vpop.f32.mrb[0].mxu0
      %v3650 = vadd.f32 %v697, %v3649
      %v3651 = vpop.f32.mrb[0].mxu0
      %v3652 = vpop.f32.mrb[0].mxu0
      %v3653 = vadd.f32 %v697, %v3652
      %v3654 = vpop.f32.mrb[0].mxu0
      %3655 = vmatprep.mubr.bf16.mxu0 0
      %3656 = vmatmul.mubr.bf16.gmra.mrb[0].mxu0 %v2317
      %v3657 = vpop.f32.mrb[0].mxu0
      %v3658 = vadd.f32 %v697, %v3657
      %v3659 = vpop.f32.mrb[0].mxu0
      %v3660 = vpop.f32.mrb[0].mxu0
      %v3661 = vadd.f32 %v697, %v3660
      %v3662 = vpop.f32.mrb[0].mxu0
      %3663 = vmatprep.mubr.bf16.mxu0 0
      %3664 = vmatmul.mubr.bf16.gmra.mrb[0].mxu0 %v2320
      %v3665 = vpop.f32.mrb[0].mxu0
      %v3666 = vadd.f32 %v697, %v3665
      %v3667 = vpop.f32.mrb[0].mxu0
      %v3668 = vpop.f32.mrb[0].mxu0
      %v3669 = vadd.f32 %v697, %v3668
      %v3670 = vpop.f32.mrb[0].mxu0
      %3671 = vmatprep.mubr.bf16.mxu0 0
      %3672 = vmatmul.mubr.bf16.gmra.mrb[0].mxu0 %v2323
      %v3673 = vpop.f32.mrb[0].mxu0
      %v3674 = vadd.f32 %v697, %v3673
      %v3675 = vpop.f32.mrb[0].mxu0
      %v3676 = vpop.f32.mrb[0].mxu0
      %v3677 = vadd.f32 %v697, %v3676
      %v3678 = vpop.f32.mrb[0].mxu0
      %3679 = vmatprep.mubr.bf16.mxu0 0
      %3680 = vmatmul.mubr.bf16.gmra.mrb[0].mxu0 %v2326
      %v3681 = vpop.f32.mrb[0].mxu0
      %v3682 = vadd.f32 %v697, %v3681
      %v3683 = vpop.f32.mrb[0].mxu0
      %v3684 = vpop.f32.mrb[0].mxu0
      %v3685 = vadd.f32 %v697, %v3684
      %v3686 = vpop.f32.mrb[0].mxu0
      %3687 = vmatprep.mubr.bf16.mxu0 0
      %3688 = vmatmul.mubr.bf16.gmra.mrb[0].mxu0 %v2329
      %v3689 = vpop.f32.mrb[0].mxu0
      %v3690 = vadd.f32 %v697, %v3689
      %v3691 = vpop.f32.mrb[0].mxu0
      %v3692 = vpop.f32.mrb[0].mxu0
      %v3693 = vadd.f32 %v697, %v3692
      %v3694 = vpop.f32.mrb[0].mxu0
      %3695 = vmatprep.mubr.bf16.mxu0 0
      %3696 = vmatmul.mubr.bf16.gmra.mrb[0].mxu0 %v2332
      %v3697 = vpop.f32.mrb[0].mxu0
      %v3698 = vadd.f32 %v697, %v3697
      %v3699 = vpop.f32.mrb[0].mxu0
      %v3700 = vpop.f32.mrb[0].mxu0
      %v3701 = vadd.f32 %v697, %v3700
      %v3702 = vpop.f32.mrb[0].mxu0
      %3703 = vmatprep.mubr.bf16.mxu0 0
      %3704 = vmatmul.mubr.bf16.gmra.mrb[0].mxu0 %v2335
      %v3705 = vpop.f32.mrb[0].mxu0
      %v3706 = vadd.f32 %v697, %v3705
      %v3707 = vpop.f32.mrb[0].mxu0
      %v3708 = vpop.f32.mrb[0].mxu0
      %v3709 = vadd.f32 %v697, %v3708
      %v3710 = vpop.f32.mrb[0].mxu0
      %3711 = vmatprep.mubr.bf16.mxu0 0
      %3712 = vmatmul.mubr.bf16.gmra.mrb[0].mxu0 %v2338
      %v3713 = vpop.f32.mrb[0].mxu0
      %v3714 = vadd.f32 %v697, %v3713
      %v3715 = vpop.f32.mrb[0].mxu0
      %v3716 = vpop.f32.mrb[0].mxu0
      %v3717 = vadd.f32 %v697, %v3716
      %v3718 = vpop.f32.mrb[0].mxu0
      %3719 = vmatprep.mubr.bf16.mxu0 0
      %3720 = vmatmul.mubr.bf16.gmra.mrb[0].mxu0 %v2341
      %v3721 = vpop.f32.mrb[0].mxu0
      %v3722 = vadd.f32 %v697, %v3721
      %v3723 = vpop.f32.mrb[0].mxu0
      %v3724 = vpop.f32.mrb[0].mxu0
      %v3725 = vadd.f32 %v697, %v3724
      %v3726 = vpop.f32.mrb[0].mxu0
      %3727 = vmatprep.mubr.bf16.mxu0 0
      %3728 = vmatmul.mubr.bf16.gmra.mrb[0].mxu0 %v2344
      %v3729 = vpop.f32.mrb[0].mxu0
      %v3730 = vadd.f32 %v697, %v3729
      %v3731 = vpop.f32.mrb[0].mxu0
      %v3732 = vpop.f32.mrb[0].mxu0
      %v3733 = vadd.f32 %v697, %v3732
      %v3734 = vpop.f32.mrb[0].mxu0
      %3735 = vmatprep.mubr.bf16.mxu0 0
      %3736 = vmatmul.mubr.bf16.gmra.mrb[0].mxu0 %v2347
      %v3737 = vpop.f32.mrb[0].mxu0
      %v3738 = vadd.f32 %v697, %v3737
      %v3739 = vpop.f32.mrb[0].mxu0
      %v3740 = vpop.f32.mrb[0].mxu0
      %v3741 = vadd.f32 %v697, %v3740
      %v3742 = vpop.f32.mrb[0].mxu0
      %3743 = vmatprep.mubr.bf16.mxu0 0
      %3744 = vmatmul.mubr.bf16.gmra.mrb[0].mxu0 %v2350
      %v3745 = vpop.f32.mrb[0].mxu0
      %v3746 = vadd.f32 %v697, %v3745
      %v3747 = vpop.f32.mrb[0].mxu0
      %v3748 = vpop.f32.mrb[0].mxu0
      %v3749 = vadd.f32 %v697, %v3748
      %v3750 = vpop.f32.mrb[0].mxu0
      %3751 = vmatprep.mubr.bf16.mxu0 0
      %3752 = vmatmul.mubr.bf16.gmra.mrb[0].mxu0 %v2353
      %v3753 = vpop.f32.mrb[0].mxu0
      %v3754 = vadd.f32 %v697, %v3753
      %v3755 = vpop.f32.mrb[0].mxu0
      %v3756 = vpop.f32.mrb[0].mxu0
      %v3757 = vadd.f32 %v697, %v3756
      %v3758 = vpop.f32.mrb[0].mxu0
      %3759 = vmatprep.mubr.bf16.mxu0 0
      %3760 = vmatmul.mubr.bf16.gmra.mrb[0].mxu0 %v2356
      %v3761 = vpop.f32.mrb[0].mxu0
      %v3762 = vadd.f32 %v697, %v3761
      %v3763 = vpop.f32.mrb[0].mxu0
      %v3764 = vpop.f32.mrb[0].mxu0
      %v3765 = vadd.f32 %v697, %v3764
      %v3766 = vpop.f32.mrb[0].mxu0
      %3767 = vmatprep.mubr.bf16.mxu0 0
      %3768 = vmatmul.mubr.bf16.gmra.mrb[0].mxu0 %v2359
      %v3769 = vpop.f32.mrb[0].mxu0
      %v3770 = vadd.f32 %v697, %v3769
      %v3771 = vpop.f32.mrb[0].mxu0
      %v3772 = vpop.f32.mrb[0].mxu0
      %v3773 = vadd.f32 %v697, %v3772
      %v3774 = vpop.f32.mrb[0].mxu0
      %3775 = vmatprep.mubr.bf16.mxu0 0
      %3776 = vmatmul.mubr.bf16.gmra.mrb[0].mxu0 %v2362
      %v3777 = vpop.f32.mrb[0].mxu0
      %v3778 = vadd.f32 %v697, %v3777
      %v3779 = vpop.f32.mrb[0].mxu0
      %v3780 = vpop.f32.mrb[0].mxu0
      %v3781 = vadd.f32 %v697, %v3780
      %v3782 = vpop.f32.mrb[0].mxu0
      %3783 = vmatprep.mubr.bf16.mxu0 0
      %3784 = vmatmul.mubr.bf16.gmra.mrb[0].mxu0 %v2365
      %v3785 = vpop.f32.mrb[0].mxu0
      %v3786 = vadd.f32 %v697, %v3785
      %v3787 = vpop.f32.mrb[0].mxu0
      %v3788 = vpop.f32.mrb[0].mxu0
      %v3789 = vadd.f32 %v697, %v3788
      %v3790 = vpop.f32.mrb[0].mxu0
      %3791 = vmatprep.mubr.bf16.mxu0 0
      %3792 = vmatmul.mubr.bf16.gmra.mrb[0].mxu0 %v2368
      %v3793 = vpop.f32.mrb[0].mxu0
      %v3794 = vadd.f32 %v697, %v3793
      %v3795 = vpop.f32.mrb[0].mxu0
      %v3796 = vpop.f32.mrb[0].mxu0
      %v3797 = vadd.f32 %v697, %v3796
      %v3798 = vpop.f32.mrb[0].mxu0
      %3799 = vmatprep.mubr.bf16.mxu0 0
      %3800 = vmatmul.mubr.bf16.gmra.mrb[0].mxu0 %v2371
      %v3801 = vpop.f32.mrb[0].mxu0
      %v3802 = vadd.f32 %v697, %v3801
      %v3803 = vpop.f32.mrb[0].mxu0
      %v3804 = vpop.f32.mrb[0].mxu0
      %v3805 = vadd.f32 %v697, %v3804
      %v3806 = vpop.f32.mrb[0].mxu0
      %3807 = vmatprep.mubr.bf16.mxu0 0
      %3808 = vmatmul.mubr.bf16.gmra.mrb[0].mxu0 %v2374
      %v3809 = vpop.f32.mrb[0].mxu0
      %v3810 = vadd.f32 %v697, %v3809
      %v3811 = vpop.f32.mrb[0].mxu0
      %v3812 = vpop.f32.mrb[0].mxu0
      %v3813 = vadd.f32 %v697, %v3812
      %v3814 = vpop.f32.mrb[0].mxu0
      %3815 = vmatprep.mubr.bf16.mxu0 0
      %3816 = vmatmul.mubr.bf16.gmra.mrb[0].mxu0 %v2377
      %v3817 = vpop.f32.mrb[0].mxu0
      %v3818 = vadd.f32 %v697, %v3817
      %v3819 = vpop.f32.mrb[0].mxu0
      %v3820 = vpop.f32.mrb[0].mxu0
      %v3821 = vadd.f32 %v697, %v3820
      %v3822 = vpop.f32.mrb[0].mxu0
      %3823 = vmatprep.mubr.bf16.mxu0 0
      %3824 = vmatmul.mubr.bf16.gmra.mrb[0].mxu0 %v2380
      %v3825 = vpop.f32.mrb[0].mxu0
      %v3826 = vadd.f32 %v697, %v3825
      %v3827 = vpop.f32.mrb[0].mxu0
      %v3828 = vpop.f32.mrb[0].mxu0
      %v3829 = vadd.f32 %v697, %v3828
      %v3830 = vpop.f32.mrb[0].mxu0
      %3831 = vmatprep.mubr.bf16.mxu0 0
      %3832 = vmatmul.mubr.bf16.gmra.mrb[0].mxu0 %v2383
      %v3833 = vpop.f32.mrb[0].mxu0
      %v3834 = vadd.f32 %v697, %v3833
      %v3835 = vpop.f32.mrb[0].mxu0
      %v3836 = vpop.f32.mrb[0].mxu0
      %v3837 = vadd.f32 %v697, %v3836
      %v3838 = vpop.f32.mrb[0].mxu0
      %3839 = vmatprep.mubr.bf16.mxu0 0
      %3840 = vmatmul.mubr.bf16.gmra.mrb[0].mxu0 %v2386
      %v3841 = vpop.f32.mrb[0].mxu0
      %v3842 = vadd.f32 %v697, %v3841
      %v3843 = vpop.f32.mrb[0].mxu0
      %v3844 = vpop.f32.mrb[0].mxu0
      %v3845 = vadd.f32 %v697, %v3844
      %v3846 = vpop.f32.mrb[0].mxu0
      %3847 = vmatprep.mubr.bf16.mxu0 0
      %3848 = vmatmul.mubr.bf16.gmra.mrb[0].mxu0 %v2389
      %v3849 = vpop.f32.mrb[0].mxu0
      %v3850 = vadd.f32 %v697, %v3849
      %v3851 = vpop.f32.mrb[0].mxu0
      %v3852 = vpop.f32.mrb[0].mxu0
      %v3853 = vadd.f32 %v697, %v3852
      %v3854 = vpop.f32.mrb[0].mxu0
      %3855 = vmatprep.mubr.bf16.mxu0 0
      %3856 = vmatmul.mubr.bf16.gmra.mrb[0].mxu0 %v2392
      %v3857 = vpop.f32.mrb[0].mxu0
      %v3858 = vadd.f32 %v697, %v3857
      %v3859 = vpop.f32.mrb[0].mxu0
      %v3860 = vpop.f32.mrb[0].mxu0
      %v3861 = vadd.f32 %v697, %v3860
      %v3862 = vpop.f32.mrb[0].mxu0
      %3863 = vmatprep.mubr.bf16.mxu0 0
      %3864 = vmatmul.mubr.bf16.gmra.mrb[0].mxu0 %v2395
      %v3865 = vpop.f32.mrb[0].mxu0
      %v3866 = vadd.f32 %v697, %v3865
      %v3867 = vpop.f32.mrb[0].mxu0
      %v3868 = vpop.f32.mrb[0].mxu0
      %v3869 = vadd.f32 %v697, %v3868
      %v3870 = vpop.f32.mrb[0].mxu0
      %3871 = vmatprep.mubr.bf16.mxu0 0
      %3872 = vmatmul.mubr.bf16.gmra.mrb[0].mxu0 %v2398
      %v3873 = vpop.f32.mrb[0].mxu0
      %v3874 = vadd.f32 %v697, %v3873
      %v3875 = vpop.f32.mrb[0].mxu0
      %v3876 = vpop.f32.mrb[0].mxu0
      %v3877 = vadd.f32 %v697, %v3876
      %v3878 = vpop.f32.mrb[0].mxu0
      %3879 = vmatprep.mubr.bf16.mxu0 0
      %3880 = vmatmul.mubr.bf16.gmra.mrb[0].mxu0 %v2401
      %v3881 = vpop.f32.mrb[0].mxu0
      %v3882 = vadd.f32 %v697, %v3881
      %v3883 = vpop.f32.mrb[0].mxu0
      %v3884 = vpop.f32.mrb[0].mxu0
      %v3885 = vadd.f32 %v697, %v3884
      %v3886 = vpop.f32.mrb[0].mxu0
      %3887 = vmatprep.mubr.bf16.mxu0 0
      %3888 = vmatmul.mubr.bf16.gmra.mrb[0].mxu0 %v2404
      %v3889 = vpop.f32.mrb[0].mxu0
      %v3890 = vadd.f32 %v697, %v3889
      %v3891 = vpop.f32.mrb[0].mxu0
      %v3892 = vpop.f32.mrb[0].mxu0
      %v3893 = vadd.f32 %v697, %v3892
      %v3894 = vpop.f32.mrb[0].mxu0
      %3895 = vmatprep.mubr.bf16.mxu0 0
      %3896 = vmatmul.mubr.bf16.gmra.mrb[0].mxu0 %v2407
      %v3897 = vpop.f32.mrb[0].mxu0
      %v3898 = vadd.f32 %v697, %v3897
      %v3899 = vpop.f32.mrb[0].mxu0
      %v3900 = vpop.f32.mrb[0].mxu0
      %v3901 = vadd.f32 %v697, %v3900
      %v3902 = vpop.f32.mrb[0].mxu0
      %3903 = vmatprep.mubr.bf16.mxu0 0
      %3904 = vmatmul.mubr.bf16.gmra.mrb[0].mxu0 %v2410
      %v3905 = vpop.f32.mrb[0].mxu0
      %v3906 = vadd.f32 %v697, %v3905
      %v3907 = vpop.f32.mrb[0].mxu0
      %v3908 = vpop.f32.mrb[0].mxu0
      %v3909 = vadd.f32 %v697, %v3908
      %v3910 = vpop.f32.mrb[0].mxu0
      %3911 = vmatprep.mubr.bf16.mxu0 0
      %3912 = vmatmul.mubr.bf16.gmra.mrb[0].mxu0 %v2413
      %v3913 = vpop.f32.mrb[0].mxu0
      %v3914 = vadd.f32 %v697, %v3913
      %v3915 = vpop.f32.mrb[0].mxu0
      %v3916 = vpop.f32.mrb[0].mxu0
      %v3917 = vadd.f32 %v697, %v3916
      %v3918 = vpop.f32.mrb[0].mxu0
      %3919 = vmatprep.mubr.bf16.mxu0 0
      %3920 = vmatmul.mubr.bf16.gmra.mrb[0].mxu0 %v2416
      %v3921 = vpop.f32.mrb[0].mxu0
      %v3922 = vadd.f32 %v697, %v3921
      %v3923 = vpop.f32.mrb[0].mxu0
      %v3924 = vpop.f32.mrb[0].mxu0
      %v3925 = vadd.f32 %v697, %v3924
      %v3926 = vpop.f32.mrb[0].mxu0
      %3927 = vmatprep.mubr.bf16.mxu0 0
      %3928 = vmatmul.mubr.bf16.gmra.mrb[0].mxu0 %v2419
      %v3929 = vpop.f32.mrb[0].mxu0
      %v3930 = vadd.f32 %v697, %v3929
      %v3931 = vpop.f32.mrb[0].mxu0
      %v3932 = vpop.f32.mrb[0].mxu0
      %v3933 = vadd.f32 %v697, %v3932
      %v3934 = vpop.f32.mrb[0].mxu0
      %3935 = vmatprep.mubr.bf16.mxu0 0
      %3936 = vmatmul.mubr.bf16.gmra.mrb[0].mxu0 %v2422
      %v3937 = vpop.f32.mrb[0].mxu0
      %v3938 = vadd.f32 %v697, %v3937
      %v3939 = vpop.f32.mrb[0].mxu0
      %v3940 = vpop.f32.mrb[0].mxu0
      %v3941 = vadd.f32 %v697, %v3940
      %v3942 = vpop.f32.mrb[0].mxu0
      %3943 = vmatprep.mubr.bf16.mxu0 0
      %3944 = vmatmul.mubr.bf16.gmra.mrb[0].mxu0 %v2425
      %v3945 = vpop.f32.mrb[0].mxu0
      %v3946 = vadd.f32 %v697, %v3945
      %v3947 = vpop.f32.mrb[0].mxu0
      %v3948 = vpop.f32.mrb[0].mxu0
      %v3949 = vadd.f32 %v697, %v3948
      %v3950 = vpop.f32.mrb[0].mxu0
      %3951 = vmatprep.mubr.bf16.mxu0 0
      %3952 = vmatmul.mubr.bf16.gmra.mrb[0].mxu0 %v2428
      %v3953 = vpop.f32.mrb[0].mxu0
      %v3954 = vadd.f32 %v697, %v3953
      %v3955 = vpop.f32.mrb[0].mxu0
      %v3956 = vpop.f32.mrb[0].mxu0
      %v3957 = vadd.f32 %v697, %v3956
      %v3958 = vpop.f32.mrb[0].mxu0
      %3959 = vmatprep.mubr.bf16.mxu0 0
      %3960 = vmatmul.mubr.bf16.gmra.mrb[0].mxu0 %v2431
      %v3961 = vpop.f32.mrb[0].mxu0
      %v3962 = vadd.f32 %v697, %v3961
      %v3963 = vpop.f32.mrb[0].mxu0
      %v3964 = vpop.f32.mrb[0].mxu0
      %v3965 = vadd.f32 %v697, %v3964
      %v3966 = vpop.f32.mrb[0].mxu0
      %3967 = vmatprep.mubr.bf16.mxu0 0
      %3968 = vmatmul.mubr.bf16.gmra.mrb[0].mxu0 %v2434
      %v3969 = vpop.f32.mrb[0].mxu0
      %v3970 = vadd.f32 %v697, %v3969
      %v3971 = vpop.f32.mrb[0].mxu0
      %v3972 = vpop.f32.mrb[0].mxu0
      %v3973 = vadd.f32 %v697, %v3972
      %v3974 = vpop.f32.mrb[0].mxu0
      %3975 = vmatprep.mubr.bf16.mxu0 0
      %3976 = vmatmul.mubr.bf16.gmra.mrb[0].mxu0 %v2437
      %v3977 = vpop.f32.mrb[0].mxu0
      %v3978 = vadd.f32 %v697, %v3977
      %v3979 = vpop.f32.mrb[0].mxu0
      %v3980 = vpop.f32.mrb[0].mxu0
      %v3981 = vadd.f32 %v697, %v3980
      %v3982 = vpop.f32.mrb[0].mxu0
      %3983 = vmatprep.mubr.bf16.mxu0 0
      %3984 = vmatmul.mubr.bf16.gmra.mrb[0].mxu0 %v2440
      %v3985 = vpop.f32.mrb[0].mxu0
      %v3986 = vadd.f32 %v697, %v3985
      %v3987 = vpop.f32.mrb[0].mxu0
      %v3988 = vpop.f32.mrb[0].mxu0
      %v3989 = vadd.f32 %v697, %v3988
      %v3990 = vpop.f32.mrb[0].mxu0
      %3991 = vmatprep.mubr.bf16.mxu0 0
      %3992 = vmatmul.mubr.bf16.gmra.mrb[0].mxu0 %v2443
      %v3993 = vpop.f32.mrb[0].mxu0
      %v3994 = vadd.f32 %v697, %v3993
      %v3995 = vpop.f32.mrb[0].mxu0
      %v3996 = vpop.f32.mrb[0].mxu0
      %v3997 = vadd.f32 %v697, %v3996
      %v3998 = vpop.f32.mrb[0].mxu0
      %3999 = vmatprep.mubr.bf16.mxu0 0
      %4000 = vmatmul.mubr.bf16.gmra.mrb[0].mxu0 %v2446
      %v4001 = vpop.f32.mrb[0].mxu0
      %v4002 = vadd.f32 %v697, %v4001
      %v4003 = vpop.f32.mrb[0].mxu0
      %v4004 = vpop.f32.mrb[0].mxu0
      %v4005 = vadd.f32 %v697, %v4004
      %v4006 = vpop.f32.mrb[0].mxu0
      %4007 = vmatprep.mubr.bf16.mxu0 0
      %4008 = vmatmul.mubr.bf16.gmra.mrb[0].mxu0 %v2449
      %v4009 = vpop.f32.mrb[0].mxu0
      %v4010 = vadd.f32 %v697, %v4009
      %v4011 = vpop.f32.mrb[0].mxu0
      %v4012 = vpop.f32.mrb[0].mxu0
      %v4013 = vadd.f32 %v697, %v4012
      %v4014 = vpop.f32.mrb[0].mxu0
      %4015 = vmatprep.mubr.bf16.mxu0 0
      %4016 = vmatmul.mubr.bf16.gmra.mrb[0].mxu0 %v2452
      %v4017 = vpop.f32.mrb[0].mxu0
      %v4018 = vadd.f32 %v697, %v4017
      %v4019 = vpop.f32.mrb[0].mxu0
      %v4020 = vpop.f32.mrb[0].mxu0
      %v4021 = vadd.f32 %v697, %v4020
      %v4022 = vpop.f32.mrb[0].mxu0
      %4023 = vmatprep.mubr.bf16.mxu0 0
      %4024 = vmatmul.mubr.bf16.gmra.mrb[0].mxu0 %v2455
      %v4025 = vpop.f32.mrb[0].mxu0
      %v4026 = vadd.f32 %v697, %v4025
      %v4027 = vpop.f32.mrb[0].mxu0
      %v4028 = vpop.f32.mrb[0].mxu0
      %v4029 = vadd.f32 %v697, %v4028
      %v4030 = vpop.f32.mrb[0].mxu0
      %4031 = vmatprep.mubr.bf16.mxu0 0
      %4032 = vmatmul.mubr.bf16.gmra.mrb[0].mxu0 %v2458
      %v4033 = vpop.f32.mrb[0].mxu0
      %v4034 = vadd.f32 %v697, %v4033
      %v4035 = vpop.f32.mrb[0].mxu0
      %v4036 = vpop.f32.mrb[0].mxu0
      %v4037 = vadd.f32 %v697, %v4036
      %v4038 = vpop.f32.mrb[0].mxu0
      %4039 = vmatprep.mubr.bf16.mxu0 0
      %4040 = vmatmul.mubr.bf16.gmra.mrb[0].mxu0 %v2461
      %v4041 = vpop.f32.mrb[0].mxu0
      %v4042 = vadd.f32 %v697, %v4041
      %v4043 = vpop.f32.mrb[0].mxu0
      %v4044 = vpop.f32.mrb[0].mxu0
      %v4045 = vadd.f32 %v697, %v4044
      %v4046 = vpop.f32.mrb[0].mxu0
      %4047 = vmatprep.mubr.bf16.mxu0 0
      %4048 = vmatmul.mubr.bf16.gmra.mrb[0].mxu0 %v2464
      %v4049 = vpop.f32.mrb[0].mxu0
      %v4050 = vadd.f32 %v697, %v4049
      %v4051 = vpop.f32.mrb[0].mxu0
      %v4052 = vpop.f32.mrb[0].mxu0
      %v4053 = vadd.f32 %v697, %v4052
      %v4054 = vpop.f32.mrb[0].mxu0
      %4055 = vmatprep.mubr.bf16.mxu0 0
      %4056 = vmatmul.mubr.bf16.gmra.mrb[0].mxu0 %v2467
      %v4057 = vpop.f32.mrb[0].mxu0
      %v4058 = vadd.f32 %v697, %v4057
      %v4059 = vpop.f32.mrb[0].mxu0
      %v4060 = vpop.f32.mrb[0].mxu0
      %v4061 = vadd.f32 %v697, %v4060
      %v4062 = vpop.f32.mrb[0].mxu0
      %4063 = vmatprep.mubr.bf16.mxu0 0
      %4064 = vmatmul.mubr.bf16.gmra.mrb[0].mxu0 %v2470
      %v4065 = vpop.f32.mrb[0].mxu0
      %v4066 = vadd.f32 %v697, %v4065
      %v4067 = vpop.f32.mrb[0].mxu0
      %v4068 = vpop.f32.mrb[0].mxu0
      %v4069 = vadd.f32 %v697, %v4068
      %v4070 = vpop.f32.mrb[0].mxu0
      %4071 = vmatprep.mubr.bf16.mxu0 0
      %4072 = vmatmul.mubr.bf16.gmra.mrb[0].mxu0 %v2473
      %v4073 = vpop.f32.mrb[0].mxu0
      %v4074 = vadd.f32 %v697, %v4073
      %v4075 = vpop.f32.mrb[0].mxu0
      %v4076 = vpop.f32.mrb[0].mxu0
      %v4077 = vadd.f32 %v697, %v4076
      %v4078 = vpop.f32.mrb[0].mxu0
      %4079 = vmatprep.mubr.bf16.mxu0 0
      %4080 = vmatmul.mubr.bf16.gmra.mrb[0].mxu0 %v2476
      %v4081 = vpop.f32.mrb[0].mxu0
      %v4082 = vadd.f32 %v697, %v4081
      %v4083 = vpop.f32.mrb[0].mxu0
      %v4084 = vpop.f32.mrb[0].mxu0
      %v4085 = vadd.f32 %v697, %v4084
      %v4086 = vpop.f32.mrb[0].mxu0
      %4087 = vmatprep.mubr.bf16.mxu0 0
      %4088 = vmatmul.mubr.bf16.gmra.mrb[0].mxu0 %v2479
      %v4089 = vpop.f32.mrb[0].mxu0
      %v4090 = vadd.f32 %v697, %v4089
      %v4091 = vpop.f32.mrb[0].mxu0
      %v4092 = vpop.f32.mrb[0].mxu0
      %v4093 = vadd.f32 %v697, %v4092
      %v4094 = vpop.f32.mrb[0].mxu0
      %4095 = vmatprep.mubr.bf16.mxu0 0
      %4096 = vmatmul.mubr.bf16.gmra.mrb[0].mxu0 %v2482
      %v4097 = vpop.f32.mrb[0].mxu0
      %v4098 = vadd.f32 %v697, %v4097
      %v4099 = vpop.f32.mrb[0].mxu0
      %v4100 = vpop.f32.mrb[0].mxu0
      %v4101 = vadd.f32 %v697, %v4100
      %v4102 = vpop.f32.mrb[0].mxu0
      %4103 = vmatprep.mubr.bf16.mxu0 0
      %4104 = vmatmul.mubr.bf16.gmra.mrb[0].mxu0 %v2485
      %v4105 = vpop.f32.mrb[0].mxu0
      %v4106 = vadd.f32 %v697, %v4105
      %v4107 = vpop.f32.mrb[0].mxu0
      %v4108 = vpop.f32.mrb[0].mxu0
      %v4109 = vadd.f32 %v697, %v4108
      %v4110 = vpop.f32.mrb[0].mxu0
      %4111 = vmatprep.mubr.bf16.mxu0 0
      %4112 = vmatmul.mubr.bf16.gmra.mrb[0].mxu0 %v2488
      %v4113 = vpop.f32.mrb[0].mxu0
      %v4114 = vadd.f32 %v697, %v4113
      %v4115 = vpop.f32.mrb[0].mxu0
      %v4116 = vpop.f32.mrb[0].mxu0
      %v4117 = vadd.f32 %v697, %v4116
      %v4118 = vpop.f32.mrb[0].mxu0
      %4119 = vmatprep.mubr.bf16.mxu0 0
      %4120 = vmatmul.mubr.bf16.gmra.mrb[0].mxu0 %v2491
      %v4121 = vpop.f32.mrb[0].mxu0
      %v4122 = vadd.f32 %v697, %v4121
      %v4123 = vpop.f32.mrb[0].mxu0
      %v4124 = vpop.f32.mrb[0].mxu0
      %v4125 = vadd.f32 %v697, %v4124
      %v4126 = vpop.f32.mrb[0].mxu0
      %4127 = vmatprep.mubr.bf16.mxu0 0
      %4128 = vmatmul.mubr.bf16.gmra.mrb[0].mxu0 %v2494
      %v4129 = vpop.f32.mrb[0].mxu0
      %v4130 = vadd.f32 %v697, %v4129
      %v4131 = vpop.f32.mrb[0].mxu0
      %v4132 = vpop.f32.mrb[0].mxu0
      %v4133 = vadd.f32 %v697, %v4132
      %v4134 = vpop.f32.mrb[0].mxu0
      %4135 = vmatprep.mubr.bf16.mxu0 0
      %4136 = vmatmul.mubr.bf16.gmra.mrb[0].mxu0 %v2497
      %v4137 = vpop.f32.mrb[0].mxu0
      %v4138 = vadd.f32 %v697, %v4137
      %v4139 = vpop.f32.mrb[0].mxu0
      %v4140 = vpop.f32.mrb[0].mxu0
      %v4141 = vadd.f32 %v697, %v4140
      %v4142 = vpop.f32.mrb[0].mxu0
      %4143 = vmatprep.mubr.bf16.mxu0 0
      %4144 = vmatmul.mubr.bf16.gmra.mrb[0].mxu0 %v2500
      %v4145 = vpop.f32.mrb[0].mxu0
      %v4146 = vadd.f32 %v697, %v4145
      %v4147 = vpop.f32.mrb[0].mxu0
      %v4148 = vpop.f32.mrb[0].mxu0
      %v4149 = vadd.f32 %v697, %v4148
      %v4150 = vpop.f32.mrb[0].mxu0
      %4151 = vmatprep.mubr.bf16.mxu0 0
      %4152 = vmatmul.mubr.bf16.gmra.mrb[0].mxu0 %v2503
      %v4153 = vpop.f32.mrb[0].mxu0
      %v4154 = vadd.f32 %v697, %v4153
      %v4155 = vpop.f32.mrb[0].mxu0
      %v4156 = vpop.f32.mrb[0].mxu0
      %v4157 = vadd.f32 %v697, %v4156
      %v4158 = vpop.f32.mrb[0].mxu0
      %4159 = vmatprep.mubr.bf16.mxu0 0
      %4160 = vmatmul.mubr.bf16.gmra.mrb[0].mxu0 %v2506
      %v4161 = vpop.f32.mrb[0].mxu0
      %v4162 = vadd.f32 %v697, %v4161
      %v4163 = vpop.f32.mrb[0].mxu0
      %v4164 = vpop.f32.mrb[0].mxu0
      %v4165 = vadd.f32 %v697, %v4164
      %v4166 = vpop.f32.mrb[0].mxu0
      %4167 = vmatprep.mubr.bf16.mxu0 0
      %4168 = vmatmul.mubr.bf16.gmra.mrb[0].mxu0 %v2509
      %v4169 = vpop.f32.mrb[0].mxu0
      %v4170 = vadd.f32 %v697, %v4169
      %v4171 = vpop.f32.mrb[0].mxu0
      %v4172 = vpop.f32.mrb[0].mxu0
      %v4173 = vadd.f32 %v697, %v4172
      %v4174 = vpop.f32.mrb[0].mxu0
      %4175 = vmatprep.mubr.bf16.mxu0 0
      %4176 = vmatmul.mubr.bf16.gmra.mrb[0].mxu0 %v2512
      %v4177 = vpop.f32.mrb[0].mxu0
      %v4178 = vadd.f32 %v697, %v4177
      %v4179 = vpop.f32.mrb[0].mxu0
      %v4180 = vpop.f32.mrb[0].mxu0
      %v4181 = vadd.f32 %v697, %v4180
      %v4182 = vpop.f32.mrb[0].mxu0
      %4183 = vmatprep.mubr.bf16.mxu0 0
      %4184 = vmatmul.mubr.bf16.gmra.mrb[0].mxu0 %v2515
      %v4185 = vpop.f32.mrb[0].mxu0
      %v4186 = vadd.f32 %v697, %v4185
      %v4187 = vpop.f32.mrb[0].mxu0
      %v4188 = vpop.f32.mrb[0].mxu0
      %v4189 = vadd.f32 %v697, %v4188
      %v4190 = vpop.f32.mrb[0].mxu0
      %4191 = vmatprep.mubr.bf16.mxu0 0
      %4192 = vmatmul.mubr.bf16.gmra.mrb[0].mxu0 %v2518
      %v4193 = vpop.f32.mrb[0].mxu0
      %v4194 = vadd.f32 %v697, %v4193
      %v4195 = vpop.f32.mrb[0].mxu0
      %v4196 = vpop.f32.mrb[0].mxu0
      %v4197 = vadd.f32 %v697, %v4196
      %v4198 = vpop.f32.mrb[0].mxu0
      %4199 = vmatprep.mubr.bf16.mxu0 0
      %4200 = vmatmul.mubr.bf16.gmra.mrb[0].mxu0 %v2521
      %v4201 = vpop.f32.mrb[0].mxu0
      %v4202 = vadd.f32 %v697, %v4201
      %v4203 = vpop.f32.mrb[0].mxu0
      %v4204 = vpop.f32.mrb[0].mxu0
      %v4205 = vadd.f32 %v697, %v4204
      %v4206 = vpop.f32.mrb[0].mxu0
      %4207 = vmatprep.mubr.bf16.mxu0 0
      %4208 = vmatmul.mubr.bf16.gmra.mrb[0].mxu0 %v2524
      %v4209 = vpop.f32.mrb[0].mxu0
      %v4210 = vadd.f32 %v697, %v4209
      %v4211 = vpop.f32.mrb[0].mxu0
      %v4212 = vpop.f32.mrb[0].mxu0
      %v4213 = vadd.f32 %v697, %v4212
      %v4214 = vpop.f32.mrb[0].mxu0
      %4215 = vmatprep.mubr.bf16.mxu0 0
      %4216 = vmatmul.mubr.bf16.gmra.mrb[0].mxu0 %v2527
      %v4217 = vpop.f32.mrb[0].mxu0
      %v4218 = vadd.f32 %v697, %v4217
      %v4219 = vpop.f32.mrb[0].mxu0
      %v4220 = vpop.f32.mrb[0].mxu0
      %v4221 = vadd.f32 %v697, %v4220
      %v4222 = vpop.f32.mrb[0].mxu0
      %4223 = vmatprep.mubr.bf16.mxu0 0
      %4224 = vmatmul.mubr.bf16.gmra.mrb[0].mxu0 %v2530
      %v4225 = vpop.f32.mrb[0].mxu0
      %v4226 = vadd.f32 %v697, %v4225
      %v4227 = vpop.f32.mrb[0].mxu0
      %v4228 = vpop.f32.mrb[0].mxu0
      %v4229 = vadd.f32 %v697, %v4228
      %v4230 = vpop.f32.mrb[0].mxu0
      %4231 = vmatprep.mubr.bf16.mxu0 0
      %4232 = vmatmul.mubr.bf16.gmra.mrb[0].mxu0 %v2533
      %v4233 = vpop.f32.mrb[0].mxu0
      %v4234 = vadd.f32 %v697, %v4233
      %v4235 = vpop.f32.mrb[0].mxu0
      %v4236 = vpop.f32.mrb[0].mxu0
      %v4237 = vadd.f32 %v697, %v4236
      %v4238 = vpop.f32.mrb[0].mxu0
      %4239 = vmatprep.mubr.bf16.mxu0 0
      %4240 = vmatmul.mubr.bf16.gmra.mrb[0].mxu0 %v2536
      %v4241 = vpop.f32.mrb[0].mxu0
      %v4242 = vadd.f32 %v697, %v4241
      %v4243 = vpop.f32.mrb[0].mxu0
      %v4244 = vpop.f32.mrb[0].mxu0
      %v4245 = vadd.f32 %v697, %v4244
      %v4246 = vpop.f32.mrb[0].mxu0
      %4247 = vmatprep.mubr.bf16.mxu0 0
      %4248 = vmatmul.mubr.bf16.gmra.mrb[0].mxu0 %v2539
      %v4249 = vpop.f32.mrb[0].mxu0
      %v4250 = vadd.f32 %v697, %v4249
      %v4251 = vpop.f32.mrb[0].mxu0
      %v4252 = vpop.f32.mrb[0].mxu0
      %v4253 = vadd.f32 %v697, %v4252
      %v4254 = vpop.f32.mrb[0].mxu0
      %4255 = vmatprep.mubr.bf16.mxu0 0
      %4256 = vmatmul.mubr.bf16.gmra.mrb[0].mxu0 %v2542
      %v4257 = vpop.f32.mrb[0].mxu0
      %v4258 = vadd.f32 %v697, %v4257
      %v4259 = vpop.f32.mrb[0].mxu0
      %v4260 = vpop.f32.mrb[0].mxu0
      %v4261 = vadd.f32 %v697, %v4260
      %v4262 = vpop.f32.mrb[0].mxu0
      %4263 = vmatprep.mubr.bf16.mxu0 0
      %4264 = vmatmul.mubr.bf16.gmra.mrb[0].mxu0 %v2545
      %v4265 = vpop.f32.mrb[0].mxu0
      %v4266 = vadd.f32 %v697, %v4265
      %v4267 = vpop.f32.mrb[0].mxu0
      %v4268 = vpop.f32.mrb[0].mxu0
      %v4269 = vadd.f32 %v697, %v4268
      %v4270 = vpop.f32.mrb[0].mxu0
      %4271 = vmatprep.mubr.bf16.mxu0 0
      %4272 = vmatmul.mubr.bf16.gmra.mrb[0].mxu0 %v2548
      %v4273 = vpop.f32.mrb[0].mxu0
      %v4274 = vadd.f32 %v697, %v4273
      %v4275 = vpop.f32.mrb[0].mxu0
      %v4276 = vpop.f32.mrb[0].mxu0
      %v4277 = vadd.f32 %v697, %v4276
      %v4278 = vpop.f32.mrb[0].mxu0
      %4279 = vmatprep.mubr.bf16.mxu0 0
      %4280 = vmatmul.mubr.bf16.gmra.mrb[0].mxu0 %v2551
      %v4281 = vpop.f32.mrb[0].mxu0
      %v4282 = vadd.f32 %v697, %v4281
      %v4283 = vpop.f32.mrb[0].mxu0
      %v4284 = vpop.f32.mrb[0].mxu0
      %v4285 = vadd.f32 %v697, %v4284
      %v4286 = vpop.f32.mrb[0].mxu0
      %4287 = vmatprep.mubr.bf16.mxu0 0
      %4288 = vmatmul.mubr.bf16.gmra.mrb[0].mxu0 %v2554
      %v4289 = vpop.f32.mrb[0].mxu0
      %v4290 = vadd.f32 %v697, %v4289
      %v4291 = vpop.f32.mrb[0].mxu0
      %v4292 = vpop.f32.mrb[0].mxu0
      %v4293 = vadd.f32 %v697, %v4292
      %v4294 = vpop.f32.mrb[0].mxu0
      %4295 = vmatprep.mubr.bf16.mxu0 0
      %4296 = vmatmul.mubr.bf16.gmra.mrb[0].mxu0 %v2557
      %v4297 = vpop.f32.mrb[0].mxu0
      %v4298 = vadd.f32 %v697, %v4297
      %v4299 = vpop.f32.mrb[0].mxu0
      %v4300 = vpop.f32.mrb[0].mxu0
      %v4301 = vadd.f32 %v697, %v4300
      %v4302 = vpop.f32.mrb[0].mxu0
      %4303 = vmatprep.mubr.bf16.mxu0 0
      %4304 = vmatmul.mubr.bf16.gmra.mrb[0].mxu0 %v2560
      %v4305 = vpop.f32.mrb[0].mxu0
      %v4306 = vadd.f32 %v697, %v4305
      %v4307 = vpop.f32.mrb[0].mxu0
      %v4308 = vpop.f32.mrb[0].mxu0
      %v4309 = vadd.f32 %v697, %v4308
      %v4310 = vpop.f32.mrb[0].mxu0
      %4311 = vmatprep.mubr.bf16.mxu0 0
      %4312 = vmatmul.mubr.bf16.gmra.mrb[0].mxu0 %v2563
      %v4313 = vpop.f32.mrb[0].mxu0
      %v4314 = vadd.f32 %v697, %v4313
      %v4315 = vpop.f32.mrb[0].mxu0
      %v4316 = vpop.f32.mrb[0].mxu0
      %v4317 = vadd.f32 %v697, %v4316
      %v4318 = vpop.f32.mrb[0].mxu0
      %4319 = vmatprep.mubr.bf16.mxu0 0
      %4320 = vmatmul.mubr.bf16.gmra.mrb[0].mxu0 %v2566
      %v4321 = vpop.f32.mrb[0].mxu0
      %v4322 = vadd.f32 %v697, %v4321
      %v4323 = vpop.f32.mrb[0].mxu0
      %v4324 = vpop.f32.mrb[0].mxu0
      %v4325 = vadd.f32 %v697, %v4324
      %v4326 = vpop.f32.mrb[0].mxu0
      %4327 = vmatprep.mubr.bf16.mxu0 0
      %4328 = vmatmul.mubr.bf16.gmra.mrb[0].mxu0 %v2569
      %v4329 = vpop.f32.mrb[0].mxu0
      %v4330 = vadd.f32 %v697, %v4329
      %v4331 = vpop.f32.mrb[0].mxu0
      %v4332 = vpop.f32.mrb[0].mxu0
      %v4333 = vadd.f32 %v697, %v4332
      %v4334 = vpop.f32.mrb[0].mxu0
      %4335 = vmatprep.mubr.bf16.mxu0 0
      %4336 = vmatmul.mubr.bf16.gmra.mrb[0].mxu0 %v2572
      %v4337 = vpop.f32.mrb[0].mxu0
      %v4338 = vadd.f32 %v697, %v4337
      %v4339 = vpop.f32.mrb[0].mxu0
      %v4340 = vpop.f32.mrb[0].mxu0
      %v4341 = vadd.f32 %v697, %v4340
      %v4342 = vpop.f32.mrb[0].mxu0
      %4343 = vmatprep.mubr.bf16.mxu0 0
      %4344 = vmatmul.mubr.bf16.gmra.mrb[0].mxu0 %v2575
      %v4345 = vpop.f32.mrb[0].mxu0
      %v4346 = vadd.f32 %v697, %v4345
      %v4347 = vpop.f32.mrb[0].mxu0
      %v4348 = vpop.f32.mrb[0].mxu0
      %v4349 = vadd.f32 %v697, %v4348
      %v4350 = vpop.f32.mrb[0].mxu0
      %4351 = vmatprep.mubr.bf16.mxu0 0
      %4352 = vmatmul.mubr.bf16.gmra.mrb[0].mxu0 %v2578
      %v4353 = vpop.f32.mrb[0].mxu0
      %v4354 = vadd.f32 %v697, %v4353
      %v4355 = vpop.f32.mrb[0].mxu0
      %v4356 = vpop.f32.mrb[0].mxu0
      %v4357 = vadd.f32 %v697, %v4356
      %v4358 = vpop.f32.mrb[0].mxu0
      %4359 = vmatprep.mubr.bf16.mxu0 0
      %4360 = vmatmul.mubr.bf16.gmra.mrb[0].mxu0 %v2581
      %v4361 = vpop.f32.mrb[0].mxu0
      %v4362 = vadd.f32 %v697, %v4361
      %v4363 = vpop.f32.mrb[0].mxu0
      %v4364 = vpop.f32.mrb[0].mxu0
      %v4365 = vadd.f32 %v697, %v4364
      %v4366 = vpop.f32.mrb[0].mxu0
      %4367 = vmatprep.mubr.bf16.mxu0 0
      %4368 = vmatmul.mubr.bf16.gmra.mrb[0].mxu0 %v2584
      %v4369 = vpop.f32.mrb[0].mxu0
      %v4370 = vadd.f32 %v697, %v4369
      %v4371 = vpop.f32.mrb[0].mxu0
      %v4372 = vpop.f32.mrb[0].mxu0
      %v4373 = vadd.f32 %v697, %v4372
      %v4374 = vpop.f32.mrb[0].mxu0
      %4375 = vmatprep.mubr.bf16.mxu0 0
      %4376 = vmatmul.mubr.bf16.gmra.mrb[0].mxu0 %v2587
      %v4377 = vpop.f32.mrb[0].mxu0
      %v4378 = vadd.f32 %v697, %v4377
      %v4379 = vpop.f32.mrb[0].mxu0
      %v4380 = vpop.f32.mrb[0].mxu0
      %v4381 = vadd.f32 %v697, %v4380
      %v4382 = vpop.f32.mrb[0].mxu0
      %4383 = vmatprep.mubr.bf16.mxu0 0
      %4384 = vmatmul.mubr.bf16.gmra.mrb[0].mxu0 %v2590
      %v4385 = vpop.f32.mrb[0].mxu0
      %v4386 = vadd.f32 %v697, %v4385
      %v4387 = vpop.f32.mrb[0].mxu0
      %v4388 = vpop.f32.mrb[0].mxu0
      %v4389 = vadd.f32 %v697, %v4388
      %v4390 = vpop.f32.mrb[0].mxu0
      %4391 = vmatprep.mubr.bf16.mxu0 0
      %4392 = vmatmul.mubr.bf16.gmra.mrb[0].mxu0 %v2593
      %v4393 = vpop.f32.mrb[0].mxu0
      %v4394 = vadd.f32 %v697, %v4393
      %v4395 = vpop.f32.mrb[0].mxu0
      %v4396 = vpop.f32.mrb[0].mxu0
      %v4397 = vadd.f32 %v697, %v4396
      %v4398 = vpop.f32.mrb[0].mxu0
      %4399 = vmatprep.mubr.bf16.mxu0 0
      %4400 = vmatmul.mubr.bf16.gmra.mrb[0].mxu0 %v2596
      %v4401 = vpop.f32.mrb[0].mxu0
      %v4402 = vadd.f32 %v697, %v4401
      %v4403 = vpop.f32.mrb[0].mxu0
      %v4404 = vpop.f32.mrb[0].mxu0
      %v4405 = vadd.f32 %v697, %v4404
      %v4406 = vpop.f32.mrb[0].mxu0
      %4407 = vmatprep.mubr.bf16.mxu0 0
      %4408 = vmatmul.mubr.bf16.gmra.mrb[0].mxu0 %v2599
      %v4409 = vpop.f32.mrb[0].mxu0
      %v4410 = vadd.f32 %v697, %v4409
      %v4411 = vpop.f32.mrb[0].mxu0
      %v4412 = vpop.f32.mrb[0].mxu0
      %v4413 = vadd.f32 %v697, %v4412
      %v4414 = vpop.f32.mrb[0].mxu0
      %4415 = vmatprep.mubr.bf16.mxu0 0
      %4416 = vmatmul.mubr.bf16.gmra.mrb[0].mxu0 %v2602
      %v4417 = vpop.f32.mrb[0].mxu0
      %v4418 = vadd.f32 %v697, %v4417
      %v4419 = vpop.f32.mrb[0].mxu0
      %v4420 = vpop.f32.mrb[0].mxu0
      %v4421 = vadd.f32 %v697, %v4420
      %v4422 = vpop.f32.mrb[0].mxu0
      %4423 = vmatprep.mubr.bf16.mxu0 0
      %4424 = vmatmul.mubr.bf16.gmra.mrb[0].mxu0 %v2605
      %v4425 = vpop.f32.mrb[0].mxu0
      %v4426 = vadd.f32 %v697, %v4425
      %v4427 = vpop.f32.mrb[0].mxu0
      %v4428 = vpop.f32.mrb[0].mxu0
      %v4429 = vadd.f32 %v697, %v4428
      %v4430 = vpop.f32.mrb[0].mxu0
      %4431 = vmatprep.mubr.bf16.mxu0 0
      %4432 = vmatmul.mubr.bf16.gmra.mrb[0].mxu0 %v2608
      %v4433 = vpop.f32.mrb[0].mxu0
      %v4434 = vadd.f32 %v697, %v4433
      %v4435 = vpop.f32.mrb[0].mxu0
      %v4436 = vpop.f32.mrb[0].mxu0
      %v4437 = vadd.f32 %v697, %v4436
      %v4438 = vpop.f32.mrb[0].mxu0
      %4439 = vmatprep.mubr.bf16.mxu0 0
      %4440 = vmatmul.mubr.bf16.gmra.mrb[0].mxu0 %v2611
      %v4441 = vpop.f32.mrb[0].mxu0
      %v4442 = vadd.f32 %v697, %v4441
      %v4443 = vpop.f32.mrb[0].mxu0
      %v4444 = vpop.f32.mrb[0].mxu0
      %v4445 = vadd.f32 %v697, %v4444
      %v4446 = vpop.f32.mrb[0].mxu0
      %4447 = vmatprep.mubr.bf16.mxu0 0
      %4448 = vmatmul.mubr.bf16.gmra.mrb[0].mxu0 %v2614
      %v4449 = vpop.f32.mrb[0].mxu0
      %v4450 = vadd.f32 %v697, %v4449
      %v4451 = vpop.f32.mrb[0].mxu0
      %v4452 = vpop.f32.mrb[0].mxu0
      %v4453 = vadd.f32 %v697, %v4452
      %v4454 = vpop.f32.mrb[0].mxu0
      %4455 = vmatprep.mubr.bf16.mxu0 0
      %4456 = vmatmul.mubr.bf16.gmra.mrb[0].mxu0 %v2617
      %v4457 = vpop.f32.mrb[0].mxu0
      %v4458 = vadd.f32 %v697, %v4457
      %v4459 = vpop.f32.mrb[0].mxu0
      %v4460 = vpop.f32.mrb[0].mxu0
      %v4461 = vadd.f32 %v697, %v4460
      %v4462 = vpop.f32.mrb[0].mxu0
      %4463 = vmatprep.mubr.bf16.mxu0 0
      %4464 = vmatmul.mubr.bf16.gmra.mrb[0].mxu0 %v2620
      %v4465 = vpop.f32.mrb[0].mxu0
      %v4466 = vadd.f32 %v697, %v4465
      %v4467 = vpop.f32.mrb[0].mxu0
      %v4468 = vpop.f32.mrb[0].mxu0
      %v4469 = vadd.f32 %v697, %v4468
      %v4470 = vpop.f32.mrb[0].mxu0
      %4471 = vmatprep.mubr.bf16.mxu0 0
      %4472 = vmatmul.mubr.bf16.gmra.mrb[0].mxu0 %v2623
      %v4473 = vpop.f32.mrb[0].mxu0
      %v4474 = vadd.f32 %v697, %v4473
      %v4475 = vpop.f32.mrb[0].mxu0
      %v4476 = vpop.f32.mrb[0].mxu0
      %v4477 = vadd.f32 %v697, %v4476
      %v4478 = vpop.f32.mrb[0].mxu0
      %4479 = vmatprep.mubr.bf16.mxu0 0
      %4480 = vmatmul.mubr.bf16.gmra.mrb[0].mxu0 %v2626
      %v4481 = vpop.f32.mrb[0].mxu0
      %v4482 = vadd.f32 %v697, %v4481
      %v4483 = vpop.f32.mrb[0].mxu0
      %v4484 = vpop.f32.mrb[0].mxu0
      %v4485 = vadd.f32 %v697, %v4484
      %v4486 = vpop.f32.mrb[0].mxu0
      %4487 = vmatprep.mubr.bf16.mxu0 0
      %4488 = vmatmul.mubr.bf16.gmra.mrb[0].mxu0 %v2629
      %v4489 = vpop.f32.mrb[0].mxu0
      %v4490 = vadd.f32 %v697, %v4489
      %v4491 = vpop.f32.mrb[0].mxu0
      %v4492 = vpop.f32.mrb[0].mxu0
      %v4493 = vadd.f32 %v697, %v4492
      %v4494 = vpop.f32.mrb[0].mxu0
      %4495 = vmatprep.mubr.bf16.mxu0 0
      %4496 = vmatmul.mubr.bf16.gmra.mrb[0].mxu0 %v2632
      %v4497 = vpop.f32.mrb[0].mxu0
      %v4498 = vadd.f32 %v697, %v4497
      %v4499 = vpop.f32.mrb[0].mxu0
      %v4500 = vpop.f32.mrb[0].mxu0
      %v4501 = vadd.f32 %v697, %v4500
      %v4502 = vpop.f32.mrb[0].mxu0
      %4503 = vmatprep.mubr.bf16.mxu0 0
      %4504 = vmatmul.mubr.bf16.gmra.mrb[0].mxu0 %v2635
      %v4505 = vpop.f32.mrb[0].mxu0
      %v4506 = vadd.f32 %v697, %v4505
      %v4507 = vpop.f32.mrb[0].mxu0
      %v4508 = vpop.f32.mrb[0].mxu0
      %v4509 = vadd.f32 %v697, %v4508
      %v4510 = vpop.f32.mrb[0].mxu0
      %4511 = vmatprep.mubr.bf16.mxu0 0
      %4512 = vmatmul.mubr.bf16.gmra.mrb[0].mxu0 %v2638
      %v4513 = vpop.f32.mrb[0].mxu0
      %v4514 = vadd.f32 %v697, %v4513
      %v4515 = vpop.f32.mrb[0].mxu0
      %v4516 = vpop.f32.mrb[0].mxu0
      %v4517 = vadd.f32 %v697, %v4516
      %v4518 = vpop.f32.mrb[0].mxu0
      %4519 = vmatprep.mubr.bf16.mxu0 0
      %4520 = vmatmul.mubr.bf16.gmra.mrb[0].mxu0 %v2641
      %v4521 = vpop.f32.mrb[0].mxu0
      %v4522 = vadd.f32 %v697, %v4521
      %v4523 = vpop.f32.mrb[0].mxu0
      %v4524 = vpop.f32.mrb[0].mxu0
      %v4525 = vadd.f32 %v697, %v4524
      %v4526 = vpop.f32.mrb[0].mxu0
      %4527 = vmatprep.mubr.bf16.mxu0 0
      %4528 = vmatmul.mubr.bf16.gmra.mrb[0].mxu0 %v2644
      %v4529 = vpop.f32.mrb[0].mxu0
      %v4530 = vadd.f32 %v697, %v4529
      %v4531 = vpop.f32.mrb[0].mxu0
      %v4532 = vpop.f32.mrb[0].mxu0
      %v4533 = vadd.f32 %v697, %v4532
      %v4534 = vpop.f32.mrb[0].mxu0
      %4535 = vmatprep.mubr.bf16.mxu0 0
      %4536 = vmatmul.mubr.bf16.gmra.mrb[0].mxu0 %v2647
      %v4537 = vpop.f32.mrb[0].mxu0
      %v4538 = vadd.f32 %v697, %v4537
      %v4539 = vpop.f32.mrb[0].mxu0
      %v4540 = vpop.f32.mrb[0].mxu0
      %v4541 = vadd.f32 %v697, %v4540
      %v4542 = vpop.f32.mrb[0].mxu0
      %4543 = vmatprep.mubr.bf16.mxu0 0
      %4544 = vmatmul.mubr.bf16.gmra.mrb[0].mxu0 %v2650
      %v4545 = vpop.f32.mrb[0].mxu0
      %v4546 = vadd.f32 %v697, %v4545
      %v4547 = vpop.f32.mrb[0].mxu0
      %v4548 = vpop.f32.mrb[0].mxu0
      %v4549 = vadd.f32 %v697, %v4548
      %v4550 = vpop.f32.mrb[0].mxu0
      %4551 = vmatprep.mubr.bf16.mxu0 0
      %4552 = vmatmul.mubr.bf16.gmra.mrb[0].mxu0 %v2653
      %v4553 = vpop.f32.mrb[0].mxu0
      %v4554 = vadd.f32 %v697, %v4553
      %v4555 = vpop.f32.mrb[0].mxu0
      %v4556 = vpop.f32.mrb[0].mxu0
      %v4557 = vadd.f32 %v697, %v4556
      %v4558 = vpop.f32.mrb[0].mxu0
      %4559 = vmatprep.mubr.bf16.mxu0 0
      %4560 = vmatmul.mubr.bf16.gmra.mrb[0].mxu0 %v2656
      %v4561 = vpop.f32.mrb[0].mxu0
      %v4562 = vadd.f32 %v697, %v4561
      %v4563 = vpop.f32.mrb[0].mxu0
      %v4564 = vpop.f32.mrb[0].mxu0
      %v4565 = vadd.f32 %v697, %v4564
      %v4566 = vpop.f32.mrb[0].mxu0
      %4567 = vmatprep.mubr.bf16.mxu0 0
      %4568 = vmatmul.mubr.bf16.gmra.mrb[0].mxu0 %v2659
      %v4569 = vpop.f32.mrb[0].mxu0
      %v4570 = vadd.f32 %v697, %v4569
      %v4571 = vpop.f32.mrb[0].mxu0
      %v4572 = vpop.f32.mrb[0].mxu0
      %v4573 = vadd.f32 %v697, %v4572
      %v4574 = vpop.f32.mrb[0].mxu0
      %4575 = vmatprep.mubr.bf16.mxu0 0
      %4576 = vmatmul.mubr.bf16.gmra.mrb[0].mxu0 %v2662
      %v4577 = vpop.f32.mrb[0].mxu0
      %v4578 = vadd.f32 %v697, %v4577
      %v4579 = vpop.f32.mrb[0].mxu0
      %v4580 = vpop.f32.mrb[0].mxu0
      %v4581 = vadd.f32 %v697, %v4580
      %v4582 = vpop.f32.mrb[0].mxu0
      %4583 = vmatprep.mubr.bf16.mxu0 0
      %4584 = vmatmul.mubr.bf16.gmra.mrb[0].mxu0 %v2665
      %v4585 = vpop.f32.mrb[0].mxu0
      %v4586 = vadd.f32 %v697, %v4585
      %v4587 = vpop.f32.mrb[0].mxu0
      %v4588 = vpop.f32.mrb[0].mxu0
      %v4589 = vadd.f32 %v697, %v4588
      %v4590 = vpop.f32.mrb[0].mxu0
      %4591 = vmatprep.mubr.bf16.mxu0 0
      %4592 = vmatmul.mubr.bf16.gmra.mrb[0].mxu0 %v2668
      %v4593 = vpop.f32.mrb[0].mxu0
      %v4594 = vadd.f32 %v697, %v4593
      %v4595 = vpop.f32.mrb[0].mxu0
      %v4596 = vpop.f32.mrb[0].mxu0
      %v4597 = vadd.f32 %v697, %v4596
      %v4598 = vpop.f32.mrb[0].mxu0
      %4599 = vmatprep.mubr.bf16.mxu0 0
      %4600 = vmatmul.mubr.bf16.gmra.mrb[0].mxu0 %v2671
      %v4601 = vpop.f32.mrb[0].mxu0
      %v4602 = vadd.f32 %v697, %v4601
      %v4603 = vpop.f32.mrb[0].mxu0
      %v4604 = vpop.f32.mrb[0].mxu0
      %v4605 = vadd.f32 %v697, %v4604
      %v4606 = vpop.f32.mrb[0].mxu0
      %4607 = vmatprep.mubr.bf16.mxu0 0
      %4608 = vmatmul.mubr.bf16.gmra.mrb[0].mxu0 %v2674
      %v4609 = vpop.f32.mrb[0].mxu0
      %v4610 = vadd.f32 %v697, %v4609
      %v4611 = vpop.f32.mrb[0].mxu0
      %v4612 = vpop.f32.mrb[0].mxu0
      %v4613 = vadd.f32 %v697, %v4612
      %v4614 = vpop.f32.mrb[0].mxu0
      %4615 = vmatprep.mubr.bf16.mxu0 0
      %4616 = vmatmul.mubr.bf16.gmra.mrb[0].mxu0 %v2677
      %v4617 = vpop.f32.mrb[0].mxu0
      %v4618 = vadd.f32 %v697, %v4617
      %v4619 = vpop.f32.mrb[0].mxu0
      %v4620 = vpop.f32.mrb[0].mxu0
      %v4621 = vadd.f32 %v697, %v4620
      %v4622 = vpop.f32.mrb[0].mxu0
      %4623 = vmatprep.mubr.bf16.mxu0 0
      %4624 = vmatmul.mubr.bf16.gmra.mrb[0].mxu0 %v2680
      %v4625 = vpop.f32.mrb[0].mxu0
      %v4626 = vadd.f32 %v697, %v4625
      %v4627 = vpop.f32.mrb[0].mxu0
      %v4628 = vpop.f32.mrb[0].mxu0
      %v4629 = vadd.f32 %v697, %v4628
      %v4630 = vpop.f32.mrb[0].mxu0
      %4631 = vmatprep.mubr.bf16.mxu0 0
      %4632 = vmatmul.mubr.bf16.gmra.mrb[0].mxu0 %v2683
      %v4633 = vpop.f32.mrb[0].mxu0
      %v4634 = vadd.f32 %v697, %v4633
      %v4635 = vpop.f32.mrb[0].mxu0
      %v4636 = vpop.f32.mrb[0].mxu0
      %v4637 = vadd.f32 %v697, %v4636
      %v4638 = vpop.f32.mrb[0].mxu0
      %4639 = vmatprep.mubr.bf16.mxu0 0
      %4640 = vmatmul.mubr.bf16.gmra.mrb[0].mxu0 %v2686
      %v4641 = vpop.f32.mrb[0].mxu0
      %v4642 = vadd.f32 %v697, %v4641
      %v4643 = vpop.f32.mrb[0].mxu0
      %v4644 = vpop.f32.mrb[0].mxu0
      %v4645 = vadd.f32 %v697, %v4644
      %v4646 = vpop.f32.mrb[0].mxu0
      %4647 = vmatprep.mubr.bf16.mxu0 0
      %4648 = vmatmul.mubr.bf16.gmra.mrb[0].mxu0 %v2689
      %v4649 = vpop.f32.mrb[0].mxu0
      %v4650 = vadd.f32 %v697, %v4649
      %v4651 = vpop.f32.mrb[0].mxu0
      %v4652 = vpop.f32.mrb[0].mxu0
      %v4653 = vadd.f32 %v697, %v4652
      %v4654 = vpop.f32.mrb[0].mxu0
      %4655 = vmatprep.mubr.bf16.mxu0 0
      %4656 = vmatmul.mubr.bf16.gmra.mrb[0].mxu0 %v2692
      %v4657 = vpop.f32.mrb[0].mxu0
      %v4658 = vadd.f32 %v697, %v4657
      %v4659 = vpop.f32.mrb[0].mxu0
      %v4660 = vpop.f32.mrb[0].mxu0
      %v4661 = vadd.f32 %v697, %v4660
      %v4662 = vpop.f32.mrb[0].mxu0
      %4663 = vmatprep.mubr.bf16.mxu0 0
      %4664 = vmatmul.mubr.bf16.gmra.mrb[0].mxu0 %v2695
      %v4665 = vpop.f32.mrb[0].mxu0
      %v4666 = vadd.f32 %v697, %v4665
      %v4667 = vpop.f32.mrb[0].mxu0
      %v4668 = vpop.f32.mrb[0].mxu0
      %v4669 = vadd.f32 %v697, %v4668
      %v4670 = vpop.f32.mrb[0].mxu0
      %4671 = vmatprep.mubr.bf16.mxu0 0
      %4672 = vmatmul.mubr.bf16.gmra.mrb[0].mxu0 %v2698
      %v4673 = vpop.f32.mrb[0].mxu0
      %v4674 = vadd.f32 %v697, %v4673
      %v4675 = vpop.f32.mrb[0].mxu0
      %v4676 = vpop.f32.mrb[0].mxu0
      %v4677 = vadd.f32 %v697, %v4676
      %v4678 = vpop.f32.mrb[0].mxu0
      %4679 = vmatprep.mubr.bf16.mxu0 0
      %4680 = vmatmul.mubr.bf16.gmra.mrb[0].mxu0 %v2701
      %v4681 = vpop.f32.mrb[0].mxu0
      %v4682 = vadd.f32 %v697, %v4681
      %v4683 = vpop.f32.mrb[0].mxu0
      %v4684 = vpop.f32.mrb[0].mxu0
      %v4685 = vadd.f32 %v697, %v4684
      %v4686 = vpop.f32.mrb[0].mxu0
      %4687 = vmatprep.mubr.bf16.mxu0 0
      %4688 = vmatmul.mubr.bf16.gmra.mrb[0].mxu0 %v2704
      %v4689 = vpop.f32.mrb[0].mxu0
      %v4690 = vadd.f32 %v697, %v4689
      %v4691 = vpop.f32.mrb[0].mxu0
      %v4692 = vpop.f32.mrb[0].mxu0
      %v4693 = vadd.f32 %v697, %v4692
      %v4694 = vpop.f32.mrb[0].mxu0
      %4695 = vmatprep.mubr.bf16.mxu0 0
      %4696 = vmatmul.mubr.bf16.gmra.mrb[0].mxu0 %v2707
      %v4697 = vpop.f32.mrb[0].mxu0
      %v4698 = vadd.f32 %v697, %v4697
      %v4699 = vpop.f32.mrb[0].mxu0
      %v4700 = vpop.f32.mrb[0].mxu0
      %v4701 = vadd.f32 %v697, %v4700
      %v4702 = vpop.f32.mrb[0].mxu0
      %4703 = vmatprep.mubr.bf16.mxu0 0
      %4704 = vmatmul.mubr.bf16.gmra.mrb[0].mxu0 %v2710
      %v4705 = vpop.f32.mrb[0].mxu0
      %v4706 = vadd.f32 %v697, %v4705
      %v4707 = vpop.f32.mrb[0].mxu0
      %v4708 = vpop.f32.mrb[0].mxu0
      %v4709 = vadd.f32 %v697, %v4708
      %v4710 = vpop.f32.mrb[0].mxu0
      %4711 = vmatprep.mubr.bf16.mxu0 0
      %4712 = vmatmul.mubr.bf16.gmra.mrb[0].mxu0 %v2713
      %v4713 = vpop.f32.mrb[0].mxu0
      %v4714 = vadd.f32 %v697, %v4713
      %v4715 = vpop.f32.mrb[0].mxu0
      %v4716 = vpop.f32.mrb[0].mxu0
      %v4717 = vadd.f32 %v697, %v4716
      %v4718 = vpop.f32.mrb[0].mxu0
      %4719 = vmatprep.mubr.bf16.mxu0 0
      %4720 = vmatmul.mubr.bf16.gmra.mrb[0].mxu0 %v2716
      %v4721 = vpop.f32.mrb[0].mxu0
      %v4722 = vadd.f32 %v697, %v4721
      %v4723 = vpop.f32.mrb[0].mxu0
      %v4724 = vpop.f32.mrb[0].mxu0
      %v4725 = vadd.f32 %v697, %v4724
      %v4726 = vpop.f32.mrb[0].mxu0
      %4727 = vmatprep.mubr.bf16.mxu0 0
      %4728 = vmatmul.mubr.bf16.gmra.mrb[0].mxu0 %v2719
      %v4729 = vpop.f32.mrb[0].mxu0
      %v4730 = vadd.f32 %v697, %v4729
      %v4731 = vpop.f32.mrb[0].mxu0
      %v4732 = vpop.f32.mrb[0].mxu0
      %v4733 = vadd.f32 %v697, %v4732
      %v4734 = vpop.f32.mrb[0].mxu0
      %4735 = vmatprep.mubr.bf16.mxu0 0
      %4736 = vmatmul.mubr.bf16.gmra.mrb[0].mxu0 %v2722
      %v4737 = vpop.f32.mrb[0].mxu0
      %v4738 = vadd.f32 %v697, %v4737
      %v4739 = vpop.f32.mrb[0].mxu0
      %v4740 = vpop.f32.mrb[0].mxu0
      %v4741 = vadd.f32 %v697, %v4740
      %v4742 = vpop.f32.mrb[0].mxu0
      %4743 = vmatprep.mubr.bf16.mxu0 0
      %4744 = vmatmul.mubr.bf16.gmra.mrb[0].mxu0 %v2725
      %v4745 = vpop.f32.mrb[0].mxu0
      %v4746 = vadd.f32 %v697, %v4745
      %v4747 = vpop.f32.mrb[0].mxu0
      %v4748 = vpop.f32.mrb[0].mxu0
      %v4749 = vadd.f32 %v697, %v4748
      %v4750 = vpop.f32.mrb[0].mxu0
      %4751 = vmatprep.mubr.bf16.mxu0 0
      %4752 = vmatmul.mubr.bf16.gmra.mrb[0].mxu0 %v2728
      %v4753 = vpop.f32.mrb[0].mxu0
      %v4754 = vadd.f32 %v697, %v4753
      %v4755 = vpop.f32.mrb[0].mxu0
      %v4756 = vpop.f32.mrb[0].mxu0
      %v4757 = vadd.f32 %v697, %v4756
      %v4758 = vpop.f32.mrb[0].mxu0
      %4759 = vmatprep.mubr.bf16.mxu0 0
      %4760 = vmatmul.mubr.bf16.gmra.mrb[0].mxu0 %v2731
      %v4761 = vpop.f32.mrb[0].mxu0
      %v4762 = vadd.f32 %v697, %v4761
      %v4763 = vpop.f32.mrb[0].mxu0
      %v4764 = vpop.f32.mrb[0].mxu0
      %v4765 = vadd.f32 %v697, %v4764
      %v4766 = vpop.f32.mrb[0].mxu0
      %4767 = vmatprep.mubr.bf16.mxu0 0
      %4768 = vmatmul.mubr.bf16.gmra.mrb[0].mxu0 %v2734
      %v4769 = vpop.f32.mrb[0].mxu0
      %v4770 = vadd.f32 %v697, %v4769
      %v4771 = vpop.f32.mrb[0].mxu0
      %v4772 = vpop.f32.mrb[0].mxu0
      %v4773 = vadd.f32 %v697, %v4772
      %v4774 = vpop.f32.mrb[0].mxu0
      %4775 = vmatprep.mubr.bf16.mxu0 0
      %4776 = vmatmul.mubr.bf16.gmra.mrb[0].mxu0 %v2737
      %v4777 = vpop.f32.mrb[0].mxu0
      %v4778 = vadd.f32 %v697, %v4777
      %v4779 = vpop.f32.mrb[0].mxu0
      %v4780 = vpop.f32.mrb[0].mxu0
      %v4781 = vadd.f32 %v697, %v4780
      %v4782 = vpop.f32.mrb[0].mxu0
      %4783 = vmatprep.mubr.bf16.mxu0 0
      %4784 = vmatmul.mubr.bf16.gmra.mrb[0].mxu0 %v2740
      %v4785 = vpop.f32.mrb[0].mxu0
      %v4786 = vadd.f32 %v697, %v4785
      %v4787 = vpop.f32.mrb[0].mxu0
      %v4788 = vpop.f32.mrb[0].mxu0
      %v4789 = vadd.f32 %v697, %v4788
      %v4790 = vpop.f32.mrb[0].mxu0
      %4791 = vmatprep.mubr.bf16.mxu0 0
      %4792 = vmatmul.mubr.bf16.gmra.mrb[0].mxu0 %v2743
      %v4793 = vpop.f32.mrb[0].mxu0
      %v4794 = vadd.f32 %v697, %v4793
      %v4795 = vpop.f32.mrb[0].mxu0
      %v4796 = vpop.f32.mrb[0].mxu0
      %v4797 = vadd.f32 %v697, %v4796
      %v4798 = vpop.f32.mrb[0].mxu0
      %4799 = vmatprep.mubr.bf16.mxu0 0
      %4800 = vmatmul.mubr.bf16.gmra.mrb[0].mxu0 %v2746
      %v4801 = vpop.f32.mrb[0].mxu0
      %v4802 = vadd.f32 %v697, %v4801
      %v4803 = vpop.f32.mrb[0].mxu0
      %v4804 = vpop.f32.mrb[0].mxu0
      %v4805 = vadd.f32 %v697, %v4804
      %v4806 = vpop.f32.mrb[0].mxu0
      %4807 = vmatprep.mubr.bf16.mxu0 0
      %4808 = vmatmul.mubr.bf16.gmra.mrb[0].mxu0 %v2749
      %v4809 = vpop.f32.mrb[0].mxu0
      %v4810 = vadd.f32 %v697, %v4809
      %v4811 = vpop.f32.mrb[0].mxu0
      %v4812 = vpop.f32.mrb[0].mxu0
      %v4813 = vadd.f32 %v697, %v4812
      %v4814 = vpop.f32.mrb[0].mxu0
      %4815 = vmatprep.mubr.bf16.mxu0 0
      %4816 = vmatmul.mubr.bf16.gmra.mrb[0].mxu0 %v2752
      %v4817 = vpop.f32.mrb[0].mxu0
      %v4818 = vadd.f32 %v697, %v4817
      %v4819 = vpop.f32.mrb[0].mxu0
      %v4820 = vpop.f32.mrb[0].mxu0
      %v4821 = vadd.f32 %v697, %v4820
      %v4822 = vpop.f32.mrb[0].mxu0
      %4823 = vmatprep.mubr.bf16.mxu0 0
      %4824 = vmatmul.mubr.bf16.gmra.mrb[0].mxu0 %v2755
      %v4825 = vpop.f32.mrb[0].mxu0
      %v4826 = vadd.f32 %v697, %v4825
      %v4827 = vpop.f32.mrb[0].mxu0
      %v4828 = vpop.f32.mrb[0].mxu0
      %v4829 = vadd.f32 %v697, %v4828
      %v4830 = vpop.f32.mrb[0].mxu0
      %4831 = vmatprep.mubr.bf16.mxu0 0
      %4832 = vmatmul.mubr.bf16.gmra.mrb[0].mxu0 %v2758
      %v4833 = vpop.f32.mrb[0].mxu0
      %v4834 = vadd.f32 %v697, %v4833
      %v4835 = vpop.f32.mrb[0].mxu0
      %v4836 = vpop.f32.mrb[0].mxu0
      %v4837 = vadd.f32 %v697, %v4836
      %v4838 = vpop.f32.mrb[0].mxu0
      %4839 = vmatprep.mubr.bf16.mxu0 0
      %4840 = vmatmul.mubr.bf16.gmra.mrb[0].mxu0 %v2761
      %v4841 = vpop.f32.mrb[0].mxu0
      %v4842 = vadd.f32 %v697, %v4841
      %v4843 = vpop.f32.mrb[0].mxu0
      %v4844 = vpop.f32.mrb[0].mxu0
      %v4845 = vadd.f32 %v697, %v4844
      %v4846 = vpop.f32.mrb[0].mxu0
      %4847 = vdwg.mxu0
      %v4848 = vmax.f32 %v2802, 0.0
      %v4849 = vmax.f32 %v2805, 0.0
      %v4850 = vmax.f32 %v2810, 0.0
      %v4851 = vmax.f32 %v2813, 0.0
      %v4852 = vmax.f32 %v2818, 0.0
      %v4853 = vmax.f32 %v2821, 0.0
      %v4854 = vmax.f32 %v2826, 0.0
      %v4855 = vmax.f32 %v2829, 0.0
      %v4856 = vmax.f32 %v2834, 0.0
      %v4857 = vmax.f32 %v2837, 0.0
      %v4858 = vmax.f32 %v2842, 0.0
      %v4859 = vmax.f32 %v2845, 0.0
      %v4860 = vmax.f32 %v2850, 0.0
      %v4861 = vmax.f32 %v2853, 0.0
      %v4862 = vmax.f32 %v2858, 0.0
      %v4863 = vmax.f32 %v2861, 0.0
      %v4864 = vmax.f32 %v2866, 0.0
      %v4865 = vmax.f32 %v2869, 0.0
      %v4866 = vmax.f32 %v2874, 0.0
      %v4867 = vmax.f32 %v2877, 0.0
      %v4868 = vmax.f32 %v2882, 0.0
      %v4869 = vmax.f32 %v2885, 0.0
      %v4870 = vmax.f32 %v2890, 0.0
      %v4871 = vmax.f32 %v2893, 0.0
      %v4872 = vmax.f32 %v2898, 0.0
      %v4873 = vmax.f32 %v2901, 0.0
      %v4874 = vmax.f32 %v2906, 0.0
      %v4875 = vmax.f32 %v2909, 0.0
      %v4876 = vmax.f32 %v2914, 0.0
      %v4877 = vmax.f32 %v2917, 0.0
      %v4878 = vmax.f32 %v2922, 0.0
      %v4879 = vmax.f32 %v2925, 0.0
      %v4880 = vmax.f32 %v2930, 0.0
      %v4881 = vmax.f32 %v2933, 0.0
      %v4882 = vmax.f32 %v2938, 0.0
      %v4883 = vmax.f32 %v2941, 0.0
      %v4884 = vmax.f32 %v2946, 0.0
      %v4885 = vmax.f32 %v2949, 0.0
      %v4886 = vmax.f32 %v2954, 0.0
      %v4887 = vmax.f32 %v2957, 0.0
      %v4888 = vmax.f32 %v2962, 0.0
      %v4889 = vmax.f32 %v2965, 0.0
      %v4890 = vmax.f32 %v2970, 0.0
      %v4891 = vmax.f32 %v2973, 0.0
      %v4892 = vmax.f32 %v2978, 0.0
      %v4893 = vmax.f32 %v2981, 0.0
      %v4894 = vmax.f32 %v2986, 0.0
      %v4895 = vmax.f32 %v2989, 0.0
      %v4896 = vmax.f32 %v2994, 0.0
      %v4897 = vmax.f32 %v2997, 0.0
      %v4898 = vmax.f32 %v3002, 0.0
      %v4899 = vmax.f32 %v3005, 0.0
      %v4900 = vmax.f32 %v3010, 0.0
      %v4901 = vmax.f32 %v3013, 0.0
      %v4902 = vmax.f32 %v3018, 0.0
      %v4903 = vmax.f32 %v3021, 0.0
      %v4904 = vmax.f32 %v3026, 0.0
      %v4905 = vmax.f32 %v3029, 0.0
      %v4906 = vmax.f32 %v3034, 0.0
      %v4907 = vmax.f32 %v3037, 0.0
      %v4908 = vmax.f32 %v3042, 0.0
      %v4909 = vmax.f32 %v3045, 0.0
      %v4910 = vmax.f32 %v3050, 0.0
      %v4911 = vmax.f32 %v3053, 0.0
      %v4912 = vmax.f32 %v3058, 0.0
      %v4913 = vmax.f32 %v3061, 0.0
      %v4914 = vmax.f32 %v3066, 0.0
      %v4915 = vmax.f32 %v3069, 0.0
      %v4916 = vmax.f32 %v3074, 0.0
      %v4917 = vmax.f32 %v3077, 0.0
      %v4918 = vmax.f32 %v3082, 0.0
      %v4919 = vmax.f32 %v3085, 0.0
      %v4920 = vmax.f32 %v3090, 0.0
      %v4921 = vmax.f32 %v3093, 0.0
      %v4922 = vmax.f32 %v3098, 0.0
      %v4923 = vmax.f32 %v3101, 0.0
      %v4924 = vmax.f32 %v3106, 0.0
      %v4925 = vmax.f32 %v3109, 0.0
      %v4926 = vmax.f32 %v3114, 0.0
      %v4927 = vmax.f32 %v3117, 0.0
      %v4928 = vmax.f32 %v3122, 0.0
      %v4929 = vmax.f32 %v3125, 0.0
      %v4930 = vmax.f32 %v3130, 0.0
      %v4931 = vmax.f32 %v3133, 0.0
      %v4932 = vmax.f32 %v3138, 0.0
      %v4933 = vmax.f32 %v3141, 0.0
      %v4934 = vmax.f32 %v3146, 0.0
      %v4935 = vmax.f32 %v3149, 0.0
      %v4936 = vmax.f32 %v3154, 0.0
      %v4937 = vmax.f32 %v3157, 0.0
      %v4938 = vmax.f32 %v3162, 0.0
      %v4939 = vmax.f32 %v3165, 0.0
      %v4940 = vmax.f32 %v3170, 0.0
      %v4941 = vmax.f32 %v3173, 0.0
      %v4942 = vmax.f32 %v3178, 0.0
      %v4943 = vmax.f32 %v3181, 0.0
      %v4944 = vmax.f32 %v3186, 0.0
      %v4945 = vmax.f32 %v3189, 0.0
      %v4946 = vmax.f32 %v3194, 0.0
      %v4947 = vmax.f32 %v3197, 0.0
      %v4948 = vmax.f32 %v3202, 0.0
      %v4949 = vmax.f32 %v3205, 0.0
      %v4950 = vmax.f32 %v3210, 0.0
      %v4951 = vmax.f32 %v3213, 0.0
      %v4952 = vmax.f32 %v3218, 0.0
      %v4953 = vmax.f32 %v3221, 0.0
      %v4954 = vmax.f32 %v3226, 0.0
      %v4955 = vmax.f32 %v3229, 0.0
      %v4956 = vmax.f32 %v3234, 0.0
      %v4957 = vmax.f32 %v3237, 0.0
      %v4958 = vmax.f32 %v3242, 0.0
      %v4959 = vmax.f32 %v3245, 0.0
      %v4960 = vmax.f32 %v3250, 0.0
      %v4961 = vmax.f32 %v3253, 0.0
      %v4962 = vmax.f32 %v3258, 0.0
      %v4963 = vmax.f32 %v3261, 0.0
      %v4964 = vmax.f32 %v3266, 0.0
      %v4965 = vmax.f32 %v3269, 0.0
      %v4966 = vmax.f32 %v3274, 0.0
      %v4967 = vmax.f32 %v3277, 0.0
      %v4968 = vmax.f32 %v3282, 0.0
      %v4969 = vmax.f32 %v3285, 0.0
      %v4970 = vmax.f32 %v3290, 0.0
      %v4971 = vmax.f32 %v3293, 0.0
      %v4972 = vmax.f32 %v3298, 0.0
      %v4973 = vmax.f32 %v3301, 0.0
      %v4974 = vmax.f32 %v3306, 0.0
      %v4975 = vmax.f32 %v3309, 0.0
      %v4976 = vmax.f32 %v3314, 0.0
      %v4977 = vmax.f32 %v3317, 0.0
      %v4978 = vmax.f32 %v3322, 0.0
      %v4979 = vmax.f32 %v3325, 0.0
      %v4980 = vmax.f32 %v3330, 0.0
      %v4981 = vmax.f32 %v3333, 0.0
      %v4982 = vmax.f32 %v3338, 0.0
      %v4983 = vmax.f32 %v3341, 0.0
      %v4984 = vmax.f32 %v3346, 0.0
      %v4985 = vmax.f32 %v3349, 0.0
      %v4986 = vmax.f32 %v3354, 0.0
      %v4987 = vmax.f32 %v3357, 0.0
      %v4988 = vmax.f32 %v3362, 0.0
      %v4989 = vmax.f32 %v3365, 0.0
      %v4990 = vmax.f32 %v3370, 0.0
      %v4991 = vmax.f32 %v3373, 0.0
      %v4992 = vmax.f32 %v3378, 0.0
      %v4993 = vmax.f32 %v3381, 0.0
      %v4994 = vmax.f32 %v3386, 0.0
      %v4995 = vmax.f32 %v3389, 0.0
      %v4996 = vmax.f32 %v3394, 0.0
      %v4997 = vmax.f32 %v3397, 0.0
      %v4998 = vmax.f32 %v3402, 0.0
      %v4999 = vmax.f32 %v3405, 0.0
      %v5000 = vmax.f32 %v3410, 0.0
      %v5001 = vmax.f32 %v3413, 0.0
      %v5002 = vmax.f32 %v3418, 0.0
      %v5003 = vmax.f32 %v3421, 0.0
      %v5004 = vmax.f32 %v3426, 0.0
      %v5005 = vmax.f32 %v3429, 0.0
      %v5006 = vmax.f32 %v3434, 0.0
      %v5007 = vmax.f32 %v3437, 0.0
      %v5008 = vmax.f32 %v3442, 0.0
      %v5009 = vmax.f32 %v3445, 0.0
      %v5010 = vmax.f32 %v3450, 0.0
      %v5011 = vmax.f32 %v3453, 0.0
      %v5012 = vmax.f32 %v3458, 0.0
      %v5013 = vmax.f32 %v3461, 0.0
      %v5014 = vmax.f32 %v3466, 0.0
      %v5015 = vmax.f32 %v3469, 0.0
      %v5016 = vmax.f32 %v3474, 0.0
      %v5017 = vmax.f32 %v3477, 0.0
      %v5018 = vmax.f32 %v3482, 0.0
      %v5019 = vmax.f32 %v3485, 0.0
      %v5020 = vmax.f32 %v3490, 0.0
      %v5021 = vmax.f32 %v3493, 0.0
      %v5022 = vmax.f32 %v3498, 0.0
      %v5023 = vmax.f32 %v3501, 0.0
      %v5024 = vmax.f32 %v3506, 0.0
      %v5025 = vmax.f32 %v3509, 0.0
      %v5026 = vmax.f32 %v3514, 0.0
      %v5027 = vmax.f32 %v3517, 0.0
      %v5028 = vmax.f32 %v3522, 0.0
      %v5029 = vmax.f32 %v3525, 0.0
      %v5030 = vmax.f32 %v3530, 0.0
      %v5031 = vmax.f32 %v3533, 0.0
      %v5032 = vmax.f32 %v3538, 0.0
      %v5033 = vmax.f32 %v3541, 0.0
      %v5034 = vmax.f32 %v3546, 0.0
      %v5035 = vmax.f32 %v3549, 0.0
      %v5036 = vmax.f32 %v3554, 0.0
      %v5037 = vmax.f32 %v3557, 0.0
      %v5038 = vmax.f32 %v3562, 0.0
      %v5039 = vmax.f32 %v3565, 0.0
      %v5040 = vmax.f32 %v3570, 0.0
      %v5041 = vmax.f32 %v3573, 0.0
      %v5042 = vmax.f32 %v3578, 0.0
      %v5043 = vmax.f32 %v3581, 0.0
      %v5044 = vmax.f32 %v3586, 0.0
      %v5045 = vmax.f32 %v3589, 0.0
      %v5046 = vmax.f32 %v3594, 0.0
      %v5047 = vmax.f32 %v3597, 0.0
      %v5048 = vmax.f32 %v3602, 0.0
      %v5049 = vmax.f32 %v3605, 0.0
      %v5050 = vmax.f32 %v3610, 0.0
      %v5051 = vmax.f32 %v3613, 0.0
      %v5052 = vmax.f32 %v3618, 0.0
      %v5053 = vmax.f32 %v3621, 0.0
      %v5054 = vmax.f32 %v3626, 0.0
      %v5055 = vmax.f32 %v3629, 0.0
      %v5056 = vmax.f32 %v3634, 0.0
      %v5057 = vmax.f32 %v3637, 0.0
      %v5058 = vmax.f32 %v3642, 0.0
      %v5059 = vmax.f32 %v3645, 0.0
      %v5060 = vmax.f32 %v3650, 0.0
      %v5061 = vmax.f32 %v3653, 0.0
      %v5062 = vmax.f32 %v3658, 0.0
      %v5063 = vmax.f32 %v3661, 0.0
      %v5064 = vmax.f32 %v3666, 0.0
      %v5065 = vmax.f32 %v3669, 0.0
      %v5066 = vmax.f32 %v3674, 0.0
      %v5067 = vmax.f32 %v3677, 0.0
      %v5068 = vmax.f32 %v3682, 0.0
      %v5069 = vmax.f32 %v3685, 0.0
      %v5070 = vmax.f32 %v3690, 0.0
      %v5071 = vmax.f32 %v3693, 0.0
      %v5072 = vmax.f32 %v3698, 0.0
      %v5073 = vmax.f32 %v3701, 0.0
      %v5074 = vmax.f32 %v3706, 0.0
      %v5075 = vmax.f32 %v3709, 0.0
      %v5076 = vmax.f32 %v3714, 0.0
      %v5077 = vmax.f32 %v3717, 0.0
      %v5078 = vmax.f32 %v3722, 0.0
      %v5079 = vmax.f32 %v3725, 0.0
      %v5080 = vmax.f32 %v3730, 0.0
      %v5081 = vmax.f32 %v3733, 0.0
      %v5082 = vmax.f32 %v3738, 0.0
      %v5083 = vmax.f32 %v3741, 0.0
      %v5084 = vmax.f32 %v3746, 0.0
      %v5085 = vmax.f32 %v3749, 0.0
      %v5086 = vmax.f32 %v3754, 0.0
      %v5087 = vmax.f32 %v3757, 0.0
      %v5088 = vmax.f32 %v3762, 0.0
      %v5089 = vmax.f32 %v3765, 0.0
      %v5090 = vmax.f32 %v3770, 0.0
      %v5091 = vmax.f32 %v3773, 0.0
      %v5092 = vmax.f32 %v3778, 0.0
      %v5093 = vmax.f32 %v3781, 0.0
      %v5094 = vmax.f32 %v3786, 0.0
      %v5095 = vmax.f32 %v3789, 0.0
      %v5096 = vmax.f32 %v3794, 0.0
      %v5097 = vmax.f32 %v3797, 0.0
      %v5098 = vmax.f32 %v3802, 0.0
      %v5099 = vmax.f32 %v3805, 0.0
      %v5100 = vmax.f32 %v3810, 0.0
      %v5101 = vmax.f32 %v3813, 0.0
      %v5102 = vmax.f32 %v3818, 0.0
      %v5103 = vmax.f32 %v3821, 0.0
      %v5104 = vmax.f32 %v3826, 0.0
      %v5105 = vmax.f32 %v3829, 0.0
      %v5106 = vmax.f32 %v3834, 0.0
      %v5107 = vmax.f32 %v3837, 0.0
      %v5108 = vmax.f32 %v3842, 0.0
      %v5109 = vmax.f32 %v3845, 0.0
      %v5110 = vmax.f32 %v3850, 0.0
      %v5111 = vmax.f32 %v3853, 0.0
      %v5112 = vmax.f32 %v3858, 0.0
      %v5113 = vmax.f32 %v3861, 0.0
      %v5114 = vmax.f32 %v3866, 0.0
      %v5115 = vmax.f32 %v3869, 0.0
      %v5116 = vmax.f32 %v3874, 0.0
      %v5117 = vmax.f32 %v3877, 0.0
      %v5118 = vmax.f32 %v3882, 0.0
      %v5119 = vmax.f32 %v3885, 0.0
      %v5120 = vmax.f32 %v3890, 0.0
      %v5121 = vmax.f32 %v3893, 0.0
      %v5122 = vmax.f32 %v3898, 0.0
      %v5123 = vmax.f32 %v3901, 0.0
      %v5124 = vmax.f32 %v3906, 0.0
      %v5125 = vmax.f32 %v3909, 0.0
      %v5126 = vmax.f32 %v3914, 0.0
      %v5127 = vmax.f32 %v3917, 0.0
      %v5128 = vmax.f32 %v3922, 0.0
      %v5129 = vmax.f32 %v3925, 0.0
      %v5130 = vmax.f32 %v3930, 0.0
      %v5131 = vmax.f32 %v3933, 0.0
      %v5132 = vmax.f32 %v3938, 0.0
      %v5133 = vmax.f32 %v3941, 0.0
      %v5134 = vmax.f32 %v3946, 0.0
      %v5135 = vmax.f32 %v3949, 0.0
      %v5136 = vmax.f32 %v3954, 0.0
      %v5137 = vmax.f32 %v3957, 0.0
      %v5138 = vmax.f32 %v3962, 0.0
      %v5139 = vmax.f32 %v3965, 0.0
      %v5140 = vmax.f32 %v3970, 0.0
      %v5141 = vmax.f32 %v3973, 0.0
      %v5142 = vmax.f32 %v3978, 0.0
      %v5143 = vmax.f32 %v3981, 0.0
      %v5144 = vmax.f32 %v3986, 0.0
      %v5145 = vmax.f32 %v3989, 0.0
      %v5146 = vmax.f32 %v3994, 0.0
      %v5147 = vmax.f32 %v3997, 0.0
      %v5148 = vmax.f32 %v4002, 0.0
      %v5149 = vmax.f32 %v4005, 0.0
      %v5150 = vmax.f32 %v4010, 0.0
      %v5151 = vmax.f32 %v4013, 0.0
      %v5152 = vmax.f32 %v4018, 0.0
      %v5153 = vmax.f32 %v4021, 0.0
      %v5154 = vmax.f32 %v4026, 0.0
      %v5155 = vmax.f32 %v4029, 0.0
      %v5156 = vmax.f32 %v4034, 0.0
      %v5157 = vmax.f32 %v4037, 0.0
      %v5158 = vmax.f32 %v4042, 0.0
      %v5159 = vmax.f32 %v4045, 0.0
      %v5160 = vmax.f32 %v4050, 0.0
      %v5161 = vmax.f32 %v4053, 0.0
      %v5162 = vmax.f32 %v4058, 0.0
      %v5163 = vmax.f32 %v4061, 0.0
      %v5164 = vmax.f32 %v4066, 0.0
      %v5165 = vmax.f32 %v4069, 0.0
      %v5166 = vmax.f32 %v4074, 0.0
      %v5167 = vmax.f32 %v4077, 0.0
      %v5168 = vmax.f32 %v4082, 0.0
      %v5169 = vmax.f32 %v4085, 0.0
      %v5170 = vmax.f32 %v4090, 0.0
      %v5171 = vmax.f32 %v4093, 0.0
      %v5172 = vmax.f32 %v4098, 0.0
      %v5173 = vmax.f32 %v4101, 0.0
      %v5174 = vmax.f32 %v4106, 0.0
      %v5175 = vmax.f32 %v4109, 0.0
      %v5176 = vmax.f32 %v4114, 0.0
      %v5177 = vmax.f32 %v4117, 0.0
      %v5178 = vmax.f32 %v4122, 0.0
      %v5179 = vmax.f32 %v4125, 0.0
      %v5180 = vmax.f32 %v4130, 0.0
      %v5181 = vmax.f32 %v4133, 0.0
      %v5182 = vmax.f32 %v4138, 0.0
      %v5183 = vmax.f32 %v4141, 0.0
      %v5184 = vmax.f32 %v4146, 0.0
      %v5185 = vmax.f32 %v4149, 0.0
      %v5186 = vmax.f32 %v4154, 0.0
      %v5187 = vmax.f32 %v4157, 0.0
      %v5188 = vmax.f32 %v4162, 0.0
      %v5189 = vmax.f32 %v4165, 0.0
      %v5190 = vmax.f32 %v4170, 0.0
      %v5191 = vmax.f32 %v4173, 0.0
      %v5192 = vmax.f32 %v4178, 0.0
      %v5193 = vmax.f32 %v4181, 0.0
      %v5194 = vmax.f32 %v4186, 0.0
      %v5195 = vmax.f32 %v4189, 0.0
      %v5196 = vmax.f32 %v4194, 0.0
      %v5197 = vmax.f32 %v4197, 0.0
      %v5198 = vmax.f32 %v4202, 0.0
      %v5199 = vmax.f32 %v4205, 0.0
      %v5200 = vmax.f32 %v4210, 0.0
      %v5201 = vmax.f32 %v4213, 0.0
      %v5202 = vmax.f32 %v4218, 0.0
      %v5203 = vmax.f32 %v4221, 0.0
      %v5204 = vmax.f32 %v4226, 0.0
      %v5205 = vmax.f32 %v4229, 0.0
      %v5206 = vmax.f32 %v4234, 0.0
      %v5207 = vmax.f32 %v4237, 0.0
      %v5208 = vmax.f32 %v4242, 0.0
      %v5209 = vmax.f32 %v4245, 0.0
      %v5210 = vmax.f32 %v4250, 0.0
      %v5211 = vmax.f32 %v4253, 0.0
      %v5212 = vmax.f32 %v4258, 0.0
      %v5213 = vmax.f32 %v4261, 0.0
      %v5214 = vmax.f32 %v4266, 0.0
      %v5215 = vmax.f32 %v4269, 0.0
      %v5216 = vmax.f32 %v4274, 0.0
      %v5217 = vmax.f32 %v4277, 0.0
      %v5218 = vmax.f32 %v4282, 0.0
      %v5219 = vmax.f32 %v4285, 0.0
      %v5220 = vmax.f32 %v4290, 0.0
      %v5221 = vmax.f32 %v4293, 0.0
      %v5222 = vmax.f32 %v4298, 0.0
      %v5223 = vmax.f32 %v4301, 0.0
      %v5224 = vmax.f32 %v4306, 0.0
      %v5225 = vmax.f32 %v4309, 0.0
      %v5226 = vmax.f32 %v4314, 0.0
      %v5227 = vmax.f32 %v4317, 0.0
      %v5228 = vmax.f32 %v4322, 0.0
      %v5229 = vmax.f32 %v4325, 0.0
      %v5230 = vmax.f32 %v4330, 0.0
      %v5231 = vmax.f32 %v4333, 0.0
      %v5232 = vmax.f32 %v4338, 0.0
      %v5233 = vmax.f32 %v4341, 0.0
      %v5234 = vmax.f32 %v4346, 0.0
      %v5235 = vmax.f32 %v4349, 0.0
      %v5236 = vmax.f32 %v4354, 0.0
      %v5237 = vmax.f32 %v4357, 0.0
      %v5238 = vmax.f32 %v4362, 0.0
      %v5239 = vmax.f32 %v4365, 0.0
      %v5240 = vmax.f32 %v4370, 0.0
      %v5241 = vmax.f32 %v4373, 0.0
      %v5242 = vmax.f32 %v4378, 0.0
      %v5243 = vmax.f32 %v4381, 0.0
      %v5244 = vmax.f32 %v4386, 0.0
      %v5245 = vmax.f32 %v4389, 0.0
      %v5246 = vmax.f32 %v4394, 0.0
      %v5247 = vmax.f32 %v4397, 0.0
      %v5248 = vmax.f32 %v4402, 0.0
      %v5249 = vmax.f32 %v4405, 0.0
      %v5250 = vmax.f32 %v4410, 0.0
      %v5251 = vmax.f32 %v4413, 0.0
      %v5252 = vmax.f32 %v4418, 0.0
      %v5253 = vmax.f32 %v4421, 0.0
      %v5254 = vmax.f32 %v4426, 0.0
      %v5255 = vmax.f32 %v4429, 0.0
      %v5256 = vmax.f32 %v4434, 0.0
      %v5257 = vmax.f32 %v4437, 0.0
      %v5258 = vmax.f32 %v4442, 0.0
      %v5259 = vmax.f32 %v4445, 0.0
      %v5260 = vmax.f32 %v4450, 0.0
      %v5261 = vmax.f32 %v4453, 0.0
      %v5262 = vmax.f32 %v4458, 0.0
      %v5263 = vmax.f32 %v4461, 0.0
      %v5264 = vmax.f32 %v4466, 0.0
      %v5265 = vmax.f32 %v4469, 0.0
      %v5266 = vmax.f32 %v4474, 0.0
      %v5267 = vmax.f32 %v4477, 0.0
      %v5268 = vmax.f32 %v4482, 0.0
      %v5269 = vmax.f32 %v4485, 0.0
      %v5270 = vmax.f32 %v4490, 0.0
      %v5271 = vmax.f32 %v4493, 0.0
      %v5272 = vmax.f32 %v4498, 0.0
      %v5273 = vmax.f32 %v4501, 0.0
      %v5274 = vmax.f32 %v4506, 0.0
      %v5275 = vmax.f32 %v4509, 0.0
      %v5276 = vmax.f32 %v4514, 0.0
      %v5277 = vmax.f32 %v4517, 0.0
      %v5278 = vmax.f32 %v4522, 0.0
      %v5279 = vmax.f32 %v4525, 0.0
      %v5280 = vmax.f32 %v4530, 0.0
      %v5281 = vmax.f32 %v4533, 0.0
      %v5282 = vmax.f32 %v4538, 0.0
      %v5283 = vmax.f32 %v4541, 0.0
      %v5284 = vmax.f32 %v4546, 0.0
      %v5285 = vmax.f32 %v4549, 0.0
      %v5286 = vmax.f32 %v4554, 0.0
      %v5287 = vmax.f32 %v4557, 0.0
      %v5288 = vmax.f32 %v4562, 0.0
      %v5289 = vmax.f32 %v4565, 0.0
      %v5290 = vmax.f32 %v4570, 0.0
      %v5291 = vmax.f32 %v4573, 0.0
      %v5292 = vmax.f32 %v4578, 0.0
      %v5293 = vmax.f32 %v4581, 0.0
      %v5294 = vmax.f32 %v4586, 0.0
      %v5295 = vmax.f32 %v4589, 0.0
      %v5296 = vmax.f32 %v4594, 0.0
      %v5297 = vmax.f32 %v4597, 0.0
      %v5298 = vmax.f32 %v4602, 0.0
      %v5299 = vmax.f32 %v4605, 0.0
      %v5300 = vmax.f32 %v4610, 0.0
      %v5301 = vmax.f32 %v4613, 0.0
      %v5302 = vmax.f32 %v4618, 0.0
      %v5303 = vmax.f32 %v4621, 0.0
      %v5304 = vmax.f32 %v4626, 0.0
      %v5305 = vmax.f32 %v4629, 0.0
      %v5306 = vmax.f32 %v4634, 0.0
      %v5307 = vmax.f32 %v4637, 0.0
      %v5308 = vmax.f32 %v4642, 0.0
      %v5309 = vmax.f32 %v4645, 0.0
      %v5310 = vmax.f32 %v4650, 0.0
      %v5311 = vmax.f32 %v4653, 0.0
      %v5312 = vmax.f32 %v4658, 0.0
      %v5313 = vmax.f32 %v4661, 0.0
      %v5314 = vmax.f32 %v4666, 0.0
      %v5315 = vmax.f32 %v4669, 0.0
      %v5316 = vmax.f32 %v4674, 0.0
      %v5317 = vmax.f32 %v4677, 0.0
      %v5318 = vmax.f32 %v4682, 0.0
      %v5319 = vmax.f32 %v4685, 0.0
      %v5320 = vmax.f32 %v4690, 0.0
      %v5321 = vmax.f32 %v4693, 0.0
      %v5322 = vmax.f32 %v4698, 0.0
      %v5323 = vmax.f32 %v4701, 0.0
      %v5324 = vmax.f32 %v4706, 0.0
      %v5325 = vmax.f32 %v4709, 0.0
      %v5326 = vmax.f32 %v4714, 0.0
      %v5327 = vmax.f32 %v4717, 0.0
      %v5328 = vmax.f32 %v4722, 0.0
      %v5329 = vmax.f32 %v4725, 0.0
      %v5330 = vmax.f32 %v4730, 0.0
      %v5331 = vmax.f32 %v4733, 0.0
      %v5332 = vmax.f32 %v4738, 0.0
      %v5333 = vmax.f32 %v4741, 0.0
      %v5334 = vmax.f32 %v4746, 0.0
      %v5335 = vmax.f32 %v4749, 0.0
      %v5336 = vmax.f32 %v4754, 0.0
      %v5337 = vmax.f32 %v4757, 0.0
      %v5338 = vmax.f32 %v4762, 0.0
      %v5339 = vmax.f32 %v4765, 0.0
      %v5340 = vmax.f32 %v4770, 0.0
      %v5341 = vmax.f32 %v4773, 0.0
      %v5342 = vmax.f32 %v4778, 0.0
      %v5343 = vmax.f32 %v4781, 0.0
      %v5344 = vmax.f32 %v4786, 0.0
      %v5345 = vmax.f32 %v4789, 0.0
      %v5346 = vmax.f32 %v4794, 0.0
      %v5347 = vmax.f32 %v4797, 0.0
      %v5348 = vmax.f32 %v4802, 0.0
      %v5349 = vmax.f32 %v4805, 0.0
      %v5350 = vmax.f32 %v4810, 0.0
      %v5351 = vmax.f32 %v4813, 0.0
      %v5352 = vmax.f32 %v4818, 0.0
      %v5353 = vmax.f32 %v4821, 0.0
      %v5354 = vmax.f32 %v4826, 0.0
      %v5355 = vmax.f32 %v4829, 0.0
      %v5356 = vmax.f32 %v4834, 0.0
      %v5357 = vmax.f32 %v4837, 0.0
      %v5358 = vmax.f32 %v4842, 0.0
      %v5359 = vmax.f32 %v4845, 0.0
      %v5360 = vadd.f32 %v4848, %v4849
      %v5361 = vadd.f32 %v5360, %v4850
      %v5362 = vadd.f32 %v5361, %v4851
      %v5363 = vadd.f32 %v5362, %v4852
      %v5364 = vadd.f32 %v5363, %v4853
      %v5365 = vadd.f32 %v5364, %v4854
      %v5366 = vadd.f32 %v5365, %v4855
      %v5367 = vadd.f32 %v5366, %v4856
      %v5368 = vadd.f32 %v5367, %v4857
      %v5369 = vadd.f32 %v5368, %v4858
      %v5370 = vadd.f32 %v5369, %v4859
      %v5371 = vadd.f32 %v5370, %v4860
      %v5372 = vadd.f32 %v5371, %v4861
      %v5373 = vadd.f32 %v5372, %v4862
      %v5374 = vadd.f32 %v5373, %v4863
      %v5375 = vadd.f32 %v5374, %v4864
      %v5376 = vadd.f32 %v5375, %v4865
      %v5377 = vadd.f32 %v5376, %v4866
      %v5378 = vadd.f32 %v5377, %v4867
      %v5379 = vadd.f32 %v5378, %v4868
      %v5380 = vadd.f32 %v5379, %v4869
      %v5381 = vadd.f32 %v5380, %v4870
      %v5382 = vadd.f32 %v5381, %v4871
      %v5383 = vadd.f32 %v5382, %v4872
      %v5384 = vadd.f32 %v5383, %v4873
      %v5385 = vadd.f32 %v5384, %v4874
      %v5386 = vadd.f32 %v5385, %v4875
      %v5387 = vadd.f32 %v5386, %v4876
      %v5388 = vadd.f32 %v5387, %v4877
      %v5389 = vadd.f32 %v5388, %v4878
      %v5390 = vadd.f32 %v5389, %v4879
      %v5391 = vrot.slane %v5390, 4
      %v5392 = vadd.f32 %v5390, %v5391
      %v5393 = vrot.slane %v5392, 2
      %v5394 = vadd.f32 %v5392, %v5393
      %v5395 = vrot.slane %v5394, 1
      %v5396 = vadd.f32 %v5394, %v5395
      %v5397 = vadd.f32 %v4880, %v4881
      %v5398 = vadd.f32 %v5397, %v4882
      %v5399 = vadd.f32 %v5398, %v4883
      %v5400 = vadd.f32 %v5399, %v4884
      %v5401 = vadd.f32 %v5400, %v4885
      %v5402 = vadd.f32 %v5401, %v4886
      %v5403 = vadd.f32 %v5402, %v4887
      %v5404 = vadd.f32 %v5403, %v4888
      %v5405 = vadd.f32 %v5404, %v4889
      %v5406 = vadd.f32 %v5405, %v4890
      %v5407 = vadd.f32 %v5406, %v4891
      %v5408 = vadd.f32 %v5407, %v4892
      %v5409 = vadd.f32 %v5408, %v4893
      %v5410 = vadd.f32 %v5409, %v4894
      %v5411 = vadd.f32 %v5410, %v4895
      %v5412 = vadd.f32 %v5411, %v4896
      %v5413 = vadd.f32 %v5412, %v4897
      %v5414 = vadd.f32 %v5413, %v4898
      %v5415 = vadd.f32 %v5414, %v4899
      %v5416 = vadd.f32 %v5415, %v4900
      %v5417 = vadd.f32 %v5416, %v4901
      %v5418 = vadd.f32 %v5417, %v4902
      %v5419 = vadd.f32 %v5418, %v4903
      %v5420 = vadd.f32 %v5419, %v4904
      %v5421 = vadd.f32 %v5420, %v4905
      %v5422 = vadd.f32 %v5421, %v4906
      %v5423 = vadd.f32 %v5422, %v4907
      %v5424 = vadd.f32 %v5423, %v4908
      %v5425 = vadd.f32 %v5424, %v4909
      %v5426 = vadd.f32 %v5425, %v4910
      %v5427 = vadd.f32 %v5426, %v4911
      %v5428 = vrot.slane %v5427, 4
      %v5429 = vadd.f32 %v5427, %v5428
      %v5430 = vrot.slane %v5429, 2
      %v5431 = vadd.f32 %v5429, %v5430
      %v5432 = vrot.slane %v5431, 1
      %v5433 = vadd.f32 %v5431, %v5432
      %v5434 = vadd.f32 %v4912, %v4913
      %v5435 = vadd.f32 %v5434, %v4914
      %v5436 = vadd.f32 %v5435, %v4915
      %v5437 = vadd.f32 %v5436, %v4916
      %v5438 = vadd.f32 %v5437, %v4917
      %v5439 = vadd.f32 %v5438, %v4918
      %v5440 = vadd.f32 %v5439, %v4919
      %v5441 = vadd.f32 %v5440, %v4920
      %v5442 = vadd.f32 %v5441, %v4921
      %v5443 = vadd.f32 %v5442, %v4922
      %v5444 = vadd.f32 %v5443, %v4923
      %v5445 = vadd.f32 %v5444, %v4924
      %v5446 = vadd.f32 %v5445, %v4925
      %v5447 = vadd.f32 %v5446, %v4926
      %v5448 = vadd.f32 %v5447, %v4927
      %v5449 = vadd.f32 %v5448, %v4928
      %v5450 = vadd.f32 %v5449, %v4929
      %v5451 = vadd.f32 %v5450, %v4930
      %v5452 = vadd.f32 %v5451, %v4931
      %v5453 = vadd.f32 %v5452, %v4932
      %v5454 = vadd.f32 %v5453, %v4933
      %v5455 = vadd.f32 %v5454, %v4934
      %v5456 = vadd.f32 %v5455, %v4935
      %v5457 = vadd.f32 %v5456, %v4936
      %v5458 = vadd.f32 %v5457, %v4937
      %v5459 = vadd.f32 %v5458, %v4938
      %v5460 = vadd.f32 %v5459, %v4939
      %v5461 = vadd.f32 %v5460, %v4940
      %v5462 = vadd.f32 %v5461, %v4941
      %v5463 = vadd.f32 %v5462, %v4942
      %v5464 = vadd.f32 %v5463, %v4943
      %v5465 = vrot.slane %v5464, 4
      %v5466 = vadd.f32 %v5464, %v5465
      %v5467 = vrot.slane %v5466, 2
      %v5468 = vadd.f32 %v5466, %v5467
      %v5469 = vrot.slane %v5468, 1
      %v5470 = vadd.f32 %v5468, %v5469
      %v5471 = vadd.f32 %v4944, %v4945
      %v5472 = vadd.f32 %v5471, %v4946
      %v5473 = vadd.f32 %v5472, %v4947
      %v5474 = vadd.f32 %v5473, %v4948
      %v5475 = vadd.f32 %v5474, %v4949
      %v5476 = vadd.f32 %v5475, %v4950
      %v5477 = vadd.f32 %v5476, %v4951
      %v5478 = vadd.f32 %v5477, %v4952
      %v5479 = vadd.f32 %v5478, %v4953
      %v5480 = vadd.f32 %v5479, %v4954
      %v5481 = vadd.f32 %v5480, %v4955
      %v5482 = vadd.f32 %v5481, %v4956
      %v5483 = vadd.f32 %v5482, %v4957
      %v5484 = vadd.f32 %v5483, %v4958
      %v5485 = vadd.f32 %v5484, %v4959
      %v5486 = vadd.f32 %v5485, %v4960
      %v5487 = vadd.f32 %v5486, %v4961
      %v5488 = vadd.f32 %v5487, %v4962
      %v5489 = vadd.f32 %v5488, %v4963
      %v5490 = vadd.f32 %v5489, %v4964
      %v5491 = vadd.f32 %v5490, %v4965
      %v5492 = vadd.f32 %v5491, %v4966
      %v5493 = vadd.f32 %v5492, %v4967
      %v5494 = vadd.f32 %v5493, %v4968
      %v5495 = vadd.f32 %v5494, %v4969
      %v5496 = vadd.f32 %v5495, %v4970
      %v5497 = vadd.f32 %v5496, %v4971
      %v5498 = vadd.f32 %v5497, %v4972
      %v5499 = vadd.f32 %v5498, %v4973
      %v5500 = vadd.f32 %v5499, %v4974
      %v5501 = vadd.f32 %v5500, %v4975
      %v5502 = vrot.slane %v5501, 4
      %v5503 = vadd.f32 %v5501, %v5502
      %v5504 = vrot.slane %v5503, 2
      %v5505 = vadd.f32 %v5503, %v5504
      %v5506 = vrot.slane %v5505, 1
      %v5507 = vadd.f32 %v5505, %v5506
      %v5508 = vadd.f32 %v4976, %v4977
      %v5509 = vadd.f32 %v5508, %v4978
      %v5510 = vadd.f32 %v5509, %v4979
      %v5511 = vadd.f32 %v5510, %v4980
      %v5512 = vadd.f32 %v5511, %v4981
      %v5513 = vadd.f32 %v5512, %v4982
      %v5514 = vadd.f32 %v5513, %v4983
      %v5515 = vadd.f32 %v5514, %v4984
      %v5516 = vadd.f32 %v5515, %v4985
      %v5517 = vadd.f32 %v5516, %v4986
      %v5518 = vadd.f32 %v5517, %v4987
      %v5519 = vadd.f32 %v5518, %v4988
      %v5520 = vadd.f32 %v5519, %v4989
      %v5521 = vadd.f32 %v5520, %v4990
      %v5522 = vadd.f32 %v5521, %v4991
      %v5523 = vadd.f32 %v5522, %v4992
      %v5524 = vadd.f32 %v5523, %v4993
      %v5525 = vadd.f32 %v5524, %v4994
      %v5526 = vadd.f32 %v5525, %v4995
      %v5527 = vadd.f32 %v5526, %v4996
      %v5528 = vadd.f32 %v5527, %v4997
      %v5529 = vadd.f32 %v5528, %v4998
      %v5530 = vadd.f32 %v5529, %v4999
      %v5531 = vadd.f32 %v5530, %v5000
      %v5532 = vadd.f32 %v5531, %v5001
      %v5533 = vadd.f32 %v5532, %v5002
      %v5534 = vadd.f32 %v5533, %v5003
      %v5535 = vadd.f32 %v5534, %v5004
      %v5536 = vadd.f32 %v5535, %v5005
      %v5537 = vadd.f32 %v5536, %v5006
      %v5538 = vadd.f32 %v5537, %v5007
      %v5539 = vrot.slane %v5538, 4
      %v5540 = vadd.f32 %v5538, %v5539
      %v5541 = vrot.slane %v5540, 2
      %v5542 = vadd.f32 %v5540, %v5541
      %v5543 = vrot.slane %v5542, 1
      %v5544 = vadd.f32 %v5542, %v5543
      %v5545 = vadd.f32 %v5008, %v5009
      %v5546 = vadd.f32 %v5545, %v5010
      %v5547 = vadd.f32 %v5546, %v5011
      %v5548 = vadd.f32 %v5547, %v5012
      %v5549 = vadd.f32 %v5548, %v5013
      %v5550 = vadd.f32 %v5549, %v5014
      %v5551 = vadd.f32 %v5550, %v5015
      %v5552 = vadd.f32 %v5551, %v5016
      %v5553 = vadd.f32 %v5552, %v5017
      %v5554 = vadd.f32 %v5553, %v5018
      %v5555 = vadd.f32 %v5554, %v5019
      %v5556 = vadd.f32 %v5555, %v5020
      %v5557 = vadd.f32 %v5556, %v5021
      %v5558 = vadd.f32 %v5557, %v5022
      %v5559 = vadd.f32 %v5558, %v5023
      %v5560 = vadd.f32 %v5559, %v5024
      %v5561 = vadd.f32 %v5560, %v5025
      %v5562 = vadd.f32 %v5561, %v5026
      %v5563 = vadd.f32 %v5562, %v5027
      %v5564 = vadd.f32 %v5563, %v5028
      %v5565 = vadd.f32 %v5564, %v5029
      %v5566 = vadd.f32 %v5565, %v5030
      %v5567 = vadd.f32 %v5566, %v5031
      %v5568 = vadd.f32 %v5567, %v5032
      %v5569 = vadd.f32 %v5568, %v5033
      %v5570 = vadd.f32 %v5569, %v5034
      %v5571 = vadd.f32 %v5570, %v5035
      %v5572 = vadd.f32 %v5571, %v5036
      %v5573 = vadd.f32 %v5572, %v5037
      %v5574 = vadd.f32 %v5573, %v5038
      %v5575 = vadd.f32 %v5574, %v5039
      %v5576 = vrot.slane %v5575, 4
      %v5577 = vadd.f32 %v5575, %v5576
      %v5578 = vrot.slane %v5577, 2
      %v5579 = vadd.f32 %v5577, %v5578
      %v5580 = vrot.slane %v5579, 1
      %v5581 = vadd.f32 %v5579, %v5580
      %v5582 = vadd.f32 %v5040, %v5041
      %v5583 = vadd.f32 %v5582, %v5042
      %v5584 = vadd.f32 %v5583, %v5043
      %v5585 = vadd.f32 %v5584, %v5044
      %v5586 = vadd.f32 %v5585, %v5045
      %v5587 = vadd.f32 %v5586, %v5046
      %v5588 = vadd.f32 %v5587, %v5047
      %v5589 = vadd.f32 %v5588, %v5048
      %v5590 = vadd.f32 %v5589, %v5049
      %v5591 = vadd.f32 %v5590, %v5050
      %v5592 = vadd.f32 %v5591, %v5051
      %v5593 = vadd.f32 %v5592, %v5052
      %v5594 = vadd.f32 %v5593, %v5053
      %v5595 = vadd.f32 %v5594, %v5054
      %v5596 = vadd.f32 %v5595, %v5055
      %v5597 = vadd.f32 %v5596, %v5056
      %v5598 = vadd.f32 %v5597, %v5057
      %v5599 = vadd.f32 %v5598, %v5058
      %v5600 = vadd.f32 %v5599, %v5059
      %v5601 = vadd.f32 %v5600, %v5060
      %v5602 = vadd.f32 %v5601, %v5061
      %v5603 = vadd.f32 %v5602, %v5062
      %v5604 = vadd.f32 %v5603, %v5063
      %v5605 = vadd.f32 %v5604, %v5064
      %v5606 = vadd.f32 %v5605, %v5065
      %v5607 = vadd.f32 %v5606, %v5066
      %v5608 = vadd.f32 %v5607, %v5067
      %v5609 = vadd.f32 %v5608, %v5068
      %v5610 = vadd.f32 %v5609, %v5069
      %v5611 = vadd.f32 %v5610, %v5070
      %v5612 = vadd.f32 %v5611, %v5071
      %v5613 = vrot.slane %v5612, 4
      %v5614 = vadd.f32 %v5612, %v5613
      %v5615 = vrot.slane %v5614, 2
      %v5616 = vadd.f32 %v5614, %v5615
      %v5617 = vrot.slane %v5616, 1
      %v5618 = vadd.f32 %v5616, %v5617
      %v5619 = vadd.f32 %v5072, %v5073
      %v5620 = vadd.f32 %v5619, %v5074
      %v5621 = vadd.f32 %v5620, %v5075
      %v5622 = vadd.f32 %v5621, %v5076
      %v5623 = vadd.f32 %v5622, %v5077
      %v5624 = vadd.f32 %v5623, %v5078
      %v5625 = vadd.f32 %v5624, %v5079
      %v5626 = vadd.f32 %v5625, %v5080
      %v5627 = vadd.f32 %v5626, %v5081
      %v5628 = vadd.f32 %v5627, %v5082
      %v5629 = vadd.f32 %v5628, %v5083
      %v5630 = vadd.f32 %v5629, %v5084
      %v5631 = vadd.f32 %v5630, %v5085
      %v5632 = vadd.f32 %v5631, %v5086
      %v5633 = vadd.f32 %v5632, %v5087
      %v5634 = vadd.f32 %v5633, %v5088
      %v5635 = vadd.f32 %v5634, %v5089
      %v5636 = vadd.f32 %v5635, %v5090
      %v5637 = vadd.f32 %v5636, %v5091
      %v5638 = vadd.f32 %v5637, %v5092
      %v5639 = vadd.f32 %v5638, %v5093
      %v5640 = vadd.f32 %v5639, %v5094
      %v5641 = vadd.f32 %v5640, %v5095
      %v5642 = vadd.f32 %v5641, %v5096
      %v5643 = vadd.f32 %v5642, %v5097
      %v5644 = vadd.f32 %v5643, %v5098
      %v5645 = vadd.f32 %v5644, %v5099
      %v5646 = vadd.f32 %v5645, %v5100
      %v5647 = vadd.f32 %v5646, %v5101
      %v5648 = vadd.f32 %v5647, %v5102
      %v5649 = vadd.f32 %v5648, %v5103
      %v5650 = vrot.slane %v5649, 4
      %v5651 = vadd.f32 %v5649, %v5650
      %v5652 = vrot.slane %v5651, 2
      %v5653 = vadd.f32 %v5651, %v5652
      %v5654 = vrot.slane %v5653, 1
      %v5655 = vadd.f32 %v5653, %v5654
      %v5656 = vadd.f32 %v5104, %v5105
      %v5657 = vadd.f32 %v5656, %v5106
      %v5658 = vadd.f32 %v5657, %v5107
      %v5659 = vadd.f32 %v5658, %v5108
      %v5660 = vadd.f32 %v5659, %v5109
      %v5661 = vadd.f32 %v5660, %v5110
      %v5662 = vadd.f32 %v5661, %v5111
      %v5663 = vadd.f32 %v5662, %v5112
      %v5664 = vadd.f32 %v5663, %v5113
      %v5665 = vadd.f32 %v5664, %v5114
      %v5666 = vadd.f32 %v5665, %v5115
      %v5667 = vadd.f32 %v5666, %v5116
      %v5668 = vadd.f32 %v5667, %v5117
      %v5669 = vadd.f32 %v5668, %v5118
      %v5670 = vadd.f32 %v5669, %v5119
      %v5671 = vadd.f32 %v5670, %v5120
      %v5672 = vadd.f32 %v5671, %v5121
      %v5673 = vadd.f32 %v5672, %v5122
      %v5674 = vadd.f32 %v5673, %v5123
      %v5675 = vadd.f32 %v5674, %v5124
      %v5676 = vadd.f32 %v5675, %v5125
      %v5677 = vadd.f32 %v5676, %v5126
      %v5678 = vadd.f32 %v5677, %v5127
      %v5679 = vadd.f32 %v5678, %v5128
      %v5680 = vadd.f32 %v5679, %v5129
      %v5681 = vadd.f32 %v5680, %v5130
      %v5682 = vadd.f32 %v5681, %v5131
      %v5683 = vadd.f32 %v5682, %v5132
      %v5684 = vadd.f32 %v5683, %v5133
      %v5685 = vadd.f32 %v5684, %v5134
      %v5686 = vadd.f32 %v5685, %v5135
      %v5687 = vrot.slane %v5686, 4
      %v5688 = vadd.f32 %v5686, %v5687
      %v5689 = vrot.slane %v5688, 2
      %v5690 = vadd.f32 %v5688, %v5689
      %v5691 = vrot.slane %v5690, 1
      %v5692 = vadd.f32 %v5690, %v5691
      %v5693 = vadd.f32 %v5136, %v5137
      %v5694 = vadd.f32 %v5693, %v5138
      %v5695 = vadd.f32 %v5694, %v5139
      %v5696 = vadd.f32 %v5695, %v5140
      %v5697 = vadd.f32 %v5696, %v5141
      %v5698 = vadd.f32 %v5697, %v5142
      %v5699 = vadd.f32 %v5698, %v5143
      %v5700 = vadd.f32 %v5699, %v5144
      %v5701 = vadd.f32 %v5700, %v5145
      %v5702 = vadd.f32 %v5701, %v5146
      %v5703 = vadd.f32 %v5702, %v5147
      %v5704 = vadd.f32 %v5703, %v5148
      %v5705 = vadd.f32 %v5704, %v5149
      %v5706 = vadd.f32 %v5705, %v5150
      %v5707 = vadd.f32 %v5706, %v5151
      %v5708 = vadd.f32 %v5707, %v5152
      %v5709 = vadd.f32 %v5708, %v5153
      %v5710 = vadd.f32 %v5709, %v5154
      %v5711 = vadd.f32 %v5710, %v5155
      %v5712 = vadd.f32 %v5711, %v5156
      %v5713 = vadd.f32 %v5712, %v5157
      %v5714 = vadd.f32 %v5713, %v5158
      %v5715 = vadd.f32 %v5714, %v5159
      %v5716 = vadd.f32 %v5715, %v5160
      %v5717 = vadd.f32 %v5716, %v5161
      %v5718 = vadd.f32 %v5717, %v5162
      %v5719 = vadd.f32 %v5718, %v5163
      %v5720 = vadd.f32 %v5719, %v5164
      %v5721 = vadd.f32 %v5720, %v5165
      %v5722 = vadd.f32 %v5721, %v5166
      %v5723 = vadd.f32 %v5722, %v5167
      %v5724 = vrot.slane %v5723, 4
      %v5725 = vadd.f32 %v5723, %v5724
      %v5726 = vrot.slane %v5725, 2
      %v5727 = vadd.f32 %v5725, %v5726
      %v5728 = vrot.slane %v5727, 1
      %v5729 = vadd.f32 %v5727, %v5728
      %v5730 = vadd.f32 %v5168, %v5169
      %v5731 = vadd.f32 %v5730, %v5170
      %v5732 = vadd.f32 %v5731, %v5171
      %v5733 = vadd.f32 %v5732, %v5172
      %v5734 = vadd.f32 %v5733, %v5173
      %v5735 = vadd.f32 %v5734, %v5174
      %v5736 = vadd.f32 %v5735, %v5175
      %v5737 = vadd.f32 %v5736, %v5176
      %v5738 = vadd.f32 %v5737, %v5177
      %v5739 = vadd.f32 %v5738, %v5178
      %v5740 = vadd.f32 %v5739, %v5179
      %v5741 = vadd.f32 %v5740, %v5180
      %v5742 = vadd.f32 %v5741, %v5181
      %v5743 = vadd.f32 %v5742, %v5182
      %v5744 = vadd.f32 %v5743, %v5183
      %v5745 = vadd.f32 %v5744, %v5184
      %v5746 = vadd.f32 %v5745, %v5185
      %v5747 = vadd.f32 %v5746, %v5186
      %v5748 = vadd.f32 %v5747, %v5187
      %v5749 = vadd.f32 %v5748, %v5188
      %v5750 = vadd.f32 %v5749, %v5189
      %v5751 = vadd.f32 %v5750, %v5190
      %v5752 = vadd.f32 %v5751, %v5191
      %v5753 = vadd.f32 %v5752, %v5192
      %v5754 = vadd.f32 %v5753, %v5193
      %v5755 = vadd.f32 %v5754, %v5194
      %v5756 = vadd.f32 %v5755, %v5195
      %v5757 = vadd.f32 %v5756, %v5196
      %v5758 = vadd.f32 %v5757, %v5197
      %v5759 = vadd.f32 %v5758, %v5198
      %v5760 = vadd.f32 %v5759, %v5199
      %v5761 = vrot.slane %v5760, 4
      %v5762 = vadd.f32 %v5760, %v5761
      %v5763 = vrot.slane %v5762, 2
      %v5764 = vadd.f32 %v5762, %v5763
      %v5765 = vrot.slane %v5764, 1
      %v5766 = vadd.f32 %v5764, %v5765
      %v5767 = vadd.f32 %v5200, %v5201
      %v5768 = vadd.f32 %v5767, %v5202
      %v5769 = vadd.f32 %v5768, %v5203
      %v5770 = vadd.f32 %v5769, %v5204
      %v5771 = vadd.f32 %v5770, %v5205
      %v5772 = vadd.f32 %v5771, %v5206
      %v5773 = vadd.f32 %v5772, %v5207
      %v5774 = vadd.f32 %v5773, %v5208
      %v5775 = vadd.f32 %v5774, %v5209
      %v5776 = vadd.f32 %v5775, %v5210
      %v5777 = vadd.f32 %v5776, %v5211
      %v5778 = vadd.f32 %v5777, %v5212
      %v5779 = vadd.f32 %v5778, %v5213
      %v5780 = vadd.f32 %v5779, %v5214
      %v5781 = vadd.f32 %v5780, %v5215
      %v5782 = vadd.f32 %v5781, %v5216
      %v5783 = vadd.f32 %v5782, %v5217
      %v5784 = vadd.f32 %v5783, %v5218
      %v5785 = vadd.f32 %v5784, %v5219
      %v5786 = vadd.f32 %v5785, %v5220
      %v5787 = vadd.f32 %v5786, %v5221
      %v5788 = vadd.f32 %v5787, %v5222
      %v5789 = vadd.f32 %v5788, %v5223
      %v5790 = vadd.f32 %v5789, %v5224
      %v5791 = vadd.f32 %v5790, %v5225
      %v5792 = vadd.f32 %v5791, %v5226
      %v5793 = vadd.f32 %v5792, %v5227
      %v5794 = vadd.f32 %v5793, %v5228
      %v5795 = vadd.f32 %v5794, %v5229
      %v5796 = vadd.f32 %v5795, %v5230
      %v5797 = vadd.f32 %v5796, %v5231
      %v5798 = vrot.slane %v5797, 4
      %v5799 = vadd.f32 %v5797, %v5798
      %v5800 = vrot.slane %v5799, 2
      %v5801 = vadd.f32 %v5799, %v5800
      %v5802 = vrot.slane %v5801, 1
      %v5803 = vadd.f32 %v5801, %v5802
      %v5804 = vadd.f32 %v5232, %v5233
      %v5805 = vadd.f32 %v5804, %v5234
      %v5806 = vadd.f32 %v5805, %v5235
      %v5807 = vadd.f32 %v5806, %v5236
      %v5808 = vadd.f32 %v5807, %v5237
      %v5809 = vadd.f32 %v5808, %v5238
      %v5810 = vadd.f32 %v5809, %v5239
      %v5811 = vadd.f32 %v5810, %v5240
      %v5812 = vadd.f32 %v5811, %v5241
      %v5813 = vadd.f32 %v5812, %v5242
      %v5814 = vadd.f32 %v5813, %v5243
      %v5815 = vadd.f32 %v5814, %v5244
      %v5816 = vadd.f32 %v5815, %v5245
      %v5817 = vadd.f32 %v5816, %v5246
      %v5818 = vadd.f32 %v5817, %v5247
      %v5819 = vadd.f32 %v5818, %v5248
      %v5820 = vadd.f32 %v5819, %v5249
      %v5821 = vadd.f32 %v5820, %v5250
      %v5822 = vadd.f32 %v5821, %v5251
      %v5823 = vadd.f32 %v5822, %v5252
      %v5824 = vadd.f32 %v5823, %v5253
      %v5825 = vadd.f32 %v5824, %v5254
      %v5826 = vadd.f32 %v5825, %v5255
      %v5827 = vadd.f32 %v5826, %v5256
      %v5828 = vadd.f32 %v5827, %v5257
      %v5829 = vadd.f32 %v5828, %v5258
      %v5830 = vadd.f32 %v5829, %v5259
      %v5831 = vadd.f32 %v5830, %v5260
      %v5832 = vadd.f32 %v5831, %v5261
      %v5833 = vadd.f32 %v5832, %v5262
      %v5834 = vadd.f32 %v5833, %v5263
      %v5835 = vrot.slane %v5834, 4
      %v5836 = vadd.f32 %v5834, %v5835
      %v5837 = vrot.slane %v5836, 2
      %v5838 = vadd.f32 %v5836, %v5837
      %v5839 = vrot.slane %v5838, 1
      %v5840 = vadd.f32 %v5838, %v5839
      %v5841 = vadd.f32 %v5264, %v5265
      %v5842 = vadd.f32 %v5841, %v5266
      %v5843 = vadd.f32 %v5842, %v5267
      %v5844 = vadd.f32 %v5843, %v5268
      %v5845 = vadd.f32 %v5844, %v5269
      %v5846 = vadd.f32 %v5845, %v5270
      %v5847 = vadd.f32 %v5846, %v5271
      %v5848 = vadd.f32 %v5847, %v5272
      %v5849 = vadd.f32 %v5848, %v5273
      %v5850 = vadd.f32 %v5849, %v5274
      %v5851 = vadd.f32 %v5850, %v5275
      %v5852 = vadd.f32 %v5851, %v5276
      %v5853 = vadd.f32 %v5852, %v5277
      %v5854 = vadd.f32 %v5853, %v5278
      %v5855 = vadd.f32 %v5854, %v5279
      %v5856 = vadd.f32 %v5855, %v5280
      %v5857 = vadd.f32 %v5856, %v5281
      %v5858 = vadd.f32 %v5857, %v5282
      %v5859 = vadd.f32 %v5858, %v5283
      %v5860 = vadd.f32 %v5859, %v5284
      %v5861 = vadd.f32 %v5860, %v5285
      %v5862 = vadd.f32 %v5861, %v5286
      %v5863 = vadd.f32 %v5862, %v5287
      %v5864 = vadd.f32 %v5863, %v5288
      %v5865 = vadd.f32 %v5864, %v5289
      %v5866 = vadd.f32 %v5865, %v5290
      %v5867 = vadd.f32 %v5866, %v5291
      %v5868 = vadd.f32 %v5867, %v5292
      %v5869 = vadd.f32 %v5868, %v5293
      %v5870 = vadd.f32 %v5869, %v5294
      %v5871 = vadd.f32 %v5870, %v5295
      %v5872 = vrot.slane %v5871, 4
      %v5873 = vadd.f32 %v5871, %v5872
      %v5874 = vrot.slane %v5873, 2
      %v5875 = vadd.f32 %v5873, %v5874
      %v5876 = vrot.slane %v5875, 1
      %v5877 = vadd.f32 %v5875, %v5876
      %v5878 = vadd.f32 %v5296, %v5297
      %v5879 = vadd.f32 %v5878, %v5298
      %v5880 = vadd.f32 %v5879, %v5299
      %v5881 = vadd.f32 %v5880, %v5300
      %v5882 = vadd.f32 %v5881, %v5301
      %v5883 = vadd.f32 %v5882, %v5302
      %v5884 = vadd.f32 %v5883, %v5303
      %v5885 = vadd.f32 %v5884, %v5304
      %v5886 = vadd.f32 %v5885, %v5305
      %v5887 = vadd.f32 %v5886, %v5306
      %v5888 = vadd.f32 %v5887, %v5307
      %v5889 = vadd.f32 %v5888, %v5308
      %v5890 = vadd.f32 %v5889, %v5309
      %v5891 = vadd.f32 %v5890, %v5310
      %v5892 = vadd.f32 %v5891, %v5311
      %v5893 = vadd.f32 %v5892, %v5312
      %v5894 = vadd.f32 %v5893, %v5313
      %v5895 = vadd.f32 %v5894, %v5314
      %v5896 = vadd.f32 %v5895, %v5315
      %v5897 = vadd.f32 %v5896, %v5316
      %v5898 = vadd.f32 %v5897, %v5317
      %v5899 = vadd.f32 %v5898, %v5318
      %v5900 = vadd.f32 %v5899, %v5319
      %v5901 = vadd.f32 %v5900, %v5320
      %v5902 = vadd.f32 %v5901, %v5321
      %v5903 = vadd.f32 %v5902, %v5322
      %v5904 = vadd.f32 %v5903, %v5323
      %v5905 = vadd.f32 %v5904, %v5324
      %v5906 = vadd.f32 %v5905, %v5325
      %v5907 = vadd.f32 %v5906, %v5326
      %v5908 = vadd.f32 %v5907, %v5327
      %v5909 = vrot.slane %v5908, 4
      %v5910 = vadd.f32 %v5908, %v5909
      %v5911 = vrot.slane %v5910, 2
      %v5912 = vadd.f32 %v5910, %v5911
      %v5913 = vrot.slane %v5912, 1
      %v5914 = vadd.f32 %v5912, %v5913
      %v5915 = vadd.f32 %v5328, %v5329
      %v5916 = vadd.f32 %v5915, %v5330
      %v5917 = vadd.f32 %v5916, %v5331
      %v5918 = vadd.f32 %v5917, %v5332
      %v5919 = vadd.f32 %v5918, %v5333
      %v5920 = vadd.f32 %v5919, %v5334
      %v5921 = vadd.f32 %v5920, %v5335
      %v5922 = vadd.f32 %v5921, %v5336
      %v5923 = vadd.f32 %v5922, %v5337
      %v5924 = vadd.f32 %v5923, %v5338
      %v5925 = vadd.f32 %v5924, %v5339
      %v5926 = vadd.f32 %v5925, %v5340
      %v5927 = vadd.f32 %v5926, %v5341
      %v5928 = vadd.f32 %v5927, %v5342
      %v5929 = vadd.f32 %v5928, %v5343
      %v5930 = vadd.f32 %v5929, %v5344
      %v5931 = vadd.f32 %v5930, %v5345
      %v5932 = vadd.f32 %v5931, %v5346
      %v5933 = vadd.f32 %v5932, %v5347
      %v5934 = vadd.f32 %v5933, %v5348
      %v5935 = vadd.f32 %v5934, %v5349
      %v5936 = vadd.f32 %v5935, %v5350
      %v5937 = vadd.f32 %v5936, %v5351
      %v5938 = vadd.f32 %v5937, %v5352
      %v5939 = vadd.f32 %v5938, %v5353
      %v5940 = vadd.f32 %v5939, %v5354
      %v5941 = vadd.f32 %v5940, %v5355
      %v5942 = vadd.f32 %v5941, %v5356
      %v5943 = vadd.f32 %v5942, %v5357
      %v5944 = vadd.f32 %v5943, %v5358
      %v5945 = vadd.f32 %v5944, %v5359
      %v5946 = vrot.slane %v5945, 4
      %v5947 = vadd.f32 %v5945, %v5946
      %v5948 = vrot.slane %v5947, 2
      %v5949 = vadd.f32 %v5947, %v5948
      %v5950 = vrot.slane %v5949, 1
      %v5951 = vadd.f32 %v5949, %v5950
      %v5952 = vmul.f32 %v5396, 0.00390625
      %v5953 = vmul.f32 %v5433, 0.00390625
      %v5954 = vmul.f32 %v5470, 0.00390625
      %v5955 = vmul.f32 %v5507, 0.00390625
      %v5956 = vmul.f32 %v5544, 0.00390625
      %v5957 = vmul.f32 %v5581, 0.00390625
      %v5958 = vmul.f32 %v5618, 0.00390625
      %v5959 = vmul.f32 %v5655, 0.00390625
      %v5960 = vmul.f32 %v5692, 0.00390625
      %v5961 = vmul.f32 %v5729, 0.00390625
      %v5962 = vmul.f32 %v5766, 0.00390625
      %v5963 = vmul.f32 %v5803, 0.00390625
      %v5964 = vmul.f32 %v5840, 0.00390625
      %v5965 = vmul.f32 %v5877, 0.00390625
      %v5966 = vmul.f32 %v5914, 0.00390625
      %v5967 = vmul.f32 %v5951, 0.00390625
      %vm5984 = vcmask 1041409
      %v5985 = vsel %vm5984, %v5953, %v5952
      %vm5986 = vcmask 1042434
      %v5987 = vsel %vm5986, %v5954, %v5985
      %vm5988 = vcmask 1043459
      %v5989 = vsel %vm5988, %v5955, %v5987
      %vm5990 = vcmask 1044484
      %v5991 = vsel %vm5990, %v5956, %v5989
      %vm5992 = vcmask 1045509
      %v5993 = vsel %vm5992, %v5957, %v5991
      %vm5994 = vcmask 1046534
      %v5995 = vsel %vm5994, %v5958, %v5993
      %vm5996 = vcmask 1047559
      %v5997 = vsel %vm5996, %v5959, %v5995
      %v5998 = vsel %vm5984, %v5961, %v5960
      %v5999 = vsel %vm5986, %v5962, %v5998
      %v6000 = vsel %vm5988, %v5963, %v5999
      %v6001 = vsel %vm5990, %v5964, %v6000
      %v6002 = vsel %vm5992, %v5965, %v6001
      %v6003 = vsel %vm5994, %v5966, %v6002
      %v6004 = vsel %vm5996, %v5967, %v6003
      %6007 = vst [vmem:[%s172] sm:$0xff] %v5997
      %6008 = vst [vmem:[%s172 + $0x8] sm:$0xff] %v6004
      %s6009 = smul.u32 2, %s14
      %p6010 = scmp.lt.s32.totalorder %s6009, 3
      %s6011 = scalar_select %p6010, %s6009, 3
      %s6012 = smul.addr %s6011, 8
      %s6013 = scalar_lea.vmem %s3, %s6012
      // Predicated region
      $region33: #{protonet_forward.2} parent=31 // pred_check
        %p6014 = pneg %p100
      $region34: #{protonet_forward.2} parent=31 // pred_check_branch
        %6016 = sbr.rel (%p6014) target = $region36
      $region35: #{protonet_forward.2} parent=31 // pred_region
        %s6017 = smul.u32 2, %s14
      $region36: #{protonet_forward.2} parent=31 // pred_fallthru
        _
    $region32: #{protonet_forward.2} parent=5 // pred_fallthru
      _
    %p6018 = scmp.le.s32.totalorder 2, %s9
    // Predicated region
    $region37: #{protonet_forward.2} parent=5 // pred_check
      %p6019 = pneg %p6018
    $region38: #{protonet_forward.2} parent=5 // pred_check_branch
      %6021 = sbr.rel (%p6019) target = $region40
    $region39: #{protonet_forward.2} parent=5 // pred_region
      %s6022 = ssub.s32 %s9, 2
      // Predicated region
      $region41: #{protonet_forward.2} parent=39 // pred_check
        %p6023 = pneg %p106
      $region42: #{protonet_forward.2} parent=39 // pred_check_branch
        %6025 = sbr.rel (%p6023) target = $region44
      $region43: #{protonet_forward.2} parent=39 // pred_region
        %s6026 = smul.u32 2, %s15
        %p6027 = scmp.lt.s32.totalorder %s6026, 3
        %s6028 = scalar_select %p6027, %s6026, 3
        %s6029 = smul.addr %s6028, 8
        %s6030 = scalar_lea.vmem %s3, %s6029
      $region44: #{protonet_forward.2} parent=39 // pred_fallthru
        _
    $region40: #{protonet_forward.2} parent=5 // pred_fallthru
      _
  $region6: #{protonet_forward.2} parent=0 // loop_footer
    %s13 = sadd.s32 1, %s9
  $region7: #{protonet_forward.2} parent=0 // loop_footer_branch
    %8 = sbr.rel target = $region3
  $region8: #{protonet_forward.2} parent=0 // loop_exit
    _

</llo_original>
